<compile_context>
chip_gen: v7x
topology: tpu7x:2x2x1
jax: 0.10.0
libtpu: 0.0.40
codegen_flags: <defaults>
</compile_context>

<pallas_src>
import functools

import jax
import jax.numpy as jnp
from jax import lax
from jax.experimental import pallas as pl
from jax.experimental.pallas import tpu as pltpu


def _tree_sum(terms):
    """Balanced-tree sum (keeps the VPU dependency chain at log depth)."""
    terms = list(terms)
    while len(terms) > 1:
        nxt = [terms[i] + terms[i + 1] for i in range(0, len(terms) - 1, 2)]
        if len(terms) % 2:
            nxt.append(terms[-1])
        terms = nxt
    return terms[0]


def _decoder_kernel(x0_ref, h0_ref, wih_ref, bih_ref, wf_ref, bf_ref,
                    out_ref, hout_ref,
                    *, max_length, hidden_size, output_size, n_note):
    B = x0_ref.shape[0]
    H = hidden_size
    O = output_size
    L = max_length

    wih = wih_ref[...]                # (I=O, 3H) input->gate weights; also the gather table
    wf = wf_ref[...]                  # (H, 3H+O) fused [whh | wout]

    # Loop-invariant constants, hoisted (JAX does not CSE broadcast_in_dim).
    col = lax.broadcasted_iota(jnp.int32, (B, O), 1)      # lane index per row
    row = lax.broadcasted_iota(jnp.int32, (B, 1), 0)      # batch index per row
    bih_b = jnp.broadcast_to(bih_ref[...], (B, 3 * H))    # (B, 3H)
    bf_b = jnp.broadcast_to(bf_ref[...], (B, 3 * H + O))  # (B, 3H+O)
    # One (B, 3H) broadcast copy of each wih row: per-step one-hot feedback becomes a
    # pure VPU select-tree (no MXU push/pop, no per-step sublane broadcast).
    gather_rows = [jnp.broadcast_to(wih[k:k + 1, :], (B, 3 * H)) for k in range(O)]

    h = h0_ref[...]                                       # (B, H)
    # Prologue (one-time): two independent dots pipeline through the MXU.
    gi = jnp.dot(jnp.maximum(x0_ref[...], 0.0), wih,
                 preferred_element_type=jnp.float32) + bih_b          # (B, 3H)
    f = jnp.dot(h, wf, preferred_element_type=jnp.float32) + bf_b     # (B, 3H+O)
    gh = f[:, :3 * H]                                                 # (B, 3H)

    # TODO(synk): stage the loop-invariant RHS `wf` in the MXU once via
    # pltpu.matmul_push_rhs / matmul_acc_lhs / matmul_pop (hold-RHS-across-many-LHS)
    # instead of re-streaming it with jnp.dot every unrolled step.
    for t in range(L):
        # ---- GRU cell (PyTorch gate order r|z|n; b_hn stays inside the r product) ----
        r = jax.nn.sigmoid(gi[:, :H] + gh[:, :H])
        z = jax.nn.sigmoid(gi[:, H:2 * H] + gh[:, H:2 * H])
        n = jnp.tanh(gi[:, 2 * H:3 * H] + r * gh[:, 2 * H:3 * H])
        h = (1.0 - z) * n + z * h                                     # (B, H)

        # ---- the single MXU trip of this step: logits o_t AND hidden gates for t+1 ----
        f = jnp.dot(h, wf, preferred_element_type=jnp.float32) + bf_b  # (B, 3H+O)
        gh = f[:, :3 * H]
        o = f[:, 3 * H:]                                               # (B, O)

        # Only mx / topi feed the recurrence; the exp/log below is off the critical path.
        mx = jnp.max(o, axis=1, keepdims=True)                         # (B, 1)
        topi = jnp.min(jnp.where(o == mx, col, O), axis=1, keepdims=True)  # first argmax

        # ---- per-step log-softmax, written straight into the (B, L, O) output ----
        sh = o - mx
        lse = jnp.log(jnp.sum(jnp.exp(sh), axis=1, keepdims=True))
        out_ref[:, t, :] = sh - lse

        # ---- greedy one-hot feedback with the per-timestep batch "break" ----
        # PyTorch re-zeroes decoder_input every step; rows before the first EOS row get a
        # one-hot, rows at/after it stay zero. Unused after the last step, so skipped.
        if t + 1 < L:
            eos = topi == (n_note - 1)                                 # (B, 1)
            # index of the first EOS row (B if none), kept vreg-resident.
            first_eos = jnp.min(jnp.where(eos, row, B), axis=0, keepdims=True)  # (1, 1)
            set_mask = (row < first_eos).astype(jnp.float32)           # (B, 1)
            # gi_{t+1} = relu(onehot) @ wih + bih == mask * wih[topi] + bih, computed as a
            # select-tree (exactly one non-zero term per batch row) -> no MXU on this path.
            terms = [(topi == k).astype(jnp.float32) * gather_rows[k] for k in range(O)]
            gi = set_mask * _tree_sum(terms) + bih_b                   # (B, 3H)

    hout_ref[0] = h


def decoder_rnn_forward(encoder_outputs, encoder_hidden, target_tensor, params):
    """Mirrors DecoderRNN.forward. encoder_outputs is unused by the reference code.
    `params` must be the kernel-ready tuple from prepare_params (fused once, reused)."""
    del encoder_outputs
    wih_t, bih, wf, bf = params
    B, L = target_tensor.shape[0], target_tensor.shape[1]
    I = wih_t.shape[0]
    H = wf.shape[0]
    O = wf.shape[1] - 3 * H
    assert target_tensor.shape[-1] == I == O, "GRU input size (14) must equal output_size"

    x0 = target_tensor[:, 0, 0, :].astype(jnp.float32)     # (B, I) first decoder input
    h0 = encoder_hidden[0].astype(jnp.float32)             # (B, H)

    kernel = functools.partial(
        _decoder_kernel, max_length=int(L), hidden_size=int(H),
        output_size=int(O), n_note=int(O))                  # n_note: EOS = last class

    # Everything is tiny and fully VMEM-resident: no grid, no tiling, static L unroll.
    # TODO(synk): for multi-sequence workloads, stack sequences into the batch dim and on
    # v7x split it across the two TensorCores with a parallel grid axis.
    vmem = pl.BlockSpec(memory_space=pltpu.MemorySpace.VMEM)
    dec_out, dec_hidden = pl.pallas_call(
        kernel,
        out_shape=(jax.ShapeDtypeStruct((B, L, O), jnp.float32),
                   jax.ShapeDtypeStruct((1, B, H), jnp.float32)),
        in_specs=[vmem] * 6,
        out_specs=(vmem, vmem),
    )(x0, h0, wih_t, bih, wf, bf)
    return dec_out, dec_hidden


def init_params(key, hidden_size, output_size, input_size=14):
    """Deterministic PyTorch-shaped GRU + Linear params (gate order r|z|n)."""
    H, O, I = hidden_size, output_size, input_size
    ks = jax.random.split(key, 6)
    s = 1.0 / jnp.sqrt(jnp.float32(H))
    w_ih = jax.random.uniform(ks[0], (3 * H, I), jnp.float32, -s, s)
    w_hh = jax.random.uniform(ks[1], (3 * H, H), jnp.float32, -s, s)
    b_ih = jax.random.uniform(ks[2], (3 * H,), jnp.float32, -s, s)
    b_hh = jax.random.uniform(ks[3], (3 * H,), jnp.float32, -s, s)
    w_out = jax.random.uniform(ks[4], (O, H), jnp.float32, -s, s)
    b_out = jax.random.uniform(ks[5], (O,), jnp.float32, -s, s)
    return w_ih, w_hh, b_ih, b_hh, w_out, b_out


def prepare_params(torch_params):
    """ONE-TIME fusion of weights into the kernel layout (do NOT rebuild per forward):
       wih_t (I,3H), bih (1,3H), wf = [whh_t | wout_t] (H,3H+O), bf = [bhh | bout] (1,3H+O)."""
    w_ih, w_hh, b_ih, b_hh, w_out, b_out = [p.astype(jnp.float32) for p in torch_params]
    wih_t = w_ih.T                                         # (I, 3H)
    bih = b_ih[None, :]                                    # (1, 3H)
    wf = jnp.concatenate([w_hh.T, w_out.T], axis=1)        # (H, 3H + O)
    bf = jnp.concatenate([b_hh, b_out])[None, :]           # (1, 3H + O)
    return wih_t, bih, wf, bf


if __name__ == "__main__":
    B, L, H, O, I = 2, 8, 32, 14, 14   # output_size must be 14 (== GRU input size)
    key = jax.random.PRNGKey(0)
    k1, k2, k3, k4 = jax.random.split(key, 4)

    target_tensor = jax.random.normal(k1, (B, L, 1, I), jnp.float32)
    encoder_hidden = jax.random.normal(k2, (1, B, H), jnp.float32)
    encoder_outputs = jax.random.normal(k3, (B, L, H), jnp.float32)  # unused by forward
    params = prepare_params(init_params(k4, H, O, I))                # fused once, reused

    dec_out, dec_hidden = decoder_rnn_forward(encoder_outputs, encoder_hidden,
                                              target_tensor, params)
    jax.block_until_ready((dec_out, dec_hidden))

    assert dec_out.shape == (B, L, O)
    assert dec_hidden.shape == (1, B, H)
    # rows of log-softmax must sum (in prob space) to ~1
    assert jnp.allclose(jnp.sum(jnp.exp(dec_out), axis=-1), 1.0, atol=1e-4)
    print("KERNEL_OK")
</pallas_src>

<mosaic_0001>
module attributes {stable_mosaic.version = 11 : i64} {
  func.func @_decoder_kernel(%arg0: memref<2x14xf32, #tpu.memory_space<vmem>>, %arg1: memref<2x32xf32, #tpu.memory_space<vmem>>, %arg2: memref<14x96xf32, #tpu.memory_space<vmem>>, %arg3: memref<1x96xf32, #tpu.memory_space<vmem>>, %arg4: memref<32x110xf32, #tpu.memory_space<vmem>>, %arg5: memref<1x110xf32, #tpu.memory_space<vmem>>, %arg6: memref<2x8x14xf32, #tpu.memory_space<vmem>>, %arg7: memref<1x2x32xf32, #tpu.memory_space<vmem>>) attributes {dimension_semantics = [], scalar_prefetch = 0 : i64, scratch_operands = 0 : i64, tpu.core_type = #tpu.core_type<tc>} {
    %c0 = arith.constant 0 : index
    %c0_0 = arith.constant 0 : index
    %0 = vector.load %arg2[%c0, %c0_0] : memref<14x96xf32, #tpu.memory_space<vmem>>, vector<14x96xf32>
    %c0_1 = arith.constant 0 : index
    %c0_2 = arith.constant 0 : index
    %1 = vector.load %arg4[%c0_1, %c0_2] : memref<32x110xf32, #tpu.memory_space<vmem>>, vector<32x110xf32>
    %2 = tpu.iota {dimensions = array<i32: 1>} : vector<2x14xi32>
    %3 = tpu.iota {dimensions = array<i32: 0>} : vector<2x1xi32>
    %c0_3 = arith.constant 0 : index
    %c0_4 = arith.constant 0 : index
    %4 = vector.load %arg3[%c0_3, %c0_4] : memref<1x96xf32, #tpu.memory_space<vmem>>, vector<1x96xf32>
    %5 = vector.shape_cast %4 : vector<1x96xf32> to vector<1x96xf32>
    %6 = vector.broadcast %5 : vector<1x96xf32> to vector<2x96xf32>
    %c0_5 = arith.constant 0 : index
    %c0_6 = arith.constant 0 : index
    %7 = vector.load %arg5[%c0_5, %c0_6] : memref<1x110xf32, #tpu.memory_space<vmem>>, vector<1x110xf32>
    %8 = vector.shape_cast %7 : vector<1x110xf32> to vector<1x110xf32>
    %9 = vector.broadcast %8 : vector<1x110xf32> to vector<2x110xf32>
    %10 = vector.extract_strided_slice %0 {offsets = [0, 0], sizes = [1, 96], strides = [1, 1]} : vector<14x96xf32> to vector<1x96xf32>
    %11 = vector.shape_cast %10 : vector<1x96xf32> to vector<1x96xf32>
    %12 = vector.broadcast %11 : vector<1x96xf32> to vector<2x96xf32>
    %13 = vector.extract_strided_slice %0 {offsets = [1, 0], sizes = [1, 96], strides = [1, 1]} : vector<14x96xf32> to vector<1x96xf32>
    %14 = vector.shape_cast %13 : vector<1x96xf32> to vector<1x96xf32>
    %15 = vector.broadcast %14 : vector<1x96xf32> to vector<2x96xf32>
    %16 = vector.extract_strided_slice %0 {offsets = [2, 0], sizes = [1, 96], strides = [1, 1]} : vector<14x96xf32> to vector<1x96xf32>
    %17 = vector.shape_cast %16 : vector<1x96xf32> to vector<1x96xf32>
    %18 = vector.broadcast %17 : vector<1x96xf32> to vector<2x96xf32>
    %19 = vector.extract_strided_slice %0 {offsets = [3, 0], sizes = [1, 96], strides = [1, 1]} : vector<14x96xf32> to vector<1x96xf32>
    %20 = vector.shape_cast %19 : vector<1x96xf32> to vector<1x96xf32>
    %21 = vector.broadcast %20 : vector<1x96xf32> to vector<2x96xf32>
    %22 = vector.extract_strided_slice %0 {offsets = [4, 0], sizes = [1, 96], strides = [1, 1]} : vector<14x96xf32> to vector<1x96xf32>
    %23 = vector.shape_cast %22 : vector<1x96xf32> to vector<1x96xf32>
    %24 = vector.broadcast %23 : vector<1x96xf32> to vector<2x96xf32>
    %25 = vector.extract_strided_slice %0 {offsets = [5, 0], sizes = [1, 96], strides = [1, 1]} : vector<14x96xf32> to vector<1x96xf32>
    %26 = vector.shape_cast %25 : vector<1x96xf32> to vector<1x96xf32>
    %27 = vector.broadcast %26 : vector<1x96xf32> to vector<2x96xf32>
    %28 = vector.extract_strided_slice %0 {offsets = [6, 0], sizes = [1, 96], strides = [1, 1]} : vector<14x96xf32> to vector<1x96xf32>
    %29 = vector.shape_cast %28 : vector<1x96xf32> to vector<1x96xf32>
    %30 = vector.broadcast %29 : vector<1x96xf32> to vector<2x96xf32>
    %31 = vector.extract_strided_slice %0 {offsets = [7, 0], sizes = [1, 96], strides = [1, 1]} : vector<14x96xf32> to vector<1x96xf32>
    %32 = vector.shape_cast %31 : vector<1x96xf32> to vector<1x96xf32>
    %33 = vector.broadcast %32 : vector<1x96xf32> to vector<2x96xf32>
    %34 = vector.extract_strided_slice %0 {offsets = [8, 0], sizes = [1, 96], strides = [1, 1]} : vector<14x96xf32> to vector<1x96xf32>
    %35 = vector.shape_cast %34 : vector<1x96xf32> to vector<1x96xf32>
    %36 = vector.broadcast %35 : vector<1x96xf32> to vector<2x96xf32>
    %37 = vector.extract_strided_slice %0 {offsets = [9, 0], sizes = [1, 96], strides = [1, 1]} : vector<14x96xf32> to vector<1x96xf32>
    %38 = vector.shape_cast %37 : vector<1x96xf32> to vector<1x96xf32>
    %39 = vector.broadcast %38 : vector<1x96xf32> to vector<2x96xf32>
    %40 = vector.extract_strided_slice %0 {offsets = [10, 0], sizes = [1, 96], strides = [1, 1]} : vector<14x96xf32> to vector<1x96xf32>
    %41 = vector.shape_cast %40 : vector<1x96xf32> to vector<1x96xf32>
    %42 = vector.broadcast %41 : vector<1x96xf32> to vector<2x96xf32>
    %43 = vector.extract_strided_slice %0 {offsets = [11, 0], sizes = [1, 96], strides = [1, 1]} : vector<14x96xf32> to vector<1x96xf32>
    %44 = vector.shape_cast %43 : vector<1x96xf32> to vector<1x96xf32>
    %45 = vector.broadcast %44 : vector<1x96xf32> to vector<2x96xf32>
    %46 = vector.extract_strided_slice %0 {offsets = [12, 0], sizes = [1, 96], strides = [1, 1]} : vector<14x96xf32> to vector<1x96xf32>
    %47 = vector.shape_cast %46 : vector<1x96xf32> to vector<1x96xf32>
    %48 = vector.broadcast %47 : vector<1x96xf32> to vector<2x96xf32>
    %49 = vector.extract_strided_slice %0 {offsets = [13, 0], sizes = [1, 96], strides = [1, 1]} : vector<14x96xf32> to vector<1x96xf32>
    %50 = vector.shape_cast %49 : vector<1x96xf32> to vector<1x96xf32>
    %51 = vector.broadcast %50 : vector<1x96xf32> to vector<2x96xf32>
    %c0_7 = arith.constant 0 : index
    %c0_8 = arith.constant 0 : index
    %52 = vector.load %arg1[%c0_7, %c0_8] : memref<2x32xf32, #tpu.memory_space<vmem>>, vector<2x32xf32>
    %c0_9 = arith.constant 0 : index
    %c0_10 = arith.constant 0 : index
    %53 = vector.load %arg0[%c0_9, %c0_10] : memref<2x14xf32, #tpu.memory_space<vmem>>, vector<2x14xf32>
    %cst = arith.constant 0.000000e+00 : f32
    %54 = vector.broadcast %cst : f32 to vector<2x14xf32>
    %55 = arith.maximumf %53, %54 : vector<2x14xf32>
    %cst_11 = arith.constant dense<0.000000e+00> : vector<2x96xf32>
    %56 = tpu.matmul %55, %0, %cst_11 {dimension_numbers = #tpu.dot_dimension_numbers<[1], [0], [0], [1], [0, 0, 1, 1], [], []>} : vector<2x14xf32>, vector<14x96xf32>, vector<2x96xf32> -> vector<2x96xf32>
    %57 = arith.addf %56, %6 : vector<2x96xf32>
    %cst_12 = arith.constant dense<0.000000e+00> : vector<2x110xf32>
    %58 = tpu.matmul %52, %1, %cst_12 {dimension_numbers = #tpu.dot_dimension_numbers<[1], [0], [0], [1], [0, 0, 1, 1], [], []>} : vector<2x32xf32>, vector<32x110xf32>, vector<2x110xf32> -> vector<2x110xf32>
    %59 = arith.addf %58, %9 : vector<2x110xf32>
    %60 = vector.extract_strided_slice %59 {offsets = [0, 0], sizes = [2, 96], strides = [1, 1]} : vector<2x110xf32> to vector<2x96xf32>
    %61 = vector.extract_strided_slice %57 {offsets = [0, 0], sizes = [2, 32], strides = [1, 1]} : vector<2x96xf32> to vector<2x32xf32>
    %62 = vector.extract_strided_slice %60 {offsets = [0, 0], sizes = [2, 32], strides = [1, 1]} : vector<2x96xf32> to vector<2x32xf32>
    %63 = arith.addf %61, %62 : vector<2x32xf32>
    %64 = arith.negf %63 : vector<2x32xf32>
    %65 = math.exp %64 : vector<2x32xf32>
    %cst_13 = arith.constant 1.000000e+00 : f32
    %66 = vector.broadcast %cst_13 : f32 to vector<2x32xf32>
    %67 = arith.addf %66, %65 : vector<2x32xf32>
    %68 = arith.divf %66, %67 : vector<2x32xf32>
    %69 = vector.extract_strided_slice %57 {offsets = [0, 32], sizes = [2, 32], strides = [1, 1]} : vector<2x96xf32> to vector<2x32xf32>
    %70 = vector.extract_strided_slice %60 {offsets = [0, 32], sizes = [2, 32], strides = [1, 1]} : vector<2x96xf32> to vector<2x32xf32>
    %71 = arith.addf %69, %70 : vector<2x32xf32>
    %72 = arith.negf %71 : vector<2x32xf32>
    %73 = math.exp %72 : vector<2x32xf32>
    %cst_14 = arith.constant 1.000000e+00 : f32
    %74 = vector.broadcast %cst_14 : f32 to vector<2x32xf32>
    %75 = arith.addf %74, %73 : vector<2x32xf32>
    %76 = arith.divf %74, %75 : vector<2x32xf32>
    %77 = vector.extract_strided_slice %57 {offsets = [0, 64], sizes = [2, 32], strides = [1, 1]} : vector<2x96xf32> to vector<2x32xf32>
    %78 = vector.extract_strided_slice %60 {offsets = [0, 64], sizes = [2, 32], strides = [1, 1]} : vector<2x96xf32> to vector<2x32xf32>
    %79 = arith.mulf %68, %78 : vector<2x32xf32>
    %80 = arith.addf %77, %79 : vector<2x32xf32>
    %81 = math.tanh %80 : vector<2x32xf32>
    %cst_15 = arith.constant 1.000000e+00 : f32
    %82 = vector.broadcast %cst_15 : f32 to vector<2x32xf32>
    %83 = arith.subf %82, %76 : vector<2x32xf32>
    %84 = arith.mulf %83, %81 : vector<2x32xf32>
    %85 = arith.mulf %76, %52 : vector<2x32xf32>
    %86 = arith.addf %84, %85 : vector<2x32xf32>
    %cst_16 = arith.constant dense<0.000000e+00> : vector<2x110xf32>
    %87 = tpu.matmul %86, %1, %cst_16 {dimension_numbers = #tpu.dot_dimension_numbers<[1], [0], [0], [1], [0, 0, 1, 1], [], []>} : vector<2x32xf32>, vector<32x110xf32>, vector<2x110xf32> -> vector<2x110xf32>
    %88 = arith.addf %87, %9 : vector<2x110xf32>
    %89 = vector.extract_strided_slice %88 {offsets = [0, 0], sizes = [2, 96], strides = [1, 1]} : vector<2x110xf32> to vector<2x96xf32>
    %90 = vector.extract_strided_slice %88 {offsets = [0, 96], sizes = [2, 14], strides = [1, 1]} : vector<2x110xf32> to vector<2x14xf32>
    %cst_17 = arith.constant dense<0xFF800000> : vector<2xf32>
    %91 = vector.multi_reduction <maximumf>, %90, %cst_17 [1] : vector<2x14xf32> to vector<2xf32>
    %92 = vector.shape_cast %91 : vector<2xf32> to vector<2x1xf32>
    %93 = vector.broadcast %92 : vector<2x1xf32> to vector<2x14xf32>
    %94 = arith.cmpf oeq, %90, %93 : vector<2x14xf32>
    %c14_i32 = arith.constant 14 : i32
    %95 = vector.broadcast %c14_i32 : i32 to vector<2x14xi32>
    %96 = arith.select %94, %2, %95 : vector<2x14xi1>, vector<2x14xi32>
    %cst_18 = arith.constant dense<2147483647> : vector<2xi32>
    %97 = vector.multi_reduction <minsi>, %96, %cst_18 [1] : vector<2x14xi32> to vector<2xi32>
    %98 = vector.shape_cast %97 : vector<2xi32> to vector<2x1xi32>
    %99 = vector.broadcast %92 : vector<2x1xf32> to vector<2x14xf32>
    %100 = arith.subf %90, %99 : vector<2x14xf32>
    %101 = math.exp %100 : vector<2x14xf32>
    %cst_19 = arith.constant dense<0.000000e+00> : vector<2xf32>
    %102 = vector.multi_reduction <add>, %101, %cst_19 [1] : vector<2x14xf32> to vector<2xf32>
    %103 = vector.shape_cast %102 : vector<2xf32> to vector<2x1xf32>
    %104 = math.log %103 : vector<2x1xf32>
    %105 = vector.broadcast %104 : vector<2x1xf32> to vector<2x14xf32>
    %106 = arith.subf %100, %105 : vector<2x14xf32>
    %c0_20 = arith.constant 0 : index
    %c0_21 = arith.constant 0 : index
    %c0_22 = arith.constant 0 : index
    %107 = vector.load %arg6[%c0_20, %c0_21, %c0_22] : memref<2x8x14xf32, #tpu.memory_space<vmem>>, vector<2x1x14xf32>
    %108 = vector.shape_cast %107 : vector<2x1x14xf32> to vector<2x14xf32>
    %109 = vector.shape_cast %106 : vector<2x14xf32> to vector<2x1x14xf32>
    tpu.vector_store %arg6[%c0_20, %c0_21, %c0_22], %109 {strides = array<i32>} : memref<2x8x14xf32, #tpu.memory_space<vmem>>, vector<2x1x14xf32>,
    %c13_i32 = arith.constant 13 : i32
    %110 = vector.broadcast %c13_i32 : i32 to vector<2x1xi32>
    %111 = arith.cmpi eq, %98, %110 : vector<2x1xi32>
    %c2_i32 = arith.constant 2 : i32
    %112 = vector.broadcast %c2_i32 : i32 to vector<2x1xi32>
    %113 = arith.select %111, %3, %112 : vector<2x1xi1>, vector<2x1xi32>
    %cst_23 = arith.constant dense<2147483647> : vector<1xi32>
    %114 = vector.multi_reduction <minsi>, %113, %cst_23 [0] : vector<2x1xi32> to vector<1xi32>
    %115 = vector.shape_cast %114 : vector<1xi32> to vector<1x1xi32>
    %116 = vector.broadcast %115 : vector<1x1xi32> to vector<2x1xi32>
    %117 = arith.cmpi slt, %3, %116 : vector<2x1xi32>
    %118 = arith.extui %117 : vector<2x1xi1> to vector<2x1xi32>
    %119 = arith.sitofp %118 : vector<2x1xi32> to vector<2x1xf32>
    %c0_i32 = arith.constant 0 : i32
    %120 = vector.broadcast %c0_i32 : i32 to vector<2x1xi32>
    %121 = arith.cmpi eq, %98, %120 : vector<2x1xi32>
    %122 = arith.extui %121 : vector<2x1xi1> to vector<2x1xi32>
    %123 = arith.sitofp %122 : vector<2x1xi32> to vector<2x1xf32>
    %124 = vector.broadcast %123 : vector<2x1xf32> to vector<2x96xf32>
    %125 = arith.mulf %124, %12 : vector<2x96xf32>
    %c1_i32 = arith.constant 1 : i32
    %126 = vector.broadcast %c1_i32 : i32 to vector<2x1xi32>
    %127 = arith.cmpi eq, %98, %126 : vector<2x1xi32>
    %128 = arith.extui %127 : vector<2x1xi1> to vector<2x1xi32>
    %129 = arith.sitofp %128 : vector<2x1xi32> to vector<2x1xf32>
    %130 = vector.broadcast %129 : vector<2x1xf32> to vector<2x96xf32>
    %131 = arith.mulf %130, %15 : vector<2x96xf32>
    %c2_i32_24 = arith.constant 2 : i32
    %132 = vector.broadcast %c2_i32_24 : i32 to vector<2x1xi32>
    %133 = arith.cmpi eq, %98, %132 : vector<2x1xi32>
    %134 = arith.extui %133 : vector<2x1xi1> to vector<2x1xi32>
    %135 = arith.sitofp %134 : vector<2x1xi32> to vector<2x1xf32>
    %136 = vector.broadcast %135 : vector<2x1xf32> to vector<2x96xf32>
    %137 = arith.mulf %136, %18 : vector<2x96xf32>
    %c3_i32 = arith.constant 3 : i32
    %138 = vector.broadcast %c3_i32 : i32 to vector<2x1xi32>
    %139 = arith.cmpi eq, %98, %138 : vector<2x1xi32>
    %140 = arith.extui %139 : vector<2x1xi1> to vector<2x1xi32>
    %141 = arith.sitofp %140 : vector<2x1xi32> to vector<2x1xf32>
    %142 = vector.broadcast %141 : vector<2x1xf32> to vector<2x96xf32>
    %143 = arith.mulf %142, %21 : vector<2x96xf32>
    %c4_i32 = arith.constant 4 : i32
    %144 = vector.broadcast %c4_i32 : i32 to vector<2x1xi32>
    %145 = arith.cmpi eq, %98, %144 : vector<2x1xi32>
    %146 = arith.extui %145 : vector<2x1xi1> to vector<2x1xi32>
    %147 = arith.sitofp %146 : vector<2x1xi32> to vector<2x1xf32>
    %148 = vector.broadcast %147 : vector<2x1xf32> to vector<2x96xf32>
    %149 = arith.mulf %148, %24 : vector<2x96xf32>
    %c5_i32 = arith.constant 5 : i32
    %150 = vector.broadcast %c5_i32 : i32 to vector<2x1xi32>
    %151 = arith.cmpi eq, %98, %150 : vector<2x1xi32>
    %152 = arith.extui %151 : vector<2x1xi1> to vector<2x1xi32>
    %153 = arith.sitofp %152 : vector<2x1xi32> to vector<2x1xf32>
    %154 = vector.broadcast %153 : vector<2x1xf32> to vector<2x96xf32>
    %155 = arith.mulf %154, %27 : vector<2x96xf32>
    %c6_i32 = arith.constant 6 : i32
    %156 = vector.broadcast %c6_i32 : i32 to vector<2x1xi32>
    %157 = arith.cmpi eq, %98, %156 : vector<2x1xi32>
    %158 = arith.extui %157 : vector<2x1xi1> to vector<2x1xi32>
    %159 = arith.sitofp %158 : vector<2x1xi32> to vector<2x1xf32>
    %160 = vector.broadcast %159 : vector<2x1xf32> to vector<2x96xf32>
    %161 = arith.mulf %160, %30 : vector<2x96xf32>
    %c7_i32 = arith.constant 7 : i32
    %162 = vector.broadcast %c7_i32 : i32 to vector<2x1xi32>
    %163 = arith.cmpi eq, %98, %162 : vector<2x1xi32>
    %164 = arith.extui %163 : vector<2x1xi1> to vector<2x1xi32>
    %165 = arith.sitofp %164 : vector<2x1xi32> to vector<2x1xf32>
    %166 = vector.broadcast %165 : vector<2x1xf32> to vector<2x96xf32>
    %167 = arith.mulf %166, %33 : vector<2x96xf32>
    %c8_i32 = arith.constant 8 : i32
    %168 = vector.broadcast %c8_i32 : i32 to vector<2x1xi32>
    %169 = arith.cmpi eq, %98, %168 : vector<2x1xi32>
    %170 = arith.extui %169 : vector<2x1xi1> to vector<2x1xi32>
    %171 = arith.sitofp %170 : vector<2x1xi32> to vector<2x1xf32>
    %172 = vector.broadcast %171 : vector<2x1xf32> to vector<2x96xf32>
    %173 = arith.mulf %172, %36 : vector<2x96xf32>
    %c9_i32 = arith.constant 9 : i32
    %174 = vector.broadcast %c9_i32 : i32 to vector<2x1xi32>
    %175 = arith.cmpi eq, %98, %174 : vector<2x1xi32>
    %176 = arith.extui %175 : vector<2x1xi1> to vector<2x1xi32>
    %177 = arith.sitofp %176 : vector<2x1xi32> to vector<2x1xf32>
    %178 = vector.broadcast %177 : vector<2x1xf32> to vector<2x96xf32>
    %179 = arith.mulf %178, %39 : vector<2x96xf32>
    %c10_i32 = arith.constant 10 : i32
    %180 = vector.broadcast %c10_i32 : i32 to vector<2x1xi32>
    %181 = arith.cmpi eq, %98, %180 : vector<2x1xi32>
    %182 = arith.extui %181 : vector<2x1xi1> to vector<2x1xi32>
    %183 = arith.sitofp %182 : vector<2x1xi32> to vector<2x1xf32>
    %184 = vector.broadcast %183 : vector<2x1xf32> to vector<2x96xf32>
    %185 = arith.mulf %184, %42 : vector<2x96xf32>
    %c11_i32 = arith.constant 11 : i32
    %186 = vector.broadcast %c11_i32 : i32 to vector<2x1xi32>
    %187 = arith.cmpi eq, %98, %186 : vector<2x1xi32>
    %188 = arith.extui %187 : vector<2x1xi1> to vector<2x1xi32>
    %189 = arith.sitofp %188 : vector<2x1xi32> to vector<2x1xf32>
    %190 = vector.broadcast %189 : vector<2x1xf32> to vector<2x96xf32>
    %191 = arith.mulf %190, %45 : vector<2x96xf32>
    %c12_i32 = arith.constant 12 : i32
    %192 = vector.broadcast %c12_i32 : i32 to vector<2x1xi32>
    %193 = arith.cmpi eq, %98, %192 : vector<2x1xi32>
    %194 = arith.extui %193 : vector<2x1xi1> to vector<2x1xi32>
    %195 = arith.sitofp %194 : vector<2x1xi32> to vector<2x1xf32>
    %196 = vector.broadcast %195 : vector<2x1xf32> to vector<2x96xf32>
    %197 = arith.mulf %196, %48 : vector<2x96xf32>
    %c13_i32_25 = arith.constant 13 : i32
    %198 = vector.broadcast %c13_i32_25 : i32 to vector<2x1xi32>
    %199 = arith.cmpi eq, %98, %198 : vector<2x1xi32>
    %200 = arith.extui %199 : vector<2x1xi1> to vector<2x1xi32>
    %201 = arith.sitofp %200 : vector<2x1xi32> to vector<2x1xf32>
    %202 = vector.broadcast %201 : vector<2x1xf32> to vector<2x96xf32>
    %203 = arith.mulf %202, %51 : vector<2x96xf32>
    %204 = arith.addf %125, %131 : vector<2x96xf32>
    %205 = arith.addf %137, %143 : vector<2x96xf32>
    %206 = arith.addf %149, %155 : vector<2x96xf32>
    %207 = arith.addf %161, %167 : vector<2x96xf32>
    %208 = arith.addf %173, %179 : vector<2x96xf32>
    %209 = arith.addf %185, %191 : vector<2x96xf32>
    %210 = arith.addf %197, %203 : vector<2x96xf32>
    %211 = arith.addf %204, %205 : vector<2x96xf32>
    %212 = arith.addf %206, %207 : vector<2x96xf32>
    %213 = arith.addf %208, %209 : vector<2x96xf32>
    %214 = arith.addf %211, %212 : vector<2x96xf32>
    %215 = arith.addf %213, %210 : vector<2x96xf32>
    %216 = arith.addf %214, %215 : vector<2x96xf32>
    %217 = vector.broadcast %119 : vector<2x1xf32> to vector<2x96xf32>
    %218 = arith.mulf %217, %216 : vector<2x96xf32>
    %219 = arith.addf %218, %6 : vector<2x96xf32>
    %220 = vector.extract_strided_slice %219 {offsets = [0, 0], sizes = [2, 32], strides = [1, 1]} : vector<2x96xf32> to vector<2x32xf32>
    %221 = vector.extract_strided_slice %89 {offsets = [0, 0], sizes = [2, 32], strides = [1, 1]} : vector<2x96xf32> to vector<2x32xf32>
    %222 = arith.addf %220, %221 : vector<2x32xf32>
    %223 = arith.negf %222 : vector<2x32xf32>
    %224 = math.exp %223 : vector<2x32xf32>
    %cst_26 = arith.constant 1.000000e+00 : f32
    %225 = vector.broadcast %cst_26 : f32 to vector<2x32xf32>
    %226 = arith.addf %225, %224 : vector<2x32xf32>
    %227 = arith.divf %225, %226 : vector<2x32xf32>
    %228 = vector.extract_strided_slice %219 {offsets = [0, 32], sizes = [2, 32], strides = [1, 1]} : vector<2x96xf32> to vector<2x32xf32>
    %229 = vector.extract_strided_slice %89 {offsets = [0, 32], sizes = [2, 32], strides = [1, 1]} : vector<2x96xf32> to vector<2x32xf32>
    %230 = arith.addf %228, %229 : vector<2x32xf32>
    %231 = arith.negf %230 : vector<2x32xf32>
    %232 = math.exp %231 : vector<2x32xf32>
    %cst_27 = arith.constant 1.000000e+00 : f32
    %233 = vector.broadcast %cst_27 : f32 to vector<2x32xf32>
    %234 = arith.addf %233, %232 : vector<2x32xf32>
    %235 = arith.divf %233, %234 : vector<2x32xf32>
    %236 = vector.extract_strided_slice %219 {offsets = [0, 64], sizes = [2, 32], strides = [1, 1]} : vector<2x96xf32> to vector<2x32xf32>
    %237 = vector.extract_strided_slice %89 {offsets = [0, 64], sizes = [2, 32], strides = [1, 1]} : vector<2x96xf32> to vector<2x32xf32>
    %238 = arith.mulf %227, %237 : vector<2x32xf32>
    %239 = arith.addf %236, %238 : vector<2x32xf32>
    %240 = math.tanh %239 : vector<2x32xf32>
    %cst_28 = arith.constant 1.000000e+00 : f32
    %241 = vector.broadcast %cst_28 : f32 to vector<2x32xf32>
    %242 = arith.subf %241, %235 : vector<2x32xf32>
    %243 = arith.mulf %242, %240 : vector<2x32xf32>
    %244 = arith.mulf %235, %86 : vector<2x32xf32>
    %245 = arith.addf %243, %244 : vector<2x32xf32>
    %cst_29 = arith.constant dense<0.000000e+00> : vector<2x110xf32>
    %246 = tpu.matmul %245, %1, %cst_29 {dimension_numbers = #tpu.dot_dimension_numbers<[1], [0], [0], [1], [0, 0, 1, 1], [], []>} : vector<2x32xf32>, vector<32x110xf32>, vector<2x110xf32> -> vector<2x110xf32>
    %247 = arith.addf %246, %9 : vector<2x110xf32>
    %248 = vector.extract_strided_slice %247 {offsets = [0, 0], sizes = [2, 96], strides = [1, 1]} : vector<2x110xf32> to vector<2x96xf32>
    %249 = vector.extract_strided_slice %247 {offsets = [0, 96], sizes = [2, 14], strides = [1, 1]} : vector<2x110xf32> to vector<2x14xf32>
    %cst_30 = arith.constant dense<0xFF800000> : vector<2xf32>
    %250 = vector.multi_reduction <maximumf>, %249, %cst_30 [1] : vector<2x14xf32> to vector<2xf32>
    %251 = vector.shape_cast %250 : vector<2xf32> to vector<2x1xf32>
    %252 = vector.broadcast %251 : vector<2x1xf32> to vector<2x14xf32>
    %253 = arith.cmpf oeq, %249, %252 : vector<2x14xf32>
    %c14_i32_31 = arith.constant 14 : i32
    %254 = vector.broadcast %c14_i32_31 : i32 to vector<2x14xi32>
    %255 = arith.select %253, %2, %254 : vector<2x14xi1>, vector<2x14xi32>
    %cst_32 = arith.constant dense<2147483647> : vector<2xi32>
    %256 = vector.multi_reduction <minsi>, %255, %cst_32 [1] : vector<2x14xi32> to vector<2xi32>
    %257 = vector.shape_cast %256 : vector<2xi32> to vector<2x1xi32>
    %258 = vector.broadcast %251 : vector<2x1xf32> to vector<2x14xf32>
    %259 = arith.subf %249, %258 : vector<2x14xf32>
    %260 = math.exp %259 : vector<2x14xf32>
    %cst_33 = arith.constant dense<0.000000e+00> : vector<2xf32>
    %261 = vector.multi_reduction <add>, %260, %cst_33 [1] : vector<2x14xf32> to vector<2xf32>
    %262 = vector.shape_cast %261 : vector<2xf32> to vector<2x1xf32>
    %263 = math.log %262 : vector<2x1xf32>
    %264 = vector.broadcast %263 : vector<2x1xf32> to vector<2x14xf32>
    %265 = arith.subf %259, %264 : vector<2x14xf32>
    %c0_34 = arith.constant 0 : index
    %c1 = arith.constant 1 : index
    %c0_35 = arith.constant 0 : index
    %266 = vector.load %arg6[%c0_34, %c1, %c0_35] : memref<2x8x14xf32, #tpu.memory_space<vmem>>, vector<2x1x14xf32>
    %267 = vector.shape_cast %266 : vector<2x1x14xf32> to vector<2x14xf32>
    %268 = vector.shape_cast %265 : vector<2x14xf32> to vector<2x1x14xf32>
    tpu.vector_store %arg6[%c0_34, %c1, %c0_35], %268 {strides = array<i32>} : memref<2x8x14xf32, #tpu.memory_space<vmem>>, vector<2x1x14xf32>,
    %c13_i32_36 = arith.constant 13 : i32
    %269 = vector.broadcast %c13_i32_36 : i32 to vector<2x1xi32>
    %270 = arith.cmpi eq, %257, %269 : vector<2x1xi32>
    %c2_i32_37 = arith.constant 2 : i32
    %271 = vector.broadcast %c2_i32_37 : i32 to vector<2x1xi32>
    %272 = arith.select %270, %3, %271 : vector<2x1xi1>, vector<2x1xi32>
    %cst_38 = arith.constant dense<2147483647> : vector<1xi32>
    %273 = vector.multi_reduction <minsi>, %272, %cst_38 [0] : vector<2x1xi32> to vector<1xi32>
    %274 = vector.shape_cast %273 : vector<1xi32> to vector<1x1xi32>
    %275 = vector.broadcast %274 : vector<1x1xi32> to vector<2x1xi32>
    %276 = arith.cmpi slt, %3, %275 : vector<2x1xi32>
    %277 = arith.extui %276 : vector<2x1xi1> to vector<2x1xi32>
    %278 = arith.sitofp %277 : vector<2x1xi32> to vector<2x1xf32>
    %c0_i32_39 = arith.constant 0 : i32
    %279 = vector.broadcast %c0_i32_39 : i32 to vector<2x1xi32>
    %280 = arith.cmpi eq, %257, %279 : vector<2x1xi32>
    %281 = arith.extui %280 : vector<2x1xi1> to vector<2x1xi32>
    %282 = arith.sitofp %281 : vector<2x1xi32> to vector<2x1xf32>
    %283 = vector.broadcast %282 : vector<2x1xf32> to vector<2x96xf32>
    %284 = arith.mulf %283, %12 : vector<2x96xf32>
    %c1_i32_40 = arith.constant 1 : i32
    %285 = vector.broadcast %c1_i32_40 : i32 to vector<2x1xi32>
    %286 = arith.cmpi eq, %257, %285 : vector<2x1xi32>
    %287 = arith.extui %286 : vector<2x1xi1> to vector<2x1xi32>
    %288 = arith.sitofp %287 : vector<2x1xi32> to vector<2x1xf32>
    %289 = vector.broadcast %288 : vector<2x1xf32> to vector<2x96xf32>
    %290 = arith.mulf %289, %15 : vector<2x96xf32>
    %c2_i32_41 = arith.constant 2 : i32
    %291 = vector.broadcast %c2_i32_41 : i32 to vector<2x1xi32>
    %292 = arith.cmpi eq, %257, %291 : vector<2x1xi32>
    %293 = arith.extui %292 : vector<2x1xi1> to vector<2x1xi32>
    %294 = arith.sitofp %293 : vector<2x1xi32> to vector<2x1xf32>
    %295 = vector.broadcast %294 : vector<2x1xf32> to vector<2x96xf32>
    %296 = arith.mulf %295, %18 : vector<2x96xf32>
    %c3_i32_42 = arith.constant 3 : i32
    %297 = vector.broadcast %c3_i32_42 : i32 to vector<2x1xi32>
    %298 = arith.cmpi eq, %257, %297 : vector<2x1xi32>
    %299 = arith.extui %298 : vector<2x1xi1> to vector<2x1xi32>
    %300 = arith.sitofp %299 : vector<2x1xi32> to vector<2x1xf32>
    %301 = vector.broadcast %300 : vector<2x1xf32> to vector<2x96xf32>
    %302 = arith.mulf %301, %21 : vector<2x96xf32>
    %c4_i32_43 = arith.constant 4 : i32
    %303 = vector.broadcast %c4_i32_43 : i32 to vector<2x1xi32>
    %304 = arith.cmpi eq, %257, %303 : vector<2x1xi32>
    %305 = arith.extui %304 : vector<2x1xi1> to vector<2x1xi32>
    %306 = arith.sitofp %305 : vector<2x1xi32> to vector<2x1xf32>
    %307 = vector.broadcast %306 : vector<2x1xf32> to vector<2x96xf32>
    %308 = arith.mulf %307, %24 : vector<2x96xf32>
    %c5_i32_44 = arith.constant 5 : i32
    %309 = vector.broadcast %c5_i32_44 : i32 to vector<2x1xi32>
    %310 = arith.cmpi eq, %257, %309 : vector<2x1xi32>
    %311 = arith.extui %310 : vector<2x1xi1> to vector<2x1xi32>
    %312 = arith.sitofp %311 : vector<2x1xi32> to vector<2x1xf32>
    %313 = vector.broadcast %312 : vector<2x1xf32> to vector<2x96xf32>
    %314 = arith.mulf %313, %27 : vector<2x96xf32>
    %c6_i32_45 = arith.constant 6 : i32
    %315 = vector.broadcast %c6_i32_45 : i32 to vector<2x1xi32>
    %316 = arith.cmpi eq, %257, %315 : vector<2x1xi32>
    %317 = arith.extui %316 : vector<2x1xi1> to vector<2x1xi32>
    %318 = arith.sitofp %317 : vector<2x1xi32> to vector<2x1xf32>
    %319 = vector.broadcast %318 : vector<2x1xf32> to vector<2x96xf32>
    %320 = arith.mulf %319, %30 : vector<2x96xf32>
    %c7_i32_46 = arith.constant 7 : i32
    %321 = vector.broadcast %c7_i32_46 : i32 to vector<2x1xi32>
    %322 = arith.cmpi eq, %257, %321 : vector<2x1xi32>
    %323 = arith.extui %322 : vector<2x1xi1> to vector<2x1xi32>
    %324 = arith.sitofp %323 : vector<2x1xi32> to vector<2x1xf32>
    %325 = vector.broadcast %324 : vector<2x1xf32> to vector<2x96xf32>
    %326 = arith.mulf %325, %33 : vector<2x96xf32>
    %c8_i32_47 = arith.constant 8 : i32
    %327 = vector.broadcast %c8_i32_47 : i32 to vector<2x1xi32>
    %328 = arith.cmpi eq, %257, %327 : vector<2x1xi32>
    %329 = arith.extui %328 : vector<2x1xi1> to vector<2x1xi32>
    %330 = arith.sitofp %329 : vector<2x1xi32> to vector<2x1xf32>
    %331 = vector.broadcast %330 : vector<2x1xf32> to vector<2x96xf32>
    %332 = arith.mulf %331, %36 : vector<2x96xf32>
    %c9_i32_48 = arith.constant 9 : i32
    %333 = vector.broadcast %c9_i32_48 : i32 to vector<2x1xi32>
    %334 = arith.cmpi eq, %257, %333 : vector<2x1xi32>
    %335 = arith.extui %334 : vector<2x1xi1> to vector<2x1xi32>
    %336 = arith.sitofp %335 : vector<2x1xi32> to vector<2x1xf32>
    %337 = vector.broadcast %336 : vector<2x1xf32> to vector<2x96xf32>
    %338 = arith.mulf %337, %39 : vector<2x96xf32>
    %c10_i32_49 = arith.constant 10 : i32
    %339 = vector.broadcast %c10_i32_49 : i32 to vector<2x1xi32>
    %340 = arith.cmpi eq, %257, %339 : vector<2x1xi32>
    %341 = arith.extui %340 : vector<2x1xi1> to vector<2x1xi32>
    %342 = arith.sitofp %341 : vector<2x1xi32> to vector<2x1xf32>
    %343 = vector.broadcast %342 : vector<2x1xf32> to vector<2x96xf32>
    %344 = arith.mulf %343, %42 : vector<2x96xf32>
    %c11_i32_50 = arith.constant 11 : i32
    %345 = vector.broadcast %c11_i32_50 : i32 to vector<2x1xi32>
    %346 = arith.cmpi eq, %257, %345 : vector<2x1xi32>
    %347 = arith.extui %346 : vector<2x1xi1> to vector<2x1xi32>
    %348 = arith.sitofp %347 : vector<2x1xi32> to vector<2x1xf32>
    %349 = vector.broadcast %348 : vector<2x1xf32> to vector<2x96xf32>
    %350 = arith.mulf %349, %45 : vector<2x96xf32>
    %c12_i32_51 = arith.constant 12 : i32
    %351 = vector.broadcast %c12_i32_51 : i32 to vector<2x1xi32>
    %352 = arith.cmpi eq, %257, %351 : vector<2x1xi32>
    %353 = arith.extui %352 : vector<2x1xi1> to vector<2x1xi32>
    %354 = arith.sitofp %353 : vector<2x1xi32> to vector<2x1xf32>
    %355 = vector.broadcast %354 : vector<2x1xf32> to vector<2x96xf32>
    %356 = arith.mulf %355, %48 : vector<2x96xf32>
    %c13_i32_52 = arith.constant 13 : i32
    %357 = vector.broadcast %c13_i32_52 : i32 to vector<2x1xi32>
    %358 = arith.cmpi eq, %257, %357 : vector<2x1xi32>
    %359 = arith.extui %358 : vector<2x1xi1> to vector<2x1xi32>
    %360 = arith.sitofp %359 : vector<2x1xi32> to vector<2x1xf32>
    %361 = vector.broadcast %360 : vector<2x1xf32> to vector<2x96xf32>
    %362 = arith.mulf %361, %51 : vector<2x96xf32>
    %363 = arith.addf %284, %290 : vector<2x96xf32>
    %364 = arith.addf %296, %302 : vector<2x96xf32>
    %365 = arith.addf %308, %314 : vector<2x96xf32>
    %366 = arith.addf %320, %326 : vector<2x96xf32>
    %367 = arith.addf %332, %338 : vector<2x96xf32>
    %368 = arith.addf %344, %350 : vector<2x96xf32>
    %369 = arith.addf %356, %362 : vector<2x96xf32>
    %370 = arith.addf %363, %364 : vector<2x96xf32>
    %371 = arith.addf %365, %366 : vector<2x96xf32>
    %372 = arith.addf %367, %368 : vector<2x96xf32>
    %373 = arith.addf %370, %371 : vector<2x96xf32>
    %374 = arith.addf %372, %369 : vector<2x96xf32>
    %375 = arith.addf %373, %374 : vector<2x96xf32>
    %376 = vector.broadcast %278 : vector<2x1xf32> to vector<2x96xf32>
    %377 = arith.mulf %376, %375 : vector<2x96xf32>
    %378 = arith.addf %377, %6 : vector<2x96xf32>
    %379 = vector.extract_strided_slice %378 {offsets = [0, 0], sizes = [2, 32], strides = [1, 1]} : vector<2x96xf32> to vector<2x32xf32>
    %380 = vector.extract_strided_slice %248 {offsets = [0, 0], sizes = [2, 32], strides = [1, 1]} : vector<2x96xf32> to vector<2x32xf32>
    %381 = arith.addf %379, %380 : vector<2x32xf32>
    %382 = arith.negf %381 : vector<2x32xf32>
    %383 = math.exp %382 : vector<2x32xf32>
    %cst_53 = arith.constant 1.000000e+00 : f32
    %384 = vector.broadcast %cst_53 : f32 to vector<2x32xf32>
    %385 = arith.addf %384, %383 : vector<2x32xf32>
    %386 = arith.divf %384, %385 : vector<2x32xf32>
    %387 = vector.extract_strided_slice %378 {offsets = [0, 32], sizes = [2, 32], strides = [1, 1]} : vector<2x96xf32> to vector<2x32xf32>
    %388 = vector.extract_strided_slice %248 {offsets = [0, 32], sizes = [2, 32], strides = [1, 1]} : vector<2x96xf32> to vector<2x32xf32>
    %389 = arith.addf %387, %388 : vector<2x32xf32>
    %390 = arith.negf %389 : vector<2x32xf32>
    %391 = math.exp %390 : vector<2x32xf32>
    %cst_54 = arith.constant 1.000000e+00 : f32
    %392 = vector.broadcast %cst_54 : f32 to vector<2x32xf32>
    %393 = arith.addf %392, %391 : vector<2x32xf32>
    %394 = arith.divf %392, %393 : vector<2x32xf32>
    %395 = vector.extract_strided_slice %378 {offsets = [0, 64], sizes = [2, 32], strides = [1, 1]} : vector<2x96xf32> to vector<2x32xf32>
    %396 = vector.extract_strided_slice %248 {offsets = [0, 64], sizes = [2, 32], strides = [1, 1]} : vector<2x96xf32> to vector<2x32xf32>
    %397 = arith.mulf %386, %396 : vector<2x32xf32>
    %398 = arith.addf %395, %397 : vector<2x32xf32>
    %399 = math.tanh %398 : vector<2x32xf32>
    %cst_55 = arith.constant 1.000000e+00 : f32
    %400 = vector.broadcast %cst_55 : f32 to vector<2x32xf32>
    %401 = arith.subf %400, %394 : vector<2x32xf32>
    %402 = arith.mulf %401, %399 : vector<2x32xf32>
    %403 = arith.mulf %394, %245 : vector<2x32xf32>
    %404 = arith.addf %402, %403 : vector<2x32xf32>
    %cst_56 = arith.constant dense<0.000000e+00> : vector<2x110xf32>
    %405 = tpu.matmul %404, %1, %cst_56 {dimension_numbers = #tpu.dot_dimension_numbers<[1], [0], [0], [1], [0, 0, 1, 1], [], []>} : vector<2x32xf32>, vector<32x110xf32>, vector<2x110xf32> -> vector<2x110xf32>
    %406 = arith.addf %405, %9 : vector<2x110xf32>
    %407 = vector.extract_strided_slice %406 {offsets = [0, 0], sizes = [2, 96], strides = [1, 1]} : vector<2x110xf32> to vector<2x96xf32>
    %408 = vector.extract_strided_slice %406 {offsets = [0, 96], sizes = [2, 14], strides = [1, 1]} : vector<2x110xf32> to vector<2x14xf32>
    %cst_57 = arith.constant dense<0xFF800000> : vector<2xf32>
    %409 = vector.multi_reduction <maximumf>, %408, %cst_57 [1] : vector<2x14xf32> to vector<2xf32>
    %410 = vector.shape_cast %409 : vector<2xf32> to vector<2x1xf32>
    %411 = vector.broadcast %410 : vector<2x1xf32> to vector<2x14xf32>
    %412 = arith.cmpf oeq, %408, %411 : vector<2x14xf32>
    %c14_i32_58 = arith.constant 14 : i32
    %413 = vector.broadcast %c14_i32_58 : i32 to vector<2x14xi32>
    %414 = arith.select %412, %2, %413 : vector<2x14xi1>, vector<2x14xi32>
    %cst_59 = arith.constant dense<2147483647> : vector<2xi32>
    %415 = vector.multi_reduction <minsi>, %414, %cst_59 [1] : vector<2x14xi32> to vector<2xi32>
    %416 = vector.shape_cast %415 : vector<2xi32> to vector<2x1xi32>
    %417 = vector.broadcast %410 : vector<2x1xf32> to vector<2x14xf32>
    %418 = arith.subf %408, %417 : vector<2x14xf32>
    %419 = math.exp %418 : vector<2x14xf32>
    %cst_60 = arith.constant dense<0.000000e+00> : vector<2xf32>
    %420 = vector.multi_reduction <add>, %419, %cst_60 [1] : vector<2x14xf32> to vector<2xf32>
    %421 = vector.shape_cast %420 : vector<2xf32> to vector<2x1xf32>
    %422 = math.log %421 : vector<2x1xf32>
    %423 = vector.broadcast %422 : vector<2x1xf32> to vector<2x14xf32>
    %424 = arith.subf %418, %423 : vector<2x14xf32>
    %c0_61 = arith.constant 0 : index
    %c2 = arith.constant 2 : index
    %c0_62 = arith.constant 0 : index
    %425 = vector.load %arg6[%c0_61, %c2, %c0_62] : memref<2x8x14xf32, #tpu.memory_space<vmem>>, vector<2x1x14xf32>
    %426 = vector.shape_cast %425 : vector<2x1x14xf32> to vector<2x14xf32>
    %427 = vector.shape_cast %424 : vector<2x14xf32> to vector<2x1x14xf32>
    tpu.vector_store %arg6[%c0_61, %c2, %c0_62], %427 {strides = array<i32>} : memref<2x8x14xf32, #tpu.memory_space<vmem>>, vector<2x1x14xf32>,
    %c13_i32_63 = arith.constant 13 : i32
    %428 = vector.broadcast %c13_i32_63 : i32 to vector<2x1xi32>
    %429 = arith.cmpi eq, %416, %428 : vector<2x1xi32>
    %c2_i32_64 = arith.constant 2 : i32
    %430 = vector.broadcast %c2_i32_64 : i32 to vector<2x1xi32>
    %431 = arith.select %429, %3, %430 : vector<2x1xi1>, vector<2x1xi32>
    %cst_65 = arith.constant dense<2147483647> : vector<1xi32>
    %432 = vector.multi_reduction <minsi>, %431, %cst_65 [0] : vector<2x1xi32> to vector<1xi32>
    %433 = vector.shape_cast %432 : vector<1xi32> to vector<1x1xi32>
    %434 = vector.broadcast %433 : vector<1x1xi32> to vector<2x1xi32>
    %435 = arith.cmpi slt, %3, %434 : vector<2x1xi32>
    %436 = arith.extui %435 : vector<2x1xi1> to vector<2x1xi32>
    %437 = arith.sitofp %436 : vector<2x1xi32> to vector<2x1xf32>
    %c0_i32_66 = arith.constant 0 : i32
    %438 = vector.broadcast %c0_i32_66 : i32 to vector<2x1xi32>
    %439 = arith.cmpi eq, %416, %438 : vector<2x1xi32>
    %440 = arith.extui %439 : vector<2x1xi1> to vector<2x1xi32>
    %441 = arith.sitofp %440 : vector<2x1xi32> to vector<2x1xf32>
    %442 = vector.broadcast %441 : vector<2x1xf32> to vector<2x96xf32>
    %443 = arith.mulf %442, %12 : vector<2x96xf32>
    %c1_i32_67 = arith.constant 1 : i32
    %444 = vector.broadcast %c1_i32_67 : i32 to vector<2x1xi32>
    %445 = arith.cmpi eq, %416, %444 : vector<2x1xi32>
    %446 = arith.extui %445 : vector<2x1xi1> to vector<2x1xi32>
    %447 = arith.sitofp %446 : vector<2x1xi32> to vector<2x1xf32>
    %448 = vector.broadcast %447 : vector<2x1xf32> to vector<2x96xf32>
    %449 = arith.mulf %448, %15 : vector<2x96xf32>
    %c2_i32_68 = arith.constant 2 : i32
    %450 = vector.broadcast %c2_i32_68 : i32 to vector<2x1xi32>
    %451 = arith.cmpi eq, %416, %450 : vector<2x1xi32>
    %452 = arith.extui %451 : vector<2x1xi1> to vector<2x1xi32>
    %453 = arith.sitofp %452 : vector<2x1xi32> to vector<2x1xf32>
    %454 = vector.broadcast %453 : vector<2x1xf32> to vector<2x96xf32>
    %455 = arith.mulf %454, %18 : vector<2x96xf32>
    %c3_i32_69 = arith.constant 3 : i32
    %456 = vector.broadcast %c3_i32_69 : i32 to vector<2x1xi32>
    %457 = arith.cmpi eq, %416, %456 : vector<2x1xi32>
    %458 = arith.extui %457 : vector<2x1xi1> to vector<2x1xi32>
    %459 = arith.sitofp %458 : vector<2x1xi32> to vector<2x1xf32>
    %460 = vector.broadcast %459 : vector<2x1xf32> to vector<2x96xf32>
    %461 = arith.mulf %460, %21 : vector<2x96xf32>
    %c4_i32_70 = arith.constant 4 : i32
    %462 = vector.broadcast %c4_i32_70 : i32 to vector<2x1xi32>
    %463 = arith.cmpi eq, %416, %462 : vector<2x1xi32>
    %464 = arith.extui %463 : vector<2x1xi1> to vector<2x1xi32>
    %465 = arith.sitofp %464 : vector<2x1xi32> to vector<2x1xf32>
    %466 = vector.broadcast %465 : vector<2x1xf32> to vector<2x96xf32>
    %467 = arith.mulf %466, %24 : vector<2x96xf32>
    %c5_i32_71 = arith.constant 5 : i32
    %468 = vector.broadcast %c5_i32_71 : i32 to vector<2x1xi32>
    %469 = arith.cmpi eq, %416, %468 : vector<2x1xi32>
    %470 = arith.extui %469 : vector<2x1xi1> to vector<2x1xi32>
    %471 = arith.sitofp %470 : vector<2x1xi32> to vector<2x1xf32>
    %472 = vector.broadcast %471 : vector<2x1xf32> to vector<2x96xf32>
    %473 = arith.mulf %472, %27 : vector<2x96xf32>
    %c6_i32_72 = arith.constant 6 : i32
    %474 = vector.broadcast %c6_i32_72 : i32 to vector<2x1xi32>
    %475 = arith.cmpi eq, %416, %474 : vector<2x1xi32>
    %476 = arith.extui %475 : vector<2x1xi1> to vector<2x1xi32>
    %477 = arith.sitofp %476 : vector<2x1xi32> to vector<2x1xf32>
    %478 = vector.broadcast %477 : vector<2x1xf32> to vector<2x96xf32>
    %479 = arith.mulf %478, %30 : vector<2x96xf32>
    %c7_i32_73 = arith.constant 7 : i32
    %480 = vector.broadcast %c7_i32_73 : i32 to vector<2x1xi32>
    %481 = arith.cmpi eq, %416, %480 : vector<2x1xi32>
    %482 = arith.extui %481 : vector<2x1xi1> to vector<2x1xi32>
    %483 = arith.sitofp %482 : vector<2x1xi32> to vector<2x1xf32>
    %484 = vector.broadcast %483 : vector<2x1xf32> to vector<2x96xf32>
    %485 = arith.mulf %484, %33 : vector<2x96xf32>
    %c8_i32_74 = arith.constant 8 : i32
    %486 = vector.broadcast %c8_i32_74 : i32 to vector<2x1xi32>
    %487 = arith.cmpi eq, %416, %486 : vector<2x1xi32>
    %488 = arith.extui %487 : vector<2x1xi1> to vector<2x1xi32>
    %489 = arith.sitofp %488 : vector<2x1xi32> to vector<2x1xf32>
    %490 = vector.broadcast %489 : vector<2x1xf32> to vector<2x96xf32>
    %491 = arith.mulf %490, %36 : vector<2x96xf32>
    %c9_i32_75 = arith.constant 9 : i32
    %492 = vector.broadcast %c9_i32_75 : i32 to vector<2x1xi32>
    %493 = arith.cmpi eq, %416, %492 : vector<2x1xi32>
    %494 = arith.extui %493 : vector<2x1xi1> to vector<2x1xi32>
    %495 = arith.sitofp %494 : vector<2x1xi32> to vector<2x1xf32>
    %496 = vector.broadcast %495 : vector<2x1xf32> to vector<2x96xf32>
    %497 = arith.mulf %496, %39 : vector<2x96xf32>
    %c10_i32_76 = arith.constant 10 : i32
    %498 = vector.broadcast %c10_i32_76 : i32 to vector<2x1xi32>
    %499 = arith.cmpi eq, %416, %498 : vector<2x1xi32>
    %500 = arith.extui %499 : vector<2x1xi1> to vector<2x1xi32>
    %501 = arith.sitofp %500 : vector<2x1xi32> to vector<2x1xf32>
    %502 = vector.broadcast %501 : vector<2x1xf32> to vector<2x96xf32>
    %503 = arith.mulf %502, %42 : vector<2x96xf32>
    %c11_i32_77 = arith.constant 11 : i32
    %504 = vector.broadcast %c11_i32_77 : i32 to vector<2x1xi32>
    %505 = arith.cmpi eq, %416, %504 : vector<2x1xi32>
    %506 = arith.extui %505 : vector<2x1xi1> to vector<2x1xi32>
    %507 = arith.sitofp %506 : vector<2x1xi32> to vector<2x1xf32>
    %508 = vector.broadcast %507 : vector<2x1xf32> to vector<2x96xf32>
    %509 = arith.mulf %508, %45 : vector<2x96xf32>
    %c12_i32_78 = arith.constant 12 : i32
    %510 = vector.broadcast %c12_i32_78 : i32 to vector<2x1xi32>
    %511 = arith.cmpi eq, %416, %510 : vector<2x1xi32>
    %512 = arith.extui %511 : vector<2x1xi1> to vector<2x1xi32>
    %513 = arith.sitofp %512 : vector<2x1xi32> to vector<2x1xf32>
    %514 = vector.broadcast %513 : vector<2x1xf32> to vector<2x96xf32>
    %515 = arith.mulf %514, %48 : vector<2x96xf32>
    %c13_i32_79 = arith.constant 13 : i32
    %516 = vector.broadcast %c13_i32_79 : i32 to vector<2x1xi32>
    %517 = arith.cmpi eq, %416, %516 : vector<2x1xi32>
    %518 = arith.extui %517 : vector<2x1xi1> to vector<2x1xi32>
    %519 = arith.sitofp %518 : vector<2x1xi32> to vector<2x1xf32>
    %520 = vector.broadcast %519 : vector<2x1xf32> to vector<2x96xf32>
    %521 = arith.mulf %520, %51 : vector<2x96xf32>
    %522 = arith.addf %443, %449 : vector<2x96xf32>
    %523 = arith.addf %455, %461 : vector<2x96xf32>
    %524 = arith.addf %467, %473 : vector<2x96xf32>
    %525 = arith.addf %479, %485 : vector<2x96xf32>
    %526 = arith.addf %491, %497 : vector<2x96xf32>
    %527 = arith.addf %503, %509 : vector<2x96xf32>
    %528 = arith.addf %515, %521 : vector<2x96xf32>
    %529 = arith.addf %522, %523 : vector<2x96xf32>
    %530 = arith.addf %524, %525 : vector<2x96xf32>
    %531 = arith.addf %526, %527 : vector<2x96xf32>
    %532 = arith.addf %529, %530 : vector<2x96xf32>
    %533 = arith.addf %531, %528 : vector<2x96xf32>
    %534 = arith.addf %532, %533 : vector<2x96xf32>
    %535 = vector.broadcast %437 : vector<2x1xf32> to vector<2x96xf32>
    %536 = arith.mulf %535, %534 : vector<2x96xf32>
    %537 = arith.addf %536, %6 : vector<2x96xf32>
    %538 = vector.extract_strided_slice %537 {offsets = [0, 0], sizes = [2, 32], strides = [1, 1]} : vector<2x96xf32> to vector<2x32xf32>
    %539 = vector.extract_strided_slice %407 {offsets = [0, 0], sizes = [2, 32], strides = [1, 1]} : vector<2x96xf32> to vector<2x32xf32>
    %540 = arith.addf %538, %539 : vector<2x32xf32>
    %541 = arith.negf %540 : vector<2x32xf32>
    %542 = math.exp %541 : vector<2x32xf32>
    %cst_80 = arith.constant 1.000000e+00 : f32
    %543 = vector.broadcast %cst_80 : f32 to vector<2x32xf32>
    %544 = arith.addf %543, %542 : vector<2x32xf32>
    %545 = arith.divf %543, %544 : vector<2x32xf32>
    %546 = vector.extract_strided_slice %537 {offsets = [0, 32], sizes = [2, 32], strides = [1, 1]} : vector<2x96xf32> to vector<2x32xf32>
    %547 = vector.extract_strided_slice %407 {offsets = [0, 32], sizes = [2, 32], strides = [1, 1]} : vector<2x96xf32> to vector<2x32xf32>
    %548 = arith.addf %546, %547 : vector<2x32xf32>
    %549 = arith.negf %548 : vector<2x32xf32>
    %550 = math.exp %549 : vector<2x32xf32>
    %cst_81 = arith.constant 1.000000e+00 : f32
    %551 = vector.broadcast %cst_81 : f32 to vector<2x32xf32>
    %552 = arith.addf %551, %550 : vector<2x32xf32>
    %553 = arith.divf %551, %552 : vector<2x32xf32>
    %554 = vector.extract_strided_slice %537 {offsets = [0, 64], sizes = [2, 32], strides = [1, 1]} : vector<2x96xf32> to vector<2x32xf32>
    %555 = vector.extract_strided_slice %407 {offsets = [0, 64], sizes = [2, 32], strides = [1, 1]} : vector<2x96xf32> to vector<2x32xf32>
    %556 = arith.mulf %545, %555 : vector<2x32xf32>
    %557 = arith.addf %554, %556 : vector<2x32xf32>
    %558 = math.tanh %557 : vector<2x32xf32>
    %cst_82 = arith.constant 1.000000e+00 : f32
    %559 = vector.broadcast %cst_82 : f32 to vector<2x32xf32>
    %560 = arith.subf %559, %553 : vector<2x32xf32>
    %561 = arith.mulf %560, %558 : vector<2x32xf32>
    %562 = arith.mulf %553, %404 : vector<2x32xf32>
    %563 = arith.addf %561, %562 : vector<2x32xf32>
    %cst_83 = arith.constant dense<0.000000e+00> : vector<2x110xf32>
    %564 = tpu.matmul %563, %1, %cst_83 {dimension_numbers = #tpu.dot_dimension_numbers<[1], [0], [0], [1], [0, 0, 1, 1], [], []>} : vector<2x32xf32>, vector<32x110xf32>, vector<2x110xf32> -> vector<2x110xf32>
    %565 = arith.addf %564, %9 : vector<2x110xf32>
    %566 = vector.extract_strided_slice %565 {offsets = [0, 0], sizes = [2, 96], strides = [1, 1]} : vector<2x110xf32> to vector<2x96xf32>
    %567 = vector.extract_strided_slice %565 {offsets = [0, 96], sizes = [2, 14], strides = [1, 1]} : vector<2x110xf32> to vector<2x14xf32>
    %cst_84 = arith.constant dense<0xFF800000> : vector<2xf32>
    %568 = vector.multi_reduction <maximumf>, %567, %cst_84 [1] : vector<2x14xf32> to vector<2xf32>
    %569 = vector.shape_cast %568 : vector<2xf32> to vector<2x1xf32>
    %570 = vector.broadcast %569 : vector<2x1xf32> to vector<2x14xf32>
    %571 = arith.cmpf oeq, %567, %570 : vector<2x14xf32>
    %c14_i32_85 = arith.constant 14 : i32
    %572 = vector.broadcast %c14_i32_85 : i32 to vector<2x14xi32>
    %573 = arith.select %571, %2, %572 : vector<2x14xi1>, vector<2x14xi32>
    %cst_86 = arith.constant dense<2147483647> : vector<2xi32>
    %574 = vector.multi_reduction <minsi>, %573, %cst_86 [1] : vector<2x14xi32> to vector<2xi32>
    %575 = vector.shape_cast %574 : vector<2xi32> to vector<2x1xi32>
    %576 = vector.broadcast %569 : vector<2x1xf32> to vector<2x14xf32>
    %577 = arith.subf %567, %576 : vector<2x14xf32>
    %578 = math.exp %577 : vector<2x14xf32>
    %cst_87 = arith.constant dense<0.000000e+00> : vector<2xf32>
    %579 = vector.multi_reduction <add>, %578, %cst_87 [1] : vector<2x14xf32> to vector<2xf32>
    %580 = vector.shape_cast %579 : vector<2xf32> to vector<2x1xf32>
    %581 = math.log %580 : vector<2x1xf32>
    %582 = vector.broadcast %581 : vector<2x1xf32> to vector<2x14xf32>
    %583 = arith.subf %577, %582 : vector<2x14xf32>
    %c0_88 = arith.constant 0 : index
    %c3 = arith.constant 3 : index
    %c0_89 = arith.constant 0 : index
    %584 = vector.load %arg6[%c0_88, %c3, %c0_89] : memref<2x8x14xf32, #tpu.memory_space<vmem>>, vector<2x1x14xf32>
    %585 = vector.shape_cast %584 : vector<2x1x14xf32> to vector<2x14xf32>
    %586 = vector.shape_cast %583 : vector<2x14xf32> to vector<2x1x14xf32>
    tpu.vector_store %arg6[%c0_88, %c3, %c0_89], %586 {strides = array<i32>} : memref<2x8x14xf32, #tpu.memory_space<vmem>>, vector<2x1x14xf32>,
    %c13_i32_90 = arith.constant 13 : i32
    %587 = vector.broadcast %c13_i32_90 : i32 to vector<2x1xi32>
    %588 = arith.cmpi eq, %575, %587 : vector<2x1xi32>
    %c2_i32_91 = arith.constant 2 : i32
    %589 = vector.broadcast %c2_i32_91 : i32 to vector<2x1xi32>
    %590 = arith.select %588, %3, %589 : vector<2x1xi1>, vector<2x1xi32>
    %cst_92 = arith.constant dense<2147483647> : vector<1xi32>
    %591 = vector.multi_reduction <minsi>, %590, %cst_92 [0] : vector<2x1xi32> to vector<1xi32>
    %592 = vector.shape_cast %591 : vector<1xi32> to vector<1x1xi32>
    %593 = vector.broadcast %592 : vector<1x1xi32> to vector<2x1xi32>
    %594 = arith.cmpi slt, %3, %593 : vector<2x1xi32>
    %595 = arith.extui %594 : vector<2x1xi1> to vector<2x1xi32>
    %596 = arith.sitofp %595 : vector<2x1xi32> to vector<2x1xf32>
    %c0_i32_93 = arith.constant 0 : i32
    %597 = vector.broadcast %c0_i32_93 : i32 to vector<2x1xi32>
    %598 = arith.cmpi eq, %575, %597 : vector<2x1xi32>
    %599 = arith.extui %598 : vector<2x1xi1> to vector<2x1xi32>
    %600 = arith.sitofp %599 : vector<2x1xi32> to vector<2x1xf32>
    %601 = vector.broadcast %600 : vector<2x1xf32> to vector<2x96xf32>
    %602 = arith.mulf %601, %12 : vector<2x96xf32>
    %c1_i32_94 = arith.constant 1 : i32
    %603 = vector.broadcast %c1_i32_94 : i32 to vector<2x1xi32>
    %604 = arith.cmpi eq, %575, %603 : vector<2x1xi32>
    %605 = arith.extui %604 : vector<2x1xi1> to vector<2x1xi32>
    %606 = arith.sitofp %605 : vector<2x1xi32> to vector<2x1xf32>
    %607 = vector.broadcast %606 : vector<2x1xf32> to vector<2x96xf32>
    %608 = arith.mulf %607, %15 : vector<2x96xf32>
    %c2_i32_95 = arith.constant 2 : i32
    %609 = vector.broadcast %c2_i32_95 : i32 to vector<2x1xi32>
    %610 = arith.cmpi eq, %575, %609 : vector<2x1xi32>
    %611 = arith.extui %610 : vector<2x1xi1> to vector<2x1xi32>
    %612 = arith.sitofp %611 : vector<2x1xi32> to vector<2x1xf32>
    %613 = vector.broadcast %612 : vector<2x1xf32> to vector<2x96xf32>
    %614 = arith.mulf %613, %18 : vector<2x96xf32>
    %c3_i32_96 = arith.constant 3 : i32
    %615 = vector.broadcast %c3_i32_96 : i32 to vector<2x1xi32>
    %616 = arith.cmpi eq, %575, %615 : vector<2x1xi32>
    %617 = arith.extui %616 : vector<2x1xi1> to vector<2x1xi32>
    %618 = arith.sitofp %617 : vector<2x1xi32> to vector<2x1xf32>
    %619 = vector.broadcast %618 : vector<2x1xf32> to vector<2x96xf32>
    %620 = arith.mulf %619, %21 : vector<2x96xf32>
    %c4_i32_97 = arith.constant 4 : i32
    %621 = vector.broadcast %c4_i32_97 : i32 to vector<2x1xi32>
    %622 = arith.cmpi eq, %575, %621 : vector<2x1xi32>
    %623 = arith.extui %622 : vector<2x1xi1> to vector<2x1xi32>
    %624 = arith.sitofp %623 : vector<2x1xi32> to vector<2x1xf32>
    %625 = vector.broadcast %624 : vector<2x1xf32> to vector<2x96xf32>
    %626 = arith.mulf %625, %24 : vector<2x96xf32>
    %c5_i32_98 = arith.constant 5 : i32
    %627 = vector.broadcast %c5_i32_98 : i32 to vector<2x1xi32>
    %628 = arith.cmpi eq, %575, %627 : vector<2x1xi32>
    %629 = arith.extui %628 : vector<2x1xi1> to vector<2x1xi32>
    %630 = arith.sitofp %629 : vector<2x1xi32> to vector<2x1xf32>
    %631 = vector.broadcast %630 : vector<2x1xf32> to vector<2x96xf32>
    %632 = arith.mulf %631, %27 : vector<2x96xf32>
    %c6_i32_99 = arith.constant 6 : i32
    %633 = vector.broadcast %c6_i32_99 : i32 to vector<2x1xi32>
    %634 = arith.cmpi eq, %575, %633 : vector<2x1xi32>
    %635 = arith.extui %634 : vector<2x1xi1> to vector<2x1xi32>
    %636 = arith.sitofp %635 : vector<2x1xi32> to vector<2x1xf32>
    %637 = vector.broadcast %636 : vector<2x1xf32> to vector<2x96xf32>
    %638 = arith.mulf %637, %30 : vector<2x96xf32>
    %c7_i32_100 = arith.constant 7 : i32
    %639 = vector.broadcast %c7_i32_100 : i32 to vector<2x1xi32>
    %640 = arith.cmpi eq, %575, %639 : vector<2x1xi32>
    %641 = arith.extui %640 : vector<2x1xi1> to vector<2x1xi32>
    %642 = arith.sitofp %641 : vector<2x1xi32> to vector<2x1xf32>
    %643 = vector.broadcast %642 : vector<2x1xf32> to vector<2x96xf32>
    %644 = arith.mulf %643, %33 : vector<2x96xf32>
    %c8_i32_101 = arith.constant 8 : i32
    %645 = vector.broadcast %c8_i32_101 : i32 to vector<2x1xi32>
    %646 = arith.cmpi eq, %575, %645 : vector<2x1xi32>
    %647 = arith.extui %646 : vector<2x1xi1> to vector<2x1xi32>
    %648 = arith.sitofp %647 : vector<2x1xi32> to vector<2x1xf32>
    %649 = vector.broadcast %648 : vector<2x1xf32> to vector<2x96xf32>
    %650 = arith.mulf %649, %36 : vector<2x96xf32>
    %c9_i32_102 = arith.constant 9 : i32
    %651 = vector.broadcast %c9_i32_102 : i32 to vector<2x1xi32>
    %652 = arith.cmpi eq, %575, %651 : vector<2x1xi32>
    %653 = arith.extui %652 : vector<2x1xi1> to vector<2x1xi32>
    %654 = arith.sitofp %653 : vector<2x1xi32> to vector<2x1xf32>
    %655 = vector.broadcast %654 : vector<2x1xf32> to vector<2x96xf32>
    %656 = arith.mulf %655, %39 : vector<2x96xf32>
    %c10_i32_103 = arith.constant 10 : i32
    %657 = vector.broadcast %c10_i32_103 : i32 to vector<2x1xi32>
    %658 = arith.cmpi eq, %575, %657 : vector<2x1xi32>
    %659 = arith.extui %658 : vector<2x1xi1> to vector<2x1xi32>
    %660 = arith.sitofp %659 : vector<2x1xi32> to vector<2x1xf32>
    %661 = vector.broadcast %660 : vector<2x1xf32> to vector<2x96xf32>
    %662 = arith.mulf %661, %42 : vector<2x96xf32>
    %c11_i32_104 = arith.constant 11 : i32
    %663 = vector.broadcast %c11_i32_104 : i32 to vector<2x1xi32>
    %664 = arith.cmpi eq, %575, %663 : vector<2x1xi32>
    %665 = arith.extui %664 : vector<2x1xi1> to vector<2x1xi32>
    %666 = arith.sitofp %665 : vector<2x1xi32> to vector<2x1xf32>
    %667 = vector.broadcast %666 : vector<2x1xf32> to vector<2x96xf32>
    %668 = arith.mulf %667, %45 : vector<2x96xf32>
    %c12_i32_105 = arith.constant 12 : i32
    %669 = vector.broadcast %c12_i32_105 : i32 to vector<2x1xi32>
    %670 = arith.cmpi eq, %575, %669 : vector<2x1xi32>
    %671 = arith.extui %670 : vector<2x1xi1> to vector<2x1xi32>
    %672 = arith.sitofp %671 : vector<2x1xi32> to vector<2x1xf32>
    %673 = vector.broadcast %672 : vector<2x1xf32> to vector<2x96xf32>
    %674 = arith.mulf %673, %48 : vector<2x96xf32>
    %c13_i32_106 = arith.constant 13 : i32
    %675 = vector.broadcast %c13_i32_106 : i32 to vector<2x1xi32>
    %676 = arith.cmpi eq, %575, %675 : vector<2x1xi32>
    %677 = arith.extui %676 : vector<2x1xi1> to vector<2x1xi32>
    %678 = arith.sitofp %677 : vector<2x1xi32> to vector<2x1xf32>
    %679 = vector.broadcast %678 : vector<2x1xf32> to vector<2x96xf32>
    %680 = arith.mulf %679, %51 : vector<2x96xf32>
    %681 = arith.addf %602, %608 : vector<2x96xf32>
    %682 = arith.addf %614, %620 : vector<2x96xf32>
    %683 = arith.addf %626, %632 : vector<2x96xf32>
    %684 = arith.addf %638, %644 : vector<2x96xf32>
    %685 = arith.addf %650, %656 : vector<2x96xf32>
    %686 = arith.addf %662, %668 : vector<2x96xf32>
    %687 = arith.addf %674, %680 : vector<2x96xf32>
    %688 = arith.addf %681, %682 : vector<2x96xf32>
    %689 = arith.addf %683, %684 : vector<2x96xf32>
    %690 = arith.addf %685, %686 : vector<2x96xf32>
    %691 = arith.addf %688, %689 : vector<2x96xf32>
    %692 = arith.addf %690, %687 : vector<2x96xf32>
    %693 = arith.addf %691, %692 : vector<2x96xf32>
    %694 = vector.broadcast %596 : vector<2x1xf32> to vector<2x96xf32>
    %695 = arith.mulf %694, %693 : vector<2x96xf32>
    %696 = arith.addf %695, %6 : vector<2x96xf32>
    %697 = vector.extract_strided_slice %696 {offsets = [0, 0], sizes = [2, 32], strides = [1, 1]} : vector<2x96xf32> to vector<2x32xf32>
    %698 = vector.extract_strided_slice %566 {offsets = [0, 0], sizes = [2, 32], strides = [1, 1]} : vector<2x96xf32> to vector<2x32xf32>
    %699 = arith.addf %697, %698 : vector<2x32xf32>
    %700 = arith.negf %699 : vector<2x32xf32>
    %701 = math.exp %700 : vector<2x32xf32>
    %cst_107 = arith.constant 1.000000e+00 : f32
    %702 = vector.broadcast %cst_107 : f32 to vector<2x32xf32>
    %703 = arith.addf %702, %701 : vector<2x32xf32>
    %704 = arith.divf %702, %703 : vector<2x32xf32>
    %705 = vector.extract_strided_slice %696 {offsets = [0, 32], sizes = [2, 32], strides = [1, 1]} : vector<2x96xf32> to vector<2x32xf32>
    %706 = vector.extract_strided_slice %566 {offsets = [0, 32], sizes = [2, 32], strides = [1, 1]} : vector<2x96xf32> to vector<2x32xf32>
    %707 = arith.addf %705, %706 : vector<2x32xf32>
    %708 = arith.negf %707 : vector<2x32xf32>
    %709 = math.exp %708 : vector<2x32xf32>
    %cst_108 = arith.constant 1.000000e+00 : f32
    %710 = vector.broadcast %cst_108 : f32 to vector<2x32xf32>
    %711 = arith.addf %710, %709 : vector<2x32xf32>
    %712 = arith.divf %710, %711 : vector<2x32xf32>
    %713 = vector.extract_strided_slice %696 {offsets = [0, 64], sizes = [2, 32], strides = [1, 1]} : vector<2x96xf32> to vector<2x32xf32>
    %714 = vector.extract_strided_slice %566 {offsets = [0, 64], sizes = [2, 32], strides = [1, 1]} : vector<2x96xf32> to vector<2x32xf32>
    %715 = arith.mulf %704, %714 : vector<2x32xf32>
    %716 = arith.addf %713, %715 : vector<2x32xf32>
    %717 = math.tanh %716 : vector<2x32xf32>
    %cst_109 = arith.constant 1.000000e+00 : f32
    %718 = vector.broadcast %cst_109 : f32 to vector<2x32xf32>
    %719 = arith.subf %718, %712 : vector<2x32xf32>
    %720 = arith.mulf %719, %717 : vector<2x32xf32>
    %721 = arith.mulf %712, %563 : vector<2x32xf32>
    %722 = arith.addf %720, %721 : vector<2x32xf32>
    %cst_110 = arith.constant dense<0.000000e+00> : vector<2x110xf32>
    %723 = tpu.matmul %722, %1, %cst_110 {dimension_numbers = #tpu.dot_dimension_numbers<[1], [0], [0], [1], [0, 0, 1, 1], [], []>} : vector<2x32xf32>, vector<32x110xf32>, vector<2x110xf32> -> vector<2x110xf32>
    %724 = arith.addf %723, %9 : vector<2x110xf32>
    %725 = vector.extract_strided_slice %724 {offsets = [0, 0], sizes = [2, 96], strides = [1, 1]} : vector<2x110xf32> to vector<2x96xf32>
    %726 = vector.extract_strided_slice %724 {offsets = [0, 96], sizes = [2, 14], strides = [1, 1]} : vector<2x110xf32> to vector<2x14xf32>
    %cst_111 = arith.constant dense<0xFF800000> : vector<2xf32>
    %727 = vector.multi_reduction <maximumf>, %726, %cst_111 [1] : vector<2x14xf32> to vector<2xf32>
    %728 = vector.shape_cast %727 : vector<2xf32> to vector<2x1xf32>
    %729 = vector.broadcast %728 : vector<2x1xf32> to vector<2x14xf32>
    %730 = arith.cmpf oeq, %726, %729 : vector<2x14xf32>
    %c14_i32_112 = arith.constant 14 : i32
    %731 = vector.broadcast %c14_i32_112 : i32 to vector<2x14xi32>
    %732 = arith.select %730, %2, %731 : vector<2x14xi1>, vector<2x14xi32>
    %cst_113 = arith.constant dense<2147483647> : vector<2xi32>
    %733 = vector.multi_reduction <minsi>, %732, %cst_113 [1] : vector<2x14xi32> to vector<2xi32>
    %734 = vector.shape_cast %733 : vector<2xi32> to vector<2x1xi32>
    %735 = vector.broadcast %728 : vector<2x1xf32> to vector<2x14xf32>
    %736 = arith.subf %726, %735 : vector<2x14xf32>
    %737 = math.exp %736 : vector<2x14xf32>
    %cst_114 = arith.constant dense<0.000000e+00> : vector<2xf32>
    %738 = vector.multi_reduction <add>, %737, %cst_114 [1] : vector<2x14xf32> to vector<2xf32>
    %739 = vector.shape_cast %738 : vector<2xf32> to vector<2x1xf32>
    %740 = math.log %739 : vector<2x1xf32>
    %741 = vector.broadcast %740 : vector<2x1xf32> to vector<2x14xf32>
    %742 = arith.subf %736, %741 : vector<2x14xf32>
    %c0_115 = arith.constant 0 : index
    %c4 = arith.constant 4 : index
    %c0_116 = arith.constant 0 : index
    %743 = vector.load %arg6[%c0_115, %c4, %c0_116] : memref<2x8x14xf32, #tpu.memory_space<vmem>>, vector<2x1x14xf32>
    %744 = vector.shape_cast %743 : vector<2x1x14xf32> to vector<2x14xf32>
    %745 = vector.shape_cast %742 : vector<2x14xf32> to vector<2x1x14xf32>
    tpu.vector_store %arg6[%c0_115, %c4, %c0_116], %745 {strides = array<i32>} : memref<2x8x14xf32, #tpu.memory_space<vmem>>, vector<2x1x14xf32>,
    %c13_i32_117 = arith.constant 13 : i32
    %746 = vector.broadcast %c13_i32_117 : i32 to vector<2x1xi32>
    %747 = arith.cmpi eq, %734, %746 : vector<2x1xi32>
    %c2_i32_118 = arith.constant 2 : i32
    %748 = vector.broadcast %c2_i32_118 : i32 to vector<2x1xi32>
    %749 = arith.select %747, %3, %748 : vector<2x1xi1>, vector<2x1xi32>
    %cst_119 = arith.constant dense<2147483647> : vector<1xi32>
    %750 = vector.multi_reduction <minsi>, %749, %cst_119 [0] : vector<2x1xi32> to vector<1xi32>
    %751 = vector.shape_cast %750 : vector<1xi32> to vector<1x1xi32>
    %752 = vector.broadcast %751 : vector<1x1xi32> to vector<2x1xi32>
    %753 = arith.cmpi slt, %3, %752 : vector<2x1xi32>
    %754 = arith.extui %753 : vector<2x1xi1> to vector<2x1xi32>
    %755 = arith.sitofp %754 : vector<2x1xi32> to vector<2x1xf32>
    %c0_i32_120 = arith.constant 0 : i32
    %756 = vector.broadcast %c0_i32_120 : i32 to vector<2x1xi32>
    %757 = arith.cmpi eq, %734, %756 : vector<2x1xi32>
    %758 = arith.extui %757 : vector<2x1xi1> to vector<2x1xi32>
    %759 = arith.sitofp %758 : vector<2x1xi32> to vector<2x1xf32>
    %760 = vector.broadcast %759 : vector<2x1xf32> to vector<2x96xf32>
    %761 = arith.mulf %760, %12 : vector<2x96xf32>
    %c1_i32_121 = arith.constant 1 : i32
    %762 = vector.broadcast %c1_i32_121 : i32 to vector<2x1xi32>
    %763 = arith.cmpi eq, %734, %762 : vector<2x1xi32>
    %764 = arith.extui %763 : vector<2x1xi1> to vector<2x1xi32>
    %765 = arith.sitofp %764 : vector<2x1xi32> to vector<2x1xf32>
    %766 = vector.broadcast %765 : vector<2x1xf32> to vector<2x96xf32>
    %767 = arith.mulf %766, %15 : vector<2x96xf32>
    %c2_i32_122 = arith.constant 2 : i32
    %768 = vector.broadcast %c2_i32_122 : i32 to vector<2x1xi32>
    %769 = arith.cmpi eq, %734, %768 : vector<2x1xi32>
    %770 = arith.extui %769 : vector<2x1xi1> to vector<2x1xi32>
    %771 = arith.sitofp %770 : vector<2x1xi32> to vector<2x1xf32>
    %772 = vector.broadcast %771 : vector<2x1xf32> to vector<2x96xf32>
    %773 = arith.mulf %772, %18 : vector<2x96xf32>
    %c3_i32_123 = arith.constant 3 : i32
    %774 = vector.broadcast %c3_i32_123 : i32 to vector<2x1xi32>
    %775 = arith.cmpi eq, %734, %774 : vector<2x1xi32>
    %776 = arith.extui %775 : vector<2x1xi1> to vector<2x1xi32>
    %777 = arith.sitofp %776 : vector<2x1xi32> to vector<2x1xf32>
    %778 = vector.broadcast %777 : vector<2x1xf32> to vector<2x96xf32>
    %779 = arith.mulf %778, %21 : vector<2x96xf32>
    %c4_i32_124 = arith.constant 4 : i32
    %780 = vector.broadcast %c4_i32_124 : i32 to vector<2x1xi32>
    %781 = arith.cmpi eq, %734, %780 : vector<2x1xi32>
    %782 = arith.extui %781 : vector<2x1xi1> to vector<2x1xi32>
    %783 = arith.sitofp %782 : vector<2x1xi32> to vector<2x1xf32>
    %784 = vector.broadcast %783 : vector<2x1xf32> to vector<2x96xf32>
    %785 = arith.mulf %784, %24 : vector<2x96xf32>
    %c5_i32_125 = arith.constant 5 : i32
    %786 = vector.broadcast %c5_i32_125 : i32 to vector<2x1xi32>
    %787 = arith.cmpi eq, %734, %786 : vector<2x1xi32>
    %788 = arith.extui %787 : vector<2x1xi1> to vector<2x1xi32>
    %789 = arith.sitofp %788 : vector<2x1xi32> to vector<2x1xf32>
    %790 = vector.broadcast %789 : vector<2x1xf32> to vector<2x96xf32>
    %791 = arith.mulf %790, %27 : vector<2x96xf32>
    %c6_i32_126 = arith.constant 6 : i32
    %792 = vector.broadcast %c6_i32_126 : i32 to vector<2x1xi32>
    %793 = arith.cmpi eq, %734, %792 : vector<2x1xi32>
    %794 = arith.extui %793 : vector<2x1xi1> to vector<2x1xi32>
    %795 = arith.sitofp %794 : vector<2x1xi32> to vector<2x1xf32>
    %796 = vector.broadcast %795 : vector<2x1xf32> to vector<2x96xf32>
    %797 = arith.mulf %796, %30 : vector<2x96xf32>
    %c7_i32_127 = arith.constant 7 : i32
    %798 = vector.broadcast %c7_i32_127 : i32 to vector<2x1xi32>
    %799 = arith.cmpi eq, %734, %798 : vector<2x1xi32>
    %800 = arith.extui %799 : vector<2x1xi1> to vector<2x1xi32>
    %801 = arith.sitofp %800 : vector<2x1xi32> to vector<2x1xf32>
    %802 = vector.broadcast %801 : vector<2x1xf32> to vector<2x96xf32>
    %803 = arith.mulf %802, %33 : vector<2x96xf32>
    %c8_i32_128 = arith.constant 8 : i32
    %804 = vector.broadcast %c8_i32_128 : i32 to vector<2x1xi32>
    %805 = arith.cmpi eq, %734, %804 : vector<2x1xi32>
    %806 = arith.extui %805 : vector<2x1xi1> to vector<2x1xi32>
    %807 = arith.sitofp %806 : vector<2x1xi32> to vector<2x1xf32>
    %808 = vector.broadcast %807 : vector<2x1xf32> to vector<2x96xf32>
    %809 = arith.mulf %808, %36 : vector<2x96xf32>
    %c9_i32_129 = arith.constant 9 : i32
    %810 = vector.broadcast %c9_i32_129 : i32 to vector<2x1xi32>
    %811 = arith.cmpi eq, %734, %810 : vector<2x1xi32>
    %812 = arith.extui %811 : vector<2x1xi1> to vector<2x1xi32>
    %813 = arith.sitofp %812 : vector<2x1xi32> to vector<2x1xf32>
    %814 = vector.broadcast %813 : vector<2x1xf32> to vector<2x96xf32>
    %815 = arith.mulf %814, %39 : vector<2x96xf32>
    %c10_i32_130 = arith.constant 10 : i32
    %816 = vector.broadcast %c10_i32_130 : i32 to vector<2x1xi32>
    %817 = arith.cmpi eq, %734, %816 : vector<2x1xi32>
    %818 = arith.extui %817 : vector<2x1xi1> to vector<2x1xi32>
    %819 = arith.sitofp %818 : vector<2x1xi32> to vector<2x1xf32>
    %820 = vector.broadcast %819 : vector<2x1xf32> to vector<2x96xf32>
    %821 = arith.mulf %820, %42 : vector<2x96xf32>
    %c11_i32_131 = arith.constant 11 : i32
    %822 = vector.broadcast %c11_i32_131 : i32 to vector<2x1xi32>
    %823 = arith.cmpi eq, %734, %822 : vector<2x1xi32>
    %824 = arith.extui %823 : vector<2x1xi1> to vector<2x1xi32>
    %825 = arith.sitofp %824 : vector<2x1xi32> to vector<2x1xf32>
    %826 = vector.broadcast %825 : vector<2x1xf32> to vector<2x96xf32>
    %827 = arith.mulf %826, %45 : vector<2x96xf32>
    %c12_i32_132 = arith.constant 12 : i32
    %828 = vector.broadcast %c12_i32_132 : i32 to vector<2x1xi32>
    %829 = arith.cmpi eq, %734, %828 : vector<2x1xi32>
    %830 = arith.extui %829 : vector<2x1xi1> to vector<2x1xi32>
    %831 = arith.sitofp %830 : vector<2x1xi32> to vector<2x1xf32>
    %832 = vector.broadcast %831 : vector<2x1xf32> to vector<2x96xf32>
    %833 = arith.mulf %832, %48 : vector<2x96xf32>
    %c13_i32_133 = arith.constant 13 : i32
    %834 = vector.broadcast %c13_i32_133 : i32 to vector<2x1xi32>
    %835 = arith.cmpi eq, %734, %834 : vector<2x1xi32>
    %836 = arith.extui %835 : vector<2x1xi1> to vector<2x1xi32>
    %837 = arith.sitofp %836 : vector<2x1xi32> to vector<2x1xf32>
    %838 = vector.broadcast %837 : vector<2x1xf32> to vector<2x96xf32>
    %839 = arith.mulf %838, %51 : vector<2x96xf32>
    %840 = arith.addf %761, %767 : vector<2x96xf32>
    %841 = arith.addf %773, %779 : vector<2x96xf32>
    %842 = arith.addf %785, %791 : vector<2x96xf32>
    %843 = arith.addf %797, %803 : vector<2x96xf32>
    %844 = arith.addf %809, %815 : vector<2x96xf32>
    %845 = arith.addf %821, %827 : vector<2x96xf32>
    %846 = arith.addf %833, %839 : vector<2x96xf32>
    %847 = arith.addf %840, %841 : vector<2x96xf32>
    %848 = arith.addf %842, %843 : vector<2x96xf32>
    %849 = arith.addf %844, %845 : vector<2x96xf32>
    %850 = arith.addf %847, %848 : vector<2x96xf32>
    %851 = arith.addf %849, %846 : vector<2x96xf32>
    %852 = arith.addf %850, %851 : vector<2x96xf32>
    %853 = vector.broadcast %755 : vector<2x1xf32> to vector<2x96xf32>
    %854 = arith.mulf %853, %852 : vector<2x96xf32>
    %855 = arith.addf %854, %6 : vector<2x96xf32>
    %856 = vector.extract_strided_slice %855 {offsets = [0, 0], sizes = [2, 32], strides = [1, 1]} : vector<2x96xf32> to vector<2x32xf32>
    %857 = vector.extract_strided_slice %725 {offsets = [0, 0], sizes = [2, 32], strides = [1, 1]} : vector<2x96xf32> to vector<2x32xf32>
    %858 = arith.addf %856, %857 : vector<2x32xf32>
    %859 = arith.negf %858 : vector<2x32xf32>
    %860 = math.exp %859 : vector<2x32xf32>
    %cst_134 = arith.constant 1.000000e+00 : f32
    %861 = vector.broadcast %cst_134 : f32 to vector<2x32xf32>
    %862 = arith.addf %861, %860 : vector<2x32xf32>
    %863 = arith.divf %861, %862 : vector<2x32xf32>
    %864 = vector.extract_strided_slice %855 {offsets = [0, 32], sizes = [2, 32], strides = [1, 1]} : vector<2x96xf32> to vector<2x32xf32>
    %865 = vector.extract_strided_slice %725 {offsets = [0, 32], sizes = [2, 32], strides = [1, 1]} : vector<2x96xf32> to vector<2x32xf32>
    %866 = arith.addf %864, %865 : vector<2x32xf32>
    %867 = arith.negf %866 : vector<2x32xf32>
    %868 = math.exp %867 : vector<2x32xf32>
    %cst_135 = arith.constant 1.000000e+00 : f32
    %869 = vector.broadcast %cst_135 : f32 to vector<2x32xf32>
    %870 = arith.addf %869, %868 : vector<2x32xf32>
    %871 = arith.divf %869, %870 : vector<2x32xf32>
    %872 = vector.extract_strided_slice %855 {offsets = [0, 64], sizes = [2, 32], strides = [1, 1]} : vector<2x96xf32> to vector<2x32xf32>
    %873 = vector.extract_strided_slice %725 {offsets = [0, 64], sizes = [2, 32], strides = [1, 1]} : vector<2x96xf32> to vector<2x32xf32>
    %874 = arith.mulf %863, %873 : vector<2x32xf32>
    %875 = arith.addf %872, %874 : vector<2x32xf32>
    %876 = math.tanh %875 : vector<2x32xf32>
    %cst_136 = arith.constant 1.000000e+00 : f32
    %877 = vector.broadcast %cst_136 : f32 to vector<2x32xf32>
    %878 = arith.subf %877, %871 : vector<2x32xf32>
    %879 = arith.mulf %878, %876 : vector<2x32xf32>
    %880 = arith.mulf %871, %722 : vector<2x32xf32>
    %881 = arith.addf %879, %880 : vector<2x32xf32>
    %cst_137 = arith.constant dense<0.000000e+00> : vector<2x110xf32>
    %882 = tpu.matmul %881, %1, %cst_137 {dimension_numbers = #tpu.dot_dimension_numbers<[1], [0], [0], [1], [0, 0, 1, 1], [], []>} : vector<2x32xf32>, vector<32x110xf32>, vector<2x110xf32> -> vector<2x110xf32>
    %883 = arith.addf %882, %9 : vector<2x110xf32>
    %884 = vector.extract_strided_slice %883 {offsets = [0, 0], sizes = [2, 96], strides = [1, 1]} : vector<2x110xf32> to vector<2x96xf32>
    %885 = vector.extract_strided_slice %883 {offsets = [0, 96], sizes = [2, 14], strides = [1, 1]} : vector<2x110xf32> to vector<2x14xf32>
    %cst_138 = arith.constant dense<0xFF800000> : vector<2xf32>
    %886 = vector.multi_reduction <maximumf>, %885, %cst_138 [1] : vector<2x14xf32> to vector<2xf32>
    %887 = vector.shape_cast %886 : vector<2xf32> to vector<2x1xf32>
    %888 = vector.broadcast %887 : vector<2x1xf32> to vector<2x14xf32>
    %889 = arith.cmpf oeq, %885, %888 : vector<2x14xf32>
    %c14_i32_139 = arith.constant 14 : i32
    %890 = vector.broadcast %c14_i32_139 : i32 to vector<2x14xi32>
    %891 = arith.select %889, %2, %890 : vector<2x14xi1>, vector<2x14xi32>
    %cst_140 = arith.constant dense<2147483647> : vector<2xi32>
    %892 = vector.multi_reduction <minsi>, %891, %cst_140 [1] : vector<2x14xi32> to vector<2xi32>
    %893 = vector.shape_cast %892 : vector<2xi32> to vector<2x1xi32>
    %894 = vector.broadcast %887 : vector<2x1xf32> to vector<2x14xf32>
    %895 = arith.subf %885, %894 : vector<2x14xf32>
    %896 = math.exp %895 : vector<2x14xf32>
    %cst_141 = arith.constant dense<0.000000e+00> : vector<2xf32>
    %897 = vector.multi_reduction <add>, %896, %cst_141 [1] : vector<2x14xf32> to vector<2xf32>
    %898 = vector.shape_cast %897 : vector<2xf32> to vector<2x1xf32>
    %899 = math.log %898 : vector<2x1xf32>
    %900 = vector.broadcast %899 : vector<2x1xf32> to vector<2x14xf32>
    %901 = arith.subf %895, %900 : vector<2x14xf32>
    %c0_142 = arith.constant 0 : index
    %c5 = arith.constant 5 : index
    %c0_143 = arith.constant 0 : index
    %902 = vector.load %arg6[%c0_142, %c5, %c0_143] : memref<2x8x14xf32, #tpu.memory_space<vmem>>, vector<2x1x14xf32>
    %903 = vector.shape_cast %902 : vector<2x1x14xf32> to vector<2x14xf32>
    %904 = vector.shape_cast %901 : vector<2x14xf32> to vector<2x1x14xf32>
    tpu.vector_store %arg6[%c0_142, %c5, %c0_143], %904 {strides = array<i32>} : memref<2x8x14xf32, #tpu.memory_space<vmem>>, vector<2x1x14xf32>,
    %c13_i32_144 = arith.constant 13 : i32
    %905 = vector.broadcast %c13_i32_144 : i32 to vector<2x1xi32>
    %906 = arith.cmpi eq, %893, %905 : vector<2x1xi32>
    %c2_i32_145 = arith.constant 2 : i32
    %907 = vector.broadcast %c2_i32_145 : i32 to vector<2x1xi32>
    %908 = arith.select %906, %3, %907 : vector<2x1xi1>, vector<2x1xi32>
    %cst_146 = arith.constant dense<2147483647> : vector<1xi32>
    %909 = vector.multi_reduction <minsi>, %908, %cst_146 [0] : vector<2x1xi32> to vector<1xi32>
    %910 = vector.shape_cast %909 : vector<1xi32> to vector<1x1xi32>
    %911 = vector.broadcast %910 : vector<1x1xi32> to vector<2x1xi32>
    %912 = arith.cmpi slt, %3, %911 : vector<2x1xi32>
    %913 = arith.extui %912 : vector<2x1xi1> to vector<2x1xi32>
    %914 = arith.sitofp %913 : vector<2x1xi32> to vector<2x1xf32>
    %c0_i32_147 = arith.constant 0 : i32
    %915 = vector.broadcast %c0_i32_147 : i32 to vector<2x1xi32>
    %916 = arith.cmpi eq, %893, %915 : vector<2x1xi32>
    %917 = arith.extui %916 : vector<2x1xi1> to vector<2x1xi32>
    %918 = arith.sitofp %917 : vector<2x1xi32> to vector<2x1xf32>
    %919 = vector.broadcast %918 : vector<2x1xf32> to vector<2x96xf32>
    %920 = arith.mulf %919, %12 : vector<2x96xf32>
    %c1_i32_148 = arith.constant 1 : i32
    %921 = vector.broadcast %c1_i32_148 : i32 to vector<2x1xi32>
    %922 = arith.cmpi eq, %893, %921 : vector<2x1xi32>
    %923 = arith.extui %922 : vector<2x1xi1> to vector<2x1xi32>
    %924 = arith.sitofp %923 : vector<2x1xi32> to vector<2x1xf32>
    %925 = vector.broadcast %924 : vector<2x1xf32> to vector<2x96xf32>
    %926 = arith.mulf %925, %15 : vector<2x96xf32>
    %c2_i32_149 = arith.constant 2 : i32
    %927 = vector.broadcast %c2_i32_149 : i32 to vector<2x1xi32>
    %928 = arith.cmpi eq, %893, %927 : vector<2x1xi32>
    %929 = arith.extui %928 : vector<2x1xi1> to vector<2x1xi32>
    %930 = arith.sitofp %929 : vector<2x1xi32> to vector<2x1xf32>
    %931 = vector.broadcast %930 : vector<2x1xf32> to vector<2x96xf32>
    %932 = arith.mulf %931, %18 : vector<2x96xf32>
    %c3_i32_150 = arith.constant 3 : i32
    %933 = vector.broadcast %c3_i32_150 : i32 to vector<2x1xi32>
    %934 = arith.cmpi eq, %893, %933 : vector<2x1xi32>
    %935 = arith.extui %934 : vector<2x1xi1> to vector<2x1xi32>
    %936 = arith.sitofp %935 : vector<2x1xi32> to vector<2x1xf32>
    %937 = vector.broadcast %936 : vector<2x1xf32> to vector<2x96xf32>
    %938 = arith.mulf %937, %21 : vector<2x96xf32>
    %c4_i32_151 = arith.constant 4 : i32
    %939 = vector.broadcast %c4_i32_151 : i32 to vector<2x1xi32>
    %940 = arith.cmpi eq, %893, %939 : vector<2x1xi32>
    %941 = arith.extui %940 : vector<2x1xi1> to vector<2x1xi32>
    %942 = arith.sitofp %941 : vector<2x1xi32> to vector<2x1xf32>
    %943 = vector.broadcast %942 : vector<2x1xf32> to vector<2x96xf32>
    %944 = arith.mulf %943, %24 : vector<2x96xf32>
    %c5_i32_152 = arith.constant 5 : i32
    %945 = vector.broadcast %c5_i32_152 : i32 to vector<2x1xi32>
    %946 = arith.cmpi eq, %893, %945 : vector<2x1xi32>
    %947 = arith.extui %946 : vector<2x1xi1> to vector<2x1xi32>
    %948 = arith.sitofp %947 : vector<2x1xi32> to vector<2x1xf32>
    %949 = vector.broadcast %948 : vector<2x1xf32> to vector<2x96xf32>
    %950 = arith.mulf %949, %27 : vector<2x96xf32>
    %c6_i32_153 = arith.constant 6 : i32
    %951 = vector.broadcast %c6_i32_153 : i32 to vector<2x1xi32>
    %952 = arith.cmpi eq, %893, %951 : vector<2x1xi32>
    %953 = arith.extui %952 : vector<2x1xi1> to vector<2x1xi32>
    %954 = arith.sitofp %953 : vector<2x1xi32> to vector<2x1xf32>
    %955 = vector.broadcast %954 : vector<2x1xf32> to vector<2x96xf32>
    %956 = arith.mulf %955, %30 : vector<2x96xf32>
    %c7_i32_154 = arith.constant 7 : i32
    %957 = vector.broadcast %c7_i32_154 : i32 to vector<2x1xi32>
    %958 = arith.cmpi eq, %893, %957 : vector<2x1xi32>
    %959 = arith.extui %958 : vector<2x1xi1> to vector<2x1xi32>
    %960 = arith.sitofp %959 : vector<2x1xi32> to vector<2x1xf32>
    %961 = vector.broadcast %960 : vector<2x1xf32> to vector<2x96xf32>
    %962 = arith.mulf %961, %33 : vector<2x96xf32>
    %c8_i32_155 = arith.constant 8 : i32
    %963 = vector.broadcast %c8_i32_155 : i32 to vector<2x1xi32>
    %964 = arith.cmpi eq, %893, %963 : vector<2x1xi32>
    %965 = arith.extui %964 : vector<2x1xi1> to vector<2x1xi32>
    %966 = arith.sitofp %965 : vector<2x1xi32> to vector<2x1xf32>
    %967 = vector.broadcast %966 : vector<2x1xf32> to vector<2x96xf32>
    %968 = arith.mulf %967, %36 : vector<2x96xf32>
    %c9_i32_156 = arith.constant 9 : i32
    %969 = vector.broadcast %c9_i32_156 : i32 to vector<2x1xi32>
    %970 = arith.cmpi eq, %893, %969 : vector<2x1xi32>
    %971 = arith.extui %970 : vector<2x1xi1> to vector<2x1xi32>
    %972 = arith.sitofp %971 : vector<2x1xi32> to vector<2x1xf32>
    %973 = vector.broadcast %972 : vector<2x1xf32> to vector<2x96xf32>
    %974 = arith.mulf %973, %39 : vector<2x96xf32>
    %c10_i32_157 = arith.constant 10 : i32
    %975 = vector.broadcast %c10_i32_157 : i32 to vector<2x1xi32>
    %976 = arith.cmpi eq, %893, %975 : vector<2x1xi32>
    %977 = arith.extui %976 : vector<2x1xi1> to vector<2x1xi32>
    %978 = arith.sitofp %977 : vector<2x1xi32> to vector<2x1xf32>
    %979 = vector.broadcast %978 : vector<2x1xf32> to vector<2x96xf32>
    %980 = arith.mulf %979, %42 : vector<2x96xf32>
    %c11_i32_158 = arith.constant 11 : i32
    %981 = vector.broadcast %c11_i32_158 : i32 to vector<2x1xi32>
    %982 = arith.cmpi eq, %893, %981 : vector<2x1xi32>
    %983 = arith.extui %982 : vector<2x1xi1> to vector<2x1xi32>
    %984 = arith.sitofp %983 : vector<2x1xi32> to vector<2x1xf32>
    %985 = vector.broadcast %984 : vector<2x1xf32> to vector<2x96xf32>
    %986 = arith.mulf %985, %45 : vector<2x96xf32>
    %c12_i32_159 = arith.constant 12 : i32
    %987 = vector.broadcast %c12_i32_159 : i32 to vector<2x1xi32>
    %988 = arith.cmpi eq, %893, %987 : vector<2x1xi32>
    %989 = arith.extui %988 : vector<2x1xi1> to vector<2x1xi32>
    %990 = arith.sitofp %989 : vector<2x1xi32> to vector<2x1xf32>
    %991 = vector.broadcast %990 : vector<2x1xf32> to vector<2x96xf32>
    %992 = arith.mulf %991, %48 : vector<2x96xf32>
    %c13_i32_160 = arith.constant 13 : i32
    %993 = vector.broadcast %c13_i32_160 : i32 to vector<2x1xi32>
    %994 = arith.cmpi eq, %893, %993 : vector<2x1xi32>
    %995 = arith.extui %994 : vector<2x1xi1> to vector<2x1xi32>
    %996 = arith.sitofp %995 : vector<2x1xi32> to vector<2x1xf32>
    %997 = vector.broadcast %996 : vector<2x1xf32> to vector<2x96xf32>
    %998 = arith.mulf %997, %51 : vector<2x96xf32>
    %999 = arith.addf %920, %926 : vector<2x96xf32>
    %1000 = arith.addf %932, %938 : vector<2x96xf32>
    %1001 = arith.addf %944, %950 : vector<2x96xf32>
    %1002 = arith.addf %956, %962 : vector<2x96xf32>
    %1003 = arith.addf %968, %974 : vector<2x96xf32>
    %1004 = arith.addf %980, %986 : vector<2x96xf32>
    %1005 = arith.addf %992, %998 : vector<2x96xf32>
    %1006 = arith.addf %999, %1000 : vector<2x96xf32>
    %1007 = arith.addf %1001, %1002 : vector<2x96xf32>
    %1008 = arith.addf %1003, %1004 : vector<2x96xf32>
    %1009 = arith.addf %1006, %1007 : vector<2x96xf32>
    %1010 = arith.addf %1008, %1005 : vector<2x96xf32>
    %1011 = arith.addf %1009, %1010 : vector<2x96xf32>
    %1012 = vector.broadcast %914 : vector<2x1xf32> to vector<2x96xf32>
    %1013 = arith.mulf %1012, %1011 : vector<2x96xf32>
    %1014 = arith.addf %1013, %6 : vector<2x96xf32>
    %1015 = vector.extract_strided_slice %1014 {offsets = [0, 0], sizes = [2, 32], strides = [1, 1]} : vector<2x96xf32> to vector<2x32xf32>
    %1016 = vector.extract_strided_slice %884 {offsets = [0, 0], sizes = [2, 32], strides = [1, 1]} : vector<2x96xf32> to vector<2x32xf32>
    %1017 = arith.addf %1015, %1016 : vector<2x32xf32>
    %1018 = arith.negf %1017 : vector<2x32xf32>
    %1019 = math.exp %1018 : vector<2x32xf32>
    %cst_161 = arith.constant 1.000000e+00 : f32
    %1020 = vector.broadcast %cst_161 : f32 to vector<2x32xf32>
    %1021 = arith.addf %1020, %1019 : vector<2x32xf32>
    %1022 = arith.divf %1020, %1021 : vector<2x32xf32>
    %1023 = vector.extract_strided_slice %1014 {offsets = [0, 32], sizes = [2, 32], strides = [1, 1]} : vector<2x96xf32> to vector<2x32xf32>
    %1024 = vector.extract_strided_slice %884 {offsets = [0, 32], sizes = [2, 32], strides = [1, 1]} : vector<2x96xf32> to vector<2x32xf32>
    %1025 = arith.addf %1023, %1024 : vector<2x32xf32>
    %1026 = arith.negf %1025 : vector<2x32xf32>
    %1027 = math.exp %1026 : vector<2x32xf32>
    %cst_162 = arith.constant 1.000000e+00 : f32
    %1028 = vector.broadcast %cst_162 : f32 to vector<2x32xf32>
    %1029 = arith.addf %1028, %1027 : vector<2x32xf32>
    %1030 = arith.divf %1028, %1029 : vector<2x32xf32>
    %1031 = vector.extract_strided_slice %1014 {offsets = [0, 64], sizes = [2, 32], strides = [1, 1]} : vector<2x96xf32> to vector<2x32xf32>
    %1032 = vector.extract_strided_slice %884 {offsets = [0, 64], sizes = [2, 32], strides = [1, 1]} : vector<2x96xf32> to vector<2x32xf32>
    %1033 = arith.mulf %1022, %1032 : vector<2x32xf32>
    %1034 = arith.addf %1031, %1033 : vector<2x32xf32>
    %1035 = math.tanh %1034 : vector<2x32xf32>
    %cst_163 = arith.constant 1.000000e+00 : f32
    %1036 = vector.broadcast %cst_163 : f32 to vector<2x32xf32>
    %1037 = arith.subf %1036, %1030 : vector<2x32xf32>
    %1038 = arith.mulf %1037, %1035 : vector<2x32xf32>
    %1039 = arith.mulf %1030, %881 : vector<2x32xf32>
    %1040 = arith.addf %1038, %1039 : vector<2x32xf32>
    %cst_164 = arith.constant dense<0.000000e+00> : vector<2x110xf32>
    %1041 = tpu.matmul %1040, %1, %cst_164 {dimension_numbers = #tpu.dot_dimension_numbers<[1], [0], [0], [1], [0, 0, 1, 1], [], []>} : vector<2x32xf32>, vector<32x110xf32>, vector<2x110xf32> -> vector<2x110xf32>
    %1042 = arith.addf %1041, %9 : vector<2x110xf32>
    %1043 = vector.extract_strided_slice %1042 {offsets = [0, 0], sizes = [2, 96], strides = [1, 1]} : vector<2x110xf32> to vector<2x96xf32>
    %1044 = vector.extract_strided_slice %1042 {offsets = [0, 96], sizes = [2, 14], strides = [1, 1]} : vector<2x110xf32> to vector<2x14xf32>
    %cst_165 = arith.constant dense<0xFF800000> : vector<2xf32>
    %1045 = vector.multi_reduction <maximumf>, %1044, %cst_165 [1] : vector<2x14xf32> to vector<2xf32>
    %1046 = vector.shape_cast %1045 : vector<2xf32> to vector<2x1xf32>
    %1047 = vector.broadcast %1046 : vector<2x1xf32> to vector<2x14xf32>
    %1048 = arith.cmpf oeq, %1044, %1047 : vector<2x14xf32>
    %c14_i32_166 = arith.constant 14 : i32
    %1049 = vector.broadcast %c14_i32_166 : i32 to vector<2x14xi32>
    %1050 = arith.select %1048, %2, %1049 : vector<2x14xi1>, vector<2x14xi32>
    %cst_167 = arith.constant dense<2147483647> : vector<2xi32>
    %1051 = vector.multi_reduction <minsi>, %1050, %cst_167 [1] : vector<2x14xi32> to vector<2xi32>
    %1052 = vector.shape_cast %1051 : vector<2xi32> to vector<2x1xi32>
    %1053 = vector.broadcast %1046 : vector<2x1xf32> to vector<2x14xf32>
    %1054 = arith.subf %1044, %1053 : vector<2x14xf32>
    %1055 = math.exp %1054 : vector<2x14xf32>
    %cst_168 = arith.constant dense<0.000000e+00> : vector<2xf32>
    %1056 = vector.multi_reduction <add>, %1055, %cst_168 [1] : vector<2x14xf32> to vector<2xf32>
    %1057 = vector.shape_cast %1056 : vector<2xf32> to vector<2x1xf32>
    %1058 = math.log %1057 : vector<2x1xf32>
    %1059 = vector.broadcast %1058 : vector<2x1xf32> to vector<2x14xf32>
    %1060 = arith.subf %1054, %1059 : vector<2x14xf32>
    %c0_169 = arith.constant 0 : index
    %c6 = arith.constant 6 : index
    %c0_170 = arith.constant 0 : index
    %1061 = vector.load %arg6[%c0_169, %c6, %c0_170] : memref<2x8x14xf32, #tpu.memory_space<vmem>>, vector<2x1x14xf32>
    %1062 = vector.shape_cast %1061 : vector<2x1x14xf32> to vector<2x14xf32>
    %1063 = vector.shape_cast %1060 : vector<2x14xf32> to vector<2x1x14xf32>
    tpu.vector_store %arg6[%c0_169, %c6, %c0_170], %1063 {strides = array<i32>} : memref<2x8x14xf32, #tpu.memory_space<vmem>>, vector<2x1x14xf32>,
    %c13_i32_171 = arith.constant 13 : i32
    %1064 = vector.broadcast %c13_i32_171 : i32 to vector<2x1xi32>
    %1065 = arith.cmpi eq, %1052, %1064 : vector<2x1xi32>
    %c2_i32_172 = arith.constant 2 : i32
    %1066 = vector.broadcast %c2_i32_172 : i32 to vector<2x1xi32>
    %1067 = arith.select %1065, %3, %1066 : vector<2x1xi1>, vector<2x1xi32>
    %cst_173 = arith.constant dense<2147483647> : vector<1xi32>
    %1068 = vector.multi_reduction <minsi>, %1067, %cst_173 [0] : vector<2x1xi32> to vector<1xi32>
    %1069 = vector.shape_cast %1068 : vector<1xi32> to vector<1x1xi32>
    %1070 = vector.broadcast %1069 : vector<1x1xi32> to vector<2x1xi32>
    %1071 = arith.cmpi slt, %3, %1070 : vector<2x1xi32>
    %1072 = arith.extui %1071 : vector<2x1xi1> to vector<2x1xi32>
    %1073 = arith.sitofp %1072 : vector<2x1xi32> to vector<2x1xf32>
    %c0_i32_174 = arith.constant 0 : i32
    %1074 = vector.broadcast %c0_i32_174 : i32 to vector<2x1xi32>
    %1075 = arith.cmpi eq, %1052, %1074 : vector<2x1xi32>
    %1076 = arith.extui %1075 : vector<2x1xi1> to vector<2x1xi32>
    %1077 = arith.sitofp %1076 : vector<2x1xi32> to vector<2x1xf32>
    %1078 = vector.broadcast %1077 : vector<2x1xf32> to vector<2x96xf32>
    %1079 = arith.mulf %1078, %12 : vector<2x96xf32>
    %c1_i32_175 = arith.constant 1 : i32
    %1080 = vector.broadcast %c1_i32_175 : i32 to vector<2x1xi32>
    %1081 = arith.cmpi eq, %1052, %1080 : vector<2x1xi32>
    %1082 = arith.extui %1081 : vector<2x1xi1> to vector<2x1xi32>
    %1083 = arith.sitofp %1082 : vector<2x1xi32> to vector<2x1xf32>
    %1084 = vector.broadcast %1083 : vector<2x1xf32> to vector<2x96xf32>
    %1085 = arith.mulf %1084, %15 : vector<2x96xf32>
    %c2_i32_176 = arith.constant 2 : i32
    %1086 = vector.broadcast %c2_i32_176 : i32 to vector<2x1xi32>
    %1087 = arith.cmpi eq, %1052, %1086 : vector<2x1xi32>
    %1088 = arith.extui %1087 : vector<2x1xi1> to vector<2x1xi32>
    %1089 = arith.sitofp %1088 : vector<2x1xi32> to vector<2x1xf32>
    %1090 = vector.broadcast %1089 : vector<2x1xf32> to vector<2x96xf32>
    %1091 = arith.mulf %1090, %18 : vector<2x96xf32>
    %c3_i32_177 = arith.constant 3 : i32
    %1092 = vector.broadcast %c3_i32_177 : i32 to vector<2x1xi32>
    %1093 = arith.cmpi eq, %1052, %1092 : vector<2x1xi32>
    %1094 = arith.extui %1093 : vector<2x1xi1> to vector<2x1xi32>
    %1095 = arith.sitofp %1094 : vector<2x1xi32> to vector<2x1xf32>
    %1096 = vector.broadcast %1095 : vector<2x1xf32> to vector<2x96xf32>
    %1097 = arith.mulf %1096, %21 : vector<2x96xf32>
    %c4_i32_178 = arith.constant 4 : i32
    %1098 = vector.broadcast %c4_i32_178 : i32 to vector<2x1xi32>
    %1099 = arith.cmpi eq, %1052, %1098 : vector<2x1xi32>
    %1100 = arith.extui %1099 : vector<2x1xi1> to vector<2x1xi32>
    %1101 = arith.sitofp %1100 : vector<2x1xi32> to vector<2x1xf32>
    %1102 = vector.broadcast %1101 : vector<2x1xf32> to vector<2x96xf32>
    %1103 = arith.mulf %1102, %24 : vector<2x96xf32>
    %c5_i32_179 = arith.constant 5 : i32
    %1104 = vector.broadcast %c5_i32_179 : i32 to vector<2x1xi32>
    %1105 = arith.cmpi eq, %1052, %1104 : vector<2x1xi32>
    %1106 = arith.extui %1105 : vector<2x1xi1> to vector<2x1xi32>
    %1107 = arith.sitofp %1106 : vector<2x1xi32> to vector<2x1xf32>
    %1108 = vector.broadcast %1107 : vector<2x1xf32> to vector<2x96xf32>
    %1109 = arith.mulf %1108, %27 : vector<2x96xf32>
    %c6_i32_180 = arith.constant 6 : i32
    %1110 = vector.broadcast %c6_i32_180 : i32 to vector<2x1xi32>
    %1111 = arith.cmpi eq, %1052, %1110 : vector<2x1xi32>
    %1112 = arith.extui %1111 : vector<2x1xi1> to vector<2x1xi32>
    %1113 = arith.sitofp %1112 : vector<2x1xi32> to vector<2x1xf32>
    %1114 = vector.broadcast %1113 : vector<2x1xf32> to vector<2x96xf32>
    %1115 = arith.mulf %1114, %30 : vector<2x96xf32>
    %c7_i32_181 = arith.constant 7 : i32
    %1116 = vector.broadcast %c7_i32_181 : i32 to vector<2x1xi32>
    %1117 = arith.cmpi eq, %1052, %1116 : vector<2x1xi32>
    %1118 = arith.extui %1117 : vector<2x1xi1> to vector<2x1xi32>
    %1119 = arith.sitofp %1118 : vector<2x1xi32> to vector<2x1xf32>
    %1120 = vector.broadcast %1119 : vector<2x1xf32> to vector<2x96xf32>
    %1121 = arith.mulf %1120, %33 : vector<2x96xf32>
    %c8_i32_182 = arith.constant 8 : i32
    %1122 = vector.broadcast %c8_i32_182 : i32 to vector<2x1xi32>
    %1123 = arith.cmpi eq, %1052, %1122 : vector<2x1xi32>
    %1124 = arith.extui %1123 : vector<2x1xi1> to vector<2x1xi32>
    %1125 = arith.sitofp %1124 : vector<2x1xi32> to vector<2x1xf32>
    %1126 = vector.broadcast %1125 : vector<2x1xf32> to vector<2x96xf32>
    %1127 = arith.mulf %1126, %36 : vector<2x96xf32>
    %c9_i32_183 = arith.constant 9 : i32
    %1128 = vector.broadcast %c9_i32_183 : i32 to vector<2x1xi32>
    %1129 = arith.cmpi eq, %1052, %1128 : vector<2x1xi32>
    %1130 = arith.extui %1129 : vector<2x1xi1> to vector<2x1xi32>
    %1131 = arith.sitofp %1130 : vector<2x1xi32> to vector<2x1xf32>
    %1132 = vector.broadcast %1131 : vector<2x1xf32> to vector<2x96xf32>
    %1133 = arith.mulf %1132, %39 : vector<2x96xf32>
    %c10_i32_184 = arith.constant 10 : i32
    %1134 = vector.broadcast %c10_i32_184 : i32 to vector<2x1xi32>
    %1135 = arith.cmpi eq, %1052, %1134 : vector<2x1xi32>
    %1136 = arith.extui %1135 : vector<2x1xi1> to vector<2x1xi32>
    %1137 = arith.sitofp %1136 : vector<2x1xi32> to vector<2x1xf32>
    %1138 = vector.broadcast %1137 : vector<2x1xf32> to vector<2x96xf32>
    %1139 = arith.mulf %1138, %42 : vector<2x96xf32>
    %c11_i32_185 = arith.constant 11 : i32
    %1140 = vector.broadcast %c11_i32_185 : i32 to vector<2x1xi32>
    %1141 = arith.cmpi eq, %1052, %1140 : vector<2x1xi32>
    %1142 = arith.extui %1141 : vector<2x1xi1> to vector<2x1xi32>
    %1143 = arith.sitofp %1142 : vector<2x1xi32> to vector<2x1xf32>
    %1144 = vector.broadcast %1143 : vector<2x1xf32> to vector<2x96xf32>
    %1145 = arith.mulf %1144, %45 : vector<2x96xf32>
    %c12_i32_186 = arith.constant 12 : i32
    %1146 = vector.broadcast %c12_i32_186 : i32 to vector<2x1xi32>
    %1147 = arith.cmpi eq, %1052, %1146 : vector<2x1xi32>
    %1148 = arith.extui %1147 : vector<2x1xi1> to vector<2x1xi32>
    %1149 = arith.sitofp %1148 : vector<2x1xi32> to vector<2x1xf32>
    %1150 = vector.broadcast %1149 : vector<2x1xf32> to vector<2x96xf32>
    %1151 = arith.mulf %1150, %48 : vector<2x96xf32>
    %c13_i32_187 = arith.constant 13 : i32
    %1152 = vector.broadcast %c13_i32_187 : i32 to vector<2x1xi32>
    %1153 = arith.cmpi eq, %1052, %1152 : vector<2x1xi32>
    %1154 = arith.extui %1153 : vector<2x1xi1> to vector<2x1xi32>
    %1155 = arith.sitofp %1154 : vector<2x1xi32> to vector<2x1xf32>
    %1156 = vector.broadcast %1155 : vector<2x1xf32> to vector<2x96xf32>
    %1157 = arith.mulf %1156, %51 : vector<2x96xf32>
    %1158 = arith.addf %1079, %1085 : vector<2x96xf32>
    %1159 = arith.addf %1091, %1097 : vector<2x96xf32>
    %1160 = arith.addf %1103, %1109 : vector<2x96xf32>
    %1161 = arith.addf %1115, %1121 : vector<2x96xf32>
    %1162 = arith.addf %1127, %1133 : vector<2x96xf32>
    %1163 = arith.addf %1139, %1145 : vector<2x96xf32>
    %1164 = arith.addf %1151, %1157 : vector<2x96xf32>
    %1165 = arith.addf %1158, %1159 : vector<2x96xf32>
    %1166 = arith.addf %1160, %1161 : vector<2x96xf32>
    %1167 = arith.addf %1162, %1163 : vector<2x96xf32>
    %1168 = arith.addf %1165, %1166 : vector<2x96xf32>
    %1169 = arith.addf %1167, %1164 : vector<2x96xf32>
    %1170 = arith.addf %1168, %1169 : vector<2x96xf32>
    %1171 = vector.broadcast %1073 : vector<2x1xf32> to vector<2x96xf32>
    %1172 = arith.mulf %1171, %1170 : vector<2x96xf32>
    %1173 = arith.addf %1172, %6 : vector<2x96xf32>
    %1174 = vector.extract_strided_slice %1173 {offsets = [0, 0], sizes = [2, 32], strides = [1, 1]} : vector<2x96xf32> to vector<2x32xf32>
    %1175 = vector.extract_strided_slice %1043 {offsets = [0, 0], sizes = [2, 32], strides = [1, 1]} : vector<2x96xf32> to vector<2x32xf32>
    %1176 = arith.addf %1174, %1175 : vector<2x32xf32>
    %1177 = arith.negf %1176 : vector<2x32xf32>
    %1178 = math.exp %1177 : vector<2x32xf32>
    %cst_188 = arith.constant 1.000000e+00 : f32
    %1179 = vector.broadcast %cst_188 : f32 to vector<2x32xf32>
    %1180 = arith.addf %1179, %1178 : vector<2x32xf32>
    %1181 = arith.divf %1179, %1180 : vector<2x32xf32>
    %1182 = vector.extract_strided_slice %1173 {offsets = [0, 32], sizes = [2, 32], strides = [1, 1]} : vector<2x96xf32> to vector<2x32xf32>
    %1183 = vector.extract_strided_slice %1043 {offsets = [0, 32], sizes = [2, 32], strides = [1, 1]} : vector<2x96xf32> to vector<2x32xf32>
    %1184 = arith.addf %1182, %1183 : vector<2x32xf32>
    %1185 = arith.negf %1184 : vector<2x32xf32>
    %1186 = math.exp %1185 : vector<2x32xf32>
    %cst_189 = arith.constant 1.000000e+00 : f32
    %1187 = vector.broadcast %cst_189 : f32 to vector<2x32xf32>
    %1188 = arith.addf %1187, %1186 : vector<2x32xf32>
    %1189 = arith.divf %1187, %1188 : vector<2x32xf32>
    %1190 = vector.extract_strided_slice %1173 {offsets = [0, 64], sizes = [2, 32], strides = [1, 1]} : vector<2x96xf32> to vector<2x32xf32>
    %1191 = vector.extract_strided_slice %1043 {offsets = [0, 64], sizes = [2, 32], strides = [1, 1]} : vector<2x96xf32> to vector<2x32xf32>
    %1192 = arith.mulf %1181, %1191 : vector<2x32xf32>
    %1193 = arith.addf %1190, %1192 : vector<2x32xf32>
    %1194 = math.tanh %1193 : vector<2x32xf32>
    %cst_190 = arith.constant 1.000000e+00 : f32
    %1195 = vector.broadcast %cst_190 : f32 to vector<2x32xf32>
    %1196 = arith.subf %1195, %1189 : vector<2x32xf32>
    %1197 = arith.mulf %1196, %1194 : vector<2x32xf32>
    %1198 = arith.mulf %1189, %1040 : vector<2x32xf32>
    %1199 = arith.addf %1197, %1198 : vector<2x32xf32>
    %cst_191 = arith.constant dense<0.000000e+00> : vector<2x110xf32>
    %1200 = tpu.matmul %1199, %1, %cst_191 {dimension_numbers = #tpu.dot_dimension_numbers<[1], [0], [0], [1], [0, 0, 1, 1], [], []>} : vector<2x32xf32>, vector<32x110xf32>, vector<2x110xf32> -> vector<2x110xf32>
    %1201 = arith.addf %1200, %9 : vector<2x110xf32>
    %1202 = vector.extract_strided_slice %1201 {offsets = [0, 96], sizes = [2, 14], strides = [1, 1]} : vector<2x110xf32> to vector<2x14xf32>
    %cst_192 = arith.constant dense<0xFF800000> : vector<2xf32>
    %1203 = vector.multi_reduction <maximumf>, %1202, %cst_192 [1] : vector<2x14xf32> to vector<2xf32>
    %1204 = vector.shape_cast %1203 : vector<2xf32> to vector<2x1xf32>
    %1205 = vector.broadcast %1204 : vector<2x1xf32> to vector<2x14xf32>
    %1206 = arith.subf %1202, %1205 : vector<2x14xf32>
    %1207 = math.exp %1206 : vector<2x14xf32>
    %cst_193 = arith.constant dense<0.000000e+00> : vector<2xf32>
    %1208 = vector.multi_reduction <add>, %1207, %cst_193 [1] : vector<2x14xf32> to vector<2xf32>
    %1209 = vector.shape_cast %1208 : vector<2xf32> to vector<2x1xf32>
    %1210 = math.log %1209 : vector<2x1xf32>
    %1211 = vector.broadcast %1210 : vector<2x1xf32> to vector<2x14xf32>
    %1212 = arith.subf %1206, %1211 : vector<2x14xf32>
    %c0_194 = arith.constant 0 : index
    %c7 = arith.constant 7 : index
    %c0_195 = arith.constant 0 : index
    %1213 = vector.load %arg6[%c0_194, %c7, %c0_195] : memref<2x8x14xf32, #tpu.memory_space<vmem>>, vector<2x1x14xf32>
    %1214 = vector.shape_cast %1213 : vector<2x1x14xf32> to vector<2x14xf32>
    %1215 = vector.shape_cast %1212 : vector<2x14xf32> to vector<2x1x14xf32>
    tpu.vector_store %arg6[%c0_194, %c7, %c0_195], %1215 {strides = array<i32>} : memref<2x8x14xf32, #tpu.memory_space<vmem>>, vector<2x1x14xf32>,
    %c0_196 = arith.constant 0 : index
    %c0_197 = arith.constant 0 : index
    %c0_198 = arith.constant 0 : index
    %1216 = vector.load %arg7[%c0_196, %c0_197, %c0_198] : memref<1x2x32xf32, #tpu.memory_space<vmem>>, vector<1x2x32xf32>
    %1217 = vector.shape_cast %1216 : vector<1x2x32xf32> to vector<2x32xf32>
    %1218 = vector.shape_cast %1199 : vector<2x32xf32> to vector<1x2x32xf32>
    tpu.vector_store %arg7[%c0_196, %c0_197, %c0_198], %1218 {strides = array<i32>} : memref<1x2x32xf32, #tpu.memory_space<vmem>>, vector<1x2x32xf32>,
    return
  }
}

</mosaic_0001>

<llo_original>
// kernel: tpu_custom_call.1
$region0: #{tpu_custom_call.1}
  #allocation0 [shape = 'u32[]', space=smem, size = 0x4, offset = 0x4, fixed_abs, tag = 'smem constant byte address 0x4 - core index']
  #allocation1 [shape = 'u32[144,128]{1,0:T(1,128)}', space=vmem, size = 0x12000, scoped, tag = 'internal scratch']
  %s0 = inlined_call_operand.hbm [shape: f32[2,14], index: 0, kind: input, shape index: {}]
  %s1 = inlined_call_operand.vmem [shape: f32[2,32], index: 1, kind: input, shape index: {}]
  %s2 = inlined_call_operand.hbm [shape: f32[14,96], index: 2, kind: input, shape index: {}]
  %s3 = inlined_call_operand.vmem [shape: f32[1,96], index: 3, kind: input, shape index: {}]
  %s4 = inlined_call_operand.hbm [shape: f32[32,110], index: 4, kind: input, shape index: {}]
  %s5 = inlined_call_operand.vmem [shape: f32[1,110], index: 5, kind: input, shape index: {}]
  %s6 = inlined_call_operand.hbm [shape: f32[2,8,14], index: 6, kind: output, shape index: {0}]
  %s7 = inlined_call_operand.hbm [shape: f32[1,2,32], index: 7, kind: output, shape index: {1}]
  %8 = xla_tuple %s6, %s7
  %s9 = sld [smem:[#allocation0]]
  $region54: #{tpu_custom_call.1} parent=0
    _
  %s11 = ssub.s32 1, %s9
  %s12 = scalar_select 0, %s11, %s9
  $region1: #{tpu_custom_call.1} parent=0
    #allocation2 [shape = 'u8[1024]{0}', space=vmem, size = 0x400, scoped, tag = 'input window, operand 0, single buffered']
    #allocation3 [shape = 's32[1]{0}', space=sflag, size = 0x4, scoped, tag = 'scoped memory for tpu_custom_call.1']
    #allocation4 [shape = 's32[1]{0}', space=sflag, size = 0x4, scoped, tag = 'scoped memory for tpu_custom_call.1']
    #allocation5 [shape = 'u8[8192]{0}', space=vmem, size = 0x2000, scoped, tag = 'input window, operand 2, single buffered']
    #allocation6 [shape = 's32[1]{0}', space=sflag, size = 0x4, scoped, tag = 'scoped memory for tpu_custom_call.1']
    #allocation7 [shape = 'u8[16384]{0}', space=vmem, size = 0x4000, scoped, tag = 'input window, operand 4, single buffered']
    #allocation8 [shape = 'u8[8192]{0}', space=vmem, size = 0x2000, scoped, tag = 'output window, operand 0, single buffered']
    #allocation9 [shape = 'u8[1024]{0}', space=vmem, size = 0x400, scoped, tag = 'output window, operand 1, single buffered']
    #allocation10 [shape = 's32[1]{0}', space=sflag, size = 0x4, scoped, tag = 'scoped memory for tpu_custom_call.1']
    %13 = vsyncpa [#allocation3], 0
    %14 = vsyncpa [#allocation6], 0
    %15 = vsyncpa [#allocation4], 0
    %16 = vsyncpa [#allocation10], 0
    // Predicated region
    $region2: #{tpu_custom_call.1} parent=1 // pred_check
      _
    $region3: #{tpu_custom_call.1} parent=1 // pred_check_branch
      %18 = sbr.rel (0) target = $region5
    $region4: #{tpu_custom_call.1} parent=1 // pred_region
      %s20 = ssub.s32 32, 32
      %21 = vsyncadd [#allocation3], %s20
      %s23 = sshll.u32 [#allocation2], 4
      %s24 = int_to_ptr.vmem [resolvable:$true] %s23
      %26 = dma.hbm_to_vmem [thread:$0]  %s0, 32, %s24, [#allocation3]
    $region5: #{tpu_custom_call.1} parent=1 // pred_fallthru
      _
    // Predicated region
    $region6: #{tpu_custom_call.1} parent=1 // pred_check
      _
    $region7: #{tpu_custom_call.1} parent=1 // pred_check_branch
      %28 = sbr.rel (0) target = $region9
    $region8: #{tpu_custom_call.1} parent=1 // pred_region
      _
    $region9: #{tpu_custom_call.1} parent=1 // pred_fallthru
      _
    // Predicated region
    $region10: #{tpu_custom_call.1} parent=1 // pred_check
      _
    $region11: #{tpu_custom_call.1} parent=1 // pred_check_branch
      %30 = sbr.rel (0) target = $region13
    $region12: #{tpu_custom_call.1} parent=1 // pred_region
      %s32 = ssub.s32 256, 256
      %33 = vsyncadd [#allocation6], %s32
      %s34 = sshll.u32 [#allocation5], 4
      %s35 = int_to_ptr.vmem [resolvable:$true] %s34
      %40 = dma.hbm_to_vmem [thread:$0]  %s2, 256, %s35, [#allocation6], 128, 128, 8
    $region13: #{tpu_custom_call.1} parent=1 // pred_fallthru
      _
    // Predicated region
    $region14: #{tpu_custom_call.1} parent=1 // pred_check
      _
    $region15: #{tpu_custom_call.1} parent=1 // pred_check_branch
      %42 = sbr.rel (0) target = $region17
    $region16: #{tpu_custom_call.1} parent=1 // pred_region
      _
    $region17: #{tpu_custom_call.1} parent=1 // pred_fallthru
      _
    // Predicated region
    $region18: #{tpu_custom_call.1} parent=1 // pred_check
      _
    $region19: #{tpu_custom_call.1} parent=1 // pred_check_branch
      %44 = sbr.rel (0) target = $region21
    $region20: #{tpu_custom_call.1} parent=1 // pred_region
      %s46 = ssub.s32 512, 512
      %47 = vsyncadd [#allocation6], %s46
      %s48 = sshll.u32 [#allocation7], 4
      %s49 = int_to_ptr.vmem [resolvable:$true] %s48
      %54 = dma.hbm_to_vmem [thread:$0]  %s4, 512, %s49, [#allocation6], 128, 128, 8
    $region21: #{tpu_custom_call.1} parent=1 // pred_fallthru
      _
    // Predicated region
    $region22: #{tpu_custom_call.1} parent=1 // pred_check
      _
    $region23: #{tpu_custom_call.1} parent=1 // pred_check_branch
      %56 = sbr.rel (0) target = $region25
    $region24: #{tpu_custom_call.1} parent=1 // pred_region
      _
    $region25: #{tpu_custom_call.1} parent=1 // pred_fallthru
      _
    // Predicated region
    $region26: #{tpu_custom_call.1} parent=1 // pred_check
      _
    $region27: #{tpu_custom_call.1} parent=1 // pred_check_branch
      %58 = sbr.rel (0) target = $region29
    $region28: #{tpu_custom_call.1} parent=1 // pred_region
      %59 = dma.done [#allocation3], 32
    $region29: #{tpu_custom_call.1} parent=1 // pred_fallthru
      _
    // Predicated region
    $region30: #{tpu_custom_call.1} parent=1 // pred_check
      _
    $region31: #{tpu_custom_call.1} parent=1 // pred_check_branch
      %61 = sbr.rel (0) target = $region33
    $region32: #{tpu_custom_call.1} parent=1 // pred_region
      %62 = dma.done [#allocation6], 256
    $region33: #{tpu_custom_call.1} parent=1 // pred_fallthru
      _
    // Predicated region
    $region34: #{tpu_custom_call.1} parent=1 // pred_check
      _
    $region35: #{tpu_custom_call.1} parent=1 // pred_check_branch
      %64 = sbr.rel (0) target = $region37
    $region36: #{tpu_custom_call.1} parent=1 // pred_region
      %65 = dma.done [#allocation6], 512
    $region37: #{tpu_custom_call.1} parent=1 // pred_fallthru
      _
    %v66 = vld [vmem:[#allocation5] sm:$0xff]
    %v67 = vld [vmem:[#allocation5 + $0x8] sm:$0x3f]
    %v68 = vld [vmem:[#allocation7] sm:$0xff]
    %v69 = vld [vmem:[#allocation7 + $0x8] sm:$0xff]
    %v70 = vld [vmem:[#allocation7 + $0x10] sm:$0xff]
    %v71 = vld [vmem:[#allocation7 + $0x18] sm:$0xff]
    %v72 = vlaneseq
    %v73 = vand.u32 %v72, 127
    %v74 = vlaneseq
    %v75 = vshrl.u32 %v74, 7
    %v76 = vld [vmem:[%s3] sm:$0x1]
    %v78 = vlaneseq
    %v79 = vshrl.u32 %v78, 7
    %v80 = vsub.s32 0, %v79
    %v81 = vrot.slane %v76, %v80
    %v83 = vld [vmem:[%s5] sm:$0x1]
    %v85 = vlaneseq
    %v86 = vshrl.u32 %v85, 7
    %v87 = vsub.s32 0, %v86
    %v88 = vrot.slane %v83, %v87
    %v90 = vlaneseq
    %v91 = vshrl.u32 %v90, 7
    %v92 = vsub.s32 0, %v91
    %v93 = vrot.slane %v66, %v92
    %v94 = vlaneseq
    %v95 = vshrl.u32 %v94, 7
    %v96 = vsub.s32 1, %v95
    %v97 = vrot.slane %v66, %v96
    %v98 = vlaneseq
    %v99 = vshrl.u32 %v98, 7
    %v100 = vsub.s32 2, %v99
    %v101 = vrot.slane %v66, %v100
    %v102 = vlaneseq
    %v103 = vshrl.u32 %v102, 7
    %v104 = vsub.s32 3, %v103
    %v105 = vrot.slane %v66, %v104
    %v106 = vlaneseq
    %v107 = vshrl.u32 %v106, 7
    %v108 = vsub.s32 4, %v107
    %v109 = vrot.slane %v66, %v108
    %v110 = vlaneseq
    %v111 = vshrl.u32 %v110, 7
    %v112 = vsub.s32 5, %v111
    %v113 = vrot.slane %v66, %v112
    %v114 = vlaneseq
    %v115 = vshrl.u32 %v114, 7
    %v116 = vsub.s32 6, %v115
    %v117 = vrot.slane %v66, %v116
    %v118 = vlaneseq
    %v119 = vshrl.u32 %v118, 7
    %v120 = vsub.s32 7, %v119
    %v121 = vrot.slane %v66, %v120
    %v122 = vlaneseq
    %v123 = vshrl.u32 %v122, 7
    %v124 = vsub.s32 0, %v123
    %v125 = vrot.slane %v67, %v124
    %v126 = vlaneseq
    %v127 = vshrl.u32 %v126, 7
    %v128 = vsub.s32 1, %v127
    %v129 = vrot.slane %v67, %v128
    %v130 = vlaneseq
    %v131 = vshrl.u32 %v130, 7
    %v132 = vsub.s32 2, %v131
    %v133 = vrot.slane %v67, %v132
    %v134 = vlaneseq
    %v135 = vshrl.u32 %v134, 7
    %v136 = vsub.s32 3, %v135
    %v137 = vrot.slane %v67, %v136
    %v138 = vlaneseq
    %v139 = vshrl.u32 %v138, 7
    %v140 = vsub.s32 4, %v139
    %v141 = vrot.slane %v67, %v140
    %v142 = vlaneseq
    %v143 = vshrl.u32 %v142, 7
    %v144 = vsub.s32 5, %v143
    %v145 = vrot.slane %v67, %v144
    %v146 = vld [vmem:[%s1] sm:$0x3]
    %v147 = vld [vmem:[#allocation2] sm:$0x3]
    %v148 = vmax.f32 %v147, 0.0
    %vm149 = vcmask 113664
    %v151 = vsel %vm149, %v148, 0
    %vm153 = vcmask 1045504
    %v155 = vsel %vm153, %v67, 0
    %157 = vmatprep.subr.mxu0 0.0
    %158 = vmatpush1.msra.mxu0 %v66
    %159 = vmatprep.subr.mxu0 0.0
    %160 = vmatpush1.msra.mxu0 %v155
    %161 = vmatprep.subr.mxu0 0.0
    %162 = vmatpush1.msra.mxu0 0.0
    %163 = vmatprep.subr.mxu0 0.0
    %164 = vmatpush1.msra.mxu0 0.0
    %165 = vmatprep.subr.mxu0 0.0
    %166 = vmatpush1.msra.mxu0 0.0
    %167 = vmatprep.subr.mxu0 0.0
    %168 = vmatpush1.msra.mxu0 0.0
    %169 = vmatprep.subr.mxu0 0.0
    %170 = vmatpush1.msra.mxu0 0.0
    %171 = vmatprep.subr.mxu0 0.0
    %172 = vmatpush1.msra.mxu0 0.0
    %173 = vmatprep.subr.mxu0 0.0
    %174 = vmatpush1.msra.mxu0 0.0
    %175 = vmatprep.subr.mxu0 0.0
    %176 = vmatpush1.msra.mxu0 0.0
    %177 = vmatprep.subr.mxu0 0.0
    %178 = vmatpush1.msra.mxu0 0.0
    %179 = vmatprep.subr.mxu0 0.0
    %180 = vmatpush1.msra.mxu0 0.0
    %181 = vmatprep.subr.mxu0 0.0
    %182 = vmatpush1.msra.mxu0 0.0
    %183 = vmatprep.subr.mxu0 0.0
    %184 = vmatpush1.msra.mxu0 0.0
    %185 = vmatprep.subr.mxu0 0.0
    %186 = vmatpush1.msra.mxu0 0.0
    %187 = vmatprep.subr.mxu0 0.0
    %188 = vmatpush1.msra.mxu0 0.0
    %189 = vmatprep.subr.mxu0 0.0
    %190 = vmatpush1.msra.mxu0 0.0
    %191 = vmatprep.subr.mxu0 0.0
    %192 = vmatpush1.msra.mxu0 0.0
    %193 = vmatprep.subr.mxu0 0.0
    %194 = vmatpush1.msra.mxu0 0.0
    %195 = vmatprep.subr.mxu0 0.0
    %196 = vmatpush1.msra.mxu0 0.0
    %197 = vmatprep.subr.mxu0 0.0
    %198 = vmatpush1.msra.mxu0 0.0
    %199 = vmatprep.subr.mxu0 0.0
    %200 = vmatpush1.msra.mxu0 0.0
    %201 = vmatprep.subr.mxu0 0.0
    %202 = vmatpush1.msra.mxu0 0.0
    %203 = vmatprep.subr.mxu0 0.0
    %204 = vmatpush1.msra.mxu0 0.0
    %205 = vmatprep.subr.mxu0 0.0
    %206 = vmatpush1.msra.mxu0 0.0
    %207 = vmatprep.subr.mxu0 0.0
    %208 = vmatpush1.msra.mxu0 0.0
    %209 = vmatprep.subr.mxu0 0.0
    %210 = vmatpush1.msra.mxu0 0.0
    %211 = vmatprep.subr.mxu0 0.0
    %212 = vmatpush1.msra.mxu0 0.0
    %213 = vmatprep.subr.mxu0 0.0
    %214 = vmatpush1.msra.mxu0 0.0
    %215 = vmatprep.subr.mxu0 0.0
    %216 = vmatpush1.msra.mxu0 0.0
    %217 = vmatprep.subr.mxu0 0.0
    %218 = vmatpush1.msra.mxu0 0.0
    %219 = vmatprep.subr.mxu0 0.0
    %220 = vmatpush1.msra.mxu0 0.0
    %221 = vmatprep.mubr.f32.mxu0 0.0
    %222 = vmatmul.mubr.f32.gmra.mrb[0].mxu0 %v151
    %v223 = vpop.f32.mrb[0].mxu0
    %v224 = vadd.f32 %v81, %v223
    %v225 = vpop.f32.mrb[0].mxu0
    %226 = vdwg.mxu0
    %vm227 = vcmask 261120
    %v229 = vsel %vm227, %v146, 0
    %231 = vmatprep.subr.mxu0 0.0
    %232 = vmatpush1.msra.mxu0 %v68
    %233 = vmatprep.subr.mxu0 0.0
    %234 = vmatpush1.msra.mxu0 %v69
    %235 = vmatprep.subr.mxu0 0.0
    %236 = vmatpush1.msra.mxu0 %v70
    %237 = vmatprep.subr.mxu0 0.0
    %238 = vmatpush1.msra.mxu0 %v71
    %239 = vmatprep.subr.mxu0 0.0
    %240 = vmatpush1.msra.mxu0 0.0
    %241 = vmatprep.subr.mxu0 0.0
    %242 = vmatpush1.msra.mxu0 0.0
    %243 = vmatprep.subr.mxu0 0.0
    %244 = vmatpush1.msra.mxu0 0.0
    %245 = vmatprep.subr.mxu0 0.0
    %246 = vmatpush1.msra.mxu0 0.0
    %247 = vmatprep.subr.mxu0 0.0
    %248 = vmatpush1.msra.mxu0 0.0
    %249 = vmatprep.subr.mxu0 0.0
    %250 = vmatpush1.msra.mxu0 0.0
    %251 = vmatprep.subr.mxu0 0.0
    %252 = vmatpush1.msra.mxu0 0.0
    %253 = vmatprep.subr.mxu0 0.0
    %254 = vmatpush1.msra.mxu0 0.0
    %255 = vmatprep.subr.mxu0 0.0
    %256 = vmatpush1.msra.mxu0 0.0
    %257 = vmatprep.subr.mxu0 0.0
    %258 = vmatpush1.msra.mxu0 0.0
    %259 = vmatprep.subr.mxu0 0.0
    %260 = vmatpush1.msra.mxu0 0.0
    %261 = vmatprep.subr.mxu0 0.0
    %262 = vmatpush1.msra.mxu0 0.0
    %263 = vmatprep.subr.mxu0 0.0
    %264 = vmatpush1.msra.mxu0 0.0
    %265 = vmatprep.subr.mxu0 0.0
    %266 = vmatpush1.msra.mxu0 0.0
    %267 = vmatprep.subr.mxu0 0.0
    %268 = vmatpush1.msra.mxu0 0.0
    %269 = vmatprep.subr.mxu0 0.0
    %270 = vmatpush1.msra.mxu0 0.0
    %271 = vmatprep.subr.mxu0 0.0
    %272 = vmatpush1.msra.mxu0 0.0
    %273 = vmatprep.subr.mxu0 0.0
    %274 = vmatpush1.msra.mxu0 0.0
    %275 = vmatprep.subr.mxu0 0.0
    %276 = vmatpush1.msra.mxu0 0.0
    %277 = vmatprep.subr.mxu0 0.0
    %278 = vmatpush1.msra.mxu0 0.0
    %279 = vmatprep.subr.mxu0 0.0
    %280 = vmatpush1.msra.mxu0 0.0
    %281 = vmatprep.subr.mxu0 0.0
    %282 = vmatpush1.msra.mxu0 0.0
    %283 = vmatprep.subr.mxu0 0.0
    %284 = vmatpush1.msra.mxu0 0.0
    %285 = vmatprep.subr.mxu0 0.0
    %286 = vmatpush1.msra.mxu0 0.0
    %287 = vmatprep.subr.mxu0 0.0
    %288 = vmatpush1.msra.mxu0 0.0
    %289 = vmatprep.subr.mxu0 0.0
    %290 = vmatpush1.msra.mxu0 0.0
    %291 = vmatprep.subr.mxu0 0.0
    %292 = vmatpush1.msra.mxu0 0.0
    %293 = vmatprep.subr.mxu0 0.0
    %294 = vmatpush1.msra.mxu0 0.0
    %295 = vmatprep.mubr.f32.mxu0 0.0
    %296 = vmatmul.mubr.f32.gmra.mrb[0].mxu0 %v229
    %v297 = vpop.f32.mrb[0].mxu0
    %v298 = vadd.f32 %v88, %v297
    %v299 = vpop.f32.mrb[0].mxu0
    %300 = vdwg.mxu0
    %v301 = vadd.f32 %v224, %v298
    %v302 = vxor.u32 %v301, 2147483648
    %v303 = vmul.f32 %v302, 1.442695
    %v304 = vpow.pop %v303
    %v305 = vadd.f32 %v304, 1.0
    %v306 = vrcp.pop %v305
    %v307 = vmul.f32 1.0, %v306
    %309 = vrot.lane.b32.xlu0 %v298, 64
    %v310 = vpop.permute.xlu0 %309
    %v312 = vmul.f32 %v307, %v310
    %314 = vrot.lane.b32.xlu0 %v312, 64
    %v315 = vpop.permute.xlu0 %314
    %v317 = vadd.f32 %v224, %v315
    %v318 = vtanh.pop %v317
    %v319 = vsub.f32 1.0, %v307
    %321 = vrot.lane.b32.xlu0 %v318, 96
    %v322 = vpop.permute.xlu0 %321
    %v324 = vmul.f32 %v319, %v322
    %325 = vrot.lane.b32.xlu0 %v146, 32
    %v326 = vpop.permute.xlu0 %325
    %v328 = vmul.f32 %v307, %v326
    %v329 = vadd.f32 %v324, %v328
    %331 = vrot.lane.b32.xlu0 %v329, 96
    %v332 = vpop.permute.xlu0 %331
    %v333 = vsel %vm227, %v332, 0
    %335 = vmatprep.subr.mxu0 0.0
    %336 = vmatpush1.msra.mxu0 %v68
    %337 = vmatprep.subr.mxu0 0.0
    %338 = vmatpush1.msra.mxu0 %v69
    %339 = vmatprep.subr.mxu0 0.0
    %340 = vmatpush1.msra.mxu0 %v70
    %341 = vmatprep.subr.mxu0 0.0
    %342 = vmatpush1.msra.mxu0 %v71
    %343 = vmatprep.subr.mxu0 0.0
    %344 = vmatpush1.msra.mxu0 0.0
    %345 = vmatprep.subr.mxu0 0.0
    %346 = vmatpush1.msra.mxu0 0.0
    %347 = vmatprep.subr.mxu0 0.0
    %348 = vmatpush1.msra.mxu0 0.0
    %349 = vmatprep.subr.mxu0 0.0
    %350 = vmatpush1.msra.mxu0 0.0
    %351 = vmatprep.subr.mxu0 0.0
    %352 = vmatpush1.msra.mxu0 0.0
    %353 = vmatprep.subr.mxu0 0.0
    %354 = vmatpush1.msra.mxu0 0.0
    %355 = vmatprep.subr.mxu0 0.0
    %356 = vmatpush1.msra.mxu0 0.0
    %357 = vmatprep.subr.mxu0 0.0
    %358 = vmatpush1.msra.mxu0 0.0
    %359 = vmatprep.subr.mxu0 0.0
    %360 = vmatpush1.msra.mxu0 0.0
    %361 = vmatprep.subr.mxu0 0.0
    %362 = vmatpush1.msra.mxu0 0.0
    %363 = vmatprep.subr.mxu0 0.0
    %364 = vmatpush1.msra.mxu0 0.0
    %365 = vmatprep.subr.mxu0 0.0
    %366 = vmatpush1.msra.mxu0 0.0
    %367 = vmatprep.subr.mxu0 0.0
    %368 = vmatpush1.msra.mxu0 0.0
    %369 = vmatprep.subr.mxu0 0.0
    %370 = vmatpush1.msra.mxu0 0.0
    %371 = vmatprep.subr.mxu0 0.0
    %372 = vmatpush1.msra.mxu0 0.0
    %373 = vmatprep.subr.mxu0 0.0
    %374 = vmatpush1.msra.mxu0 0.0
    %375 = vmatprep.subr.mxu0 0.0
    %376 = vmatpush1.msra.mxu0 0.0
    %377 = vmatprep.subr.mxu0 0.0
    %378 = vmatpush1.msra.mxu0 0.0
    %379 = vmatprep.subr.mxu0 0.0
    %380 = vmatpush1.msra.mxu0 0.0
    %381 = vmatprep.subr.mxu0 0.0
    %382 = vmatpush1.msra.mxu0 0.0
    %383 = vmatprep.subr.mxu0 0.0
    %384 = vmatpush1.msra.mxu0 0.0
    %385 = vmatprep.subr.mxu0 0.0
    %386 = vmatpush1.msra.mxu0 0.0
    %387 = vmatprep.subr.mxu0 0.0
    %388 = vmatpush1.msra.mxu0 0.0
    %389 = vmatprep.subr.mxu0 0.0
    %390 = vmatpush1.msra.mxu0 0.0
    %391 = vmatprep.subr.mxu0 0.0
    %392 = vmatpush1.msra.mxu0 0.0
    %393 = vmatprep.subr.mxu0 0.0
    %394 = vmatpush1.msra.mxu0 0.0
    %395 = vmatprep.subr.mxu0 0.0
    %396 = vmatpush1.msra.mxu0 0.0
    %397 = vmatprep.subr.mxu0 0.0
    %398 = vmatpush1.msra.mxu0 0.0
    %399 = vmatprep.mubr.f32.mxu0 0.0
    %400 = vmatmul.mubr.f32.gmra.mrb[0].mxu0 %v333
    %v401 = vpop.f32.mrb[0].mxu0
    %v402 = vadd.f32 %v88, %v401
    %v403 = vpop.f32.mrb[0].mxu0
    %404 = vdwg.mxu0
    %vm405 = vcmask 894720
    %v406 = vsel %vm405, %v402, -inf
    %407 = vmax.xlane.f32.xlu0 %v406
    %v408 = vpop.xlane.xlu0 %407
    %vm409 = vcmp.eq.f32.partialorder %v402, %v408
    %410 = vrot.lane.b32.xlu0 %v73, 96
    %v411 = vpop.permute.xlu0 %410
    %v412 = vsel %vm409, %v411, 14
    %v413 = vsel %vm405, %v412, 2147483647
    %v414 = vand.u32 %v413, 65535
    %v415 = vshra.s32 %v413, 16
    %v416 = vcvt.s32.f32 %v414
    %v417 = vcvt.s32.f32 %v415
    %418 = vmin.xlane.f32.xlu0 %v417
    %v419 = vpop.xlane.xlu0 %418
    %vm420 = vcmp.eq.f32.partialorder %v417, %v419
    %v421 = vsel %vm420, %v416, inf
    %422 = vmin.xlane.f32.xlu0 %v421
    %v423 = vpop.xlane.xlu0 %422
    %v424 = vcvt.f32.s32 %v423
    %v425 = vcvt.f32.s32 %v419
    %v426 = vshll.u32 %v425, 16
    %v427 = vadd.s32 %v426, %v424
    %v428 = vsub.f32 %v402, %v408
    %v429 = vmul.f32 %v428, 1.442695
    %v430 = vpow.pop %v429
    %432 = vrot.lane.b32.xlu0 %v430, 32
    %v433 = vpop.permute.xlu0 %432
    %vm435 = vcmask 107520
    %v436 = vsel %vm435, %v433, 0.0
    %437 = vadd.xlane.f32.xlu0 %v436
    %v438 = vpop.xlane.xlu0 %437
    %v439 = vlog2.pop %v438
    %v440 = vmul.f32 %v439, 0.6931472
    %v441 = vsub.f32 %v428, %v440
    %v444 = vunpack.c.l.s4 1966171168
    %v445 = vunpack.c.0.s8 %v444
    %v446 = vlaneseq
    %v447 = vshrl.u32 %v446, 7
    %v448 = vsub.s32 %v445, %v447
    %v449 = vrot.slane %v441, %v448
    %v450 = vcombine.high %v449, %v449
    %v452 = vunpack.c.l.s4 1966171168
    %v453 = vunpack.c.0.s8 %v452
    %v454 = vlaneseq
    %v455 = vshrl.u32 %v454, 7
    %v456 = vsub.s32 %v453, %v455
    %v457 = vrot.slane %v449, %v456
    %v459 = vunpack.c.l.s4 1966171168
    %v460 = vunpack.c.0.s8 %v459
    %v461 = vlaneseq
    %v462 = vshrl.u32 %v461, 7
    %v463 = vsub.s32 %v460, %v462
    %v464 = vrot.slane %v450, %v463
    %v465 = vlaneseq
    %v466 = vshrl.u32 %v465, 7
    %v467 = vsub.s32 0, %v466
    %v468 = vrot.slane %v457, %v467
    %v469 = vlaneseq
    %v470 = vshrl.u32 %v469, 7
    %v471 = vsub.s32 0, %v470
    %v472 = vrot.slane %v464, %v471
    %473 = vrot.lane.b32.xlu0 %v468, 32
    %v474 = vpop.permute.xlu0 %473
    %475 = vrot.lane.b32.xlu0 %v472, 32
    %v476 = vpop.permute.xlu0 %475
    %vm479 = vcmask 106496
    %480 = vst.msk [vmem:[#allocation8] sm:$0x1] %vm479, %v474
    %481 = vst.msk [vmem:[#allocation8 + $0x8] sm:$0x1] %vm479, %v476
    %vm482 = vcmp.eq.s32.totalorder %v427, 13
    %v483 = vsel %vm482, %v75, 2
    %vm484 = vcmask 1041408
    %v485 = vsel %vm484, %v483, 2147483647
    %v486 = vrot.slane %v485, 4
    %vm487 = vcmp.lt.s32.totalorder %v485, %v486
    %v488 = vsel %vm487, %v485, %v486
    %v489 = vrot.slane %v488, 2
    %vm490 = vcmp.lt.s32.totalorder %v488, %v489
    %v491 = vsel %vm490, %v488, %v489
    %v492 = vrot.slane %v491, 1
    %vm493 = vcmp.lt.s32.totalorder %v491, %v492
    %v494 = vsel %vm493, %v491, %v492
    %vm495 = vcmp.lt.s32.totalorder %v75, %v494
    %v496 = vsel %vm495, 1, 0
    %v497 = vcvt.s32.f32 %v496
    %vm498 = vcmp.eq.s32.totalorder %v427, 0
    %v499 = vsel %vm498, 1, 0
    %v500 = vcvt.s32.f32 %v499
    %v501 = vmul.f32 %v500, %v93
    %vm502 = vcmp.eq.s32.totalorder %v427, 1
    %v503 = vsel %vm502, 1, 0
    %v504 = vcvt.s32.f32 %v503
    %v505 = vmul.f32 %v504, %v97
    %vm506 = vcmp.eq.s32.totalorder %v427, 2
    %v507 = vsel %vm506, 1, 0
    %v508 = vcvt.s32.f32 %v507
    %v509 = vmul.f32 %v508, %v101
    %vm510 = vcmp.eq.s32.totalorder %v427, 3
    %v511 = vsel %vm510, 1, 0
    %v512 = vcvt.s32.f32 %v511
    %v513 = vmul.f32 %v512, %v105
    %vm514 = vcmp.eq.s32.totalorder %v427, 4
    %v515 = vsel %vm514, 1, 0
    %v516 = vcvt.s32.f32 %v515
    %v517 = vmul.f32 %v516, %v109
    %vm518 = vcmp.eq.s32.totalorder %v427, 5
    %v519 = vsel %vm518, 1, 0
    %v520 = vcvt.s32.f32 %v519
    %v521 = vmul.f32 %v520, %v113
    %vm522 = vcmp.eq.s32.totalorder %v427, 6
    %v523 = vsel %vm522, 1, 0
    %v524 = vcvt.s32.f32 %v523
    %v525 = vmul.f32 %v524, %v117
    %vm526 = vcmp.eq.s32.totalorder %v427, 7
    %v527 = vsel %vm526, 1, 0
    %v528 = vcvt.s32.f32 %v527
    %v529 = vmul.f32 %v528, %v121
    %vm530 = vcmp.eq.s32.totalorder %v427, 8
    %v531 = vsel %vm530, 1, 0
    %v532 = vcvt.s32.f32 %v531
    %v533 = vmul.f32 %v532, %v125
    %vm534 = vcmp.eq.s32.totalorder %v427, 9
    %v535 = vsel %vm534, 1, 0
    %v536 = vcvt.s32.f32 %v535
    %v537 = vmul.f32 %v536, %v129
    %vm538 = vcmp.eq.s32.totalorder %v427, 10
    %v539 = vsel %vm538, 1, 0
    %v540 = vcvt.s32.f32 %v539
    %v541 = vmul.f32 %v540, %v133
    %vm542 = vcmp.eq.s32.totalorder %v427, 11
    %v543 = vsel %vm542, 1, 0
    %v544 = vcvt.s32.f32 %v543
    %v545 = vmul.f32 %v544, %v137
    %vm546 = vcmp.eq.s32.totalorder %v427, 12
    %v547 = vsel %vm546, 1, 0
    %v548 = vcvt.s32.f32 %v547
    %v549 = vmul.f32 %v548, %v141
    %v550 = vsel %vm482, 1, 0
    %v551 = vcvt.s32.f32 %v550
    %v552 = vmul.f32 %v551, %v145
    %v553 = vadd.f32 %v501, %v505
    %v554 = vadd.f32 %v509, %v513
    %v555 = vadd.f32 %v517, %v521
    %v556 = vadd.f32 %v525, %v529
    %v557 = vadd.f32 %v533, %v537
    %v558 = vadd.f32 %v541, %v545
    %v559 = vadd.f32 %v549, %v552
    %v560 = vadd.f32 %v553, %v554
    %v561 = vadd.f32 %v555, %v556
    %v562 = vadd.f32 %v557, %v558
    %v563 = vadd.f32 %v560, %v561
    %v564 = vadd.f32 %v562, %v559
    %v565 = vadd.f32 %v563, %v564
    %v566 = vmul.f32 %v497, %v565
    %v567 = vadd.f32 %v566, %v81
    %v568 = vadd.f32 %v567, %v402
    %v569 = vxor.u32 %v568, 2147483648
    %v570 = vmul.f32 %v569, 1.442695
    %v571 = vpow.pop %v570
    %v572 = vadd.f32 %v571, 1.0
    %v573 = vrcp.pop %v572
    %v574 = vmul.f32 1.0, %v573
    %576 = vrot.lane.b32.xlu0 %v402, 64
    %v577 = vpop.permute.xlu0 %576
    %v579 = vmul.f32 %v574, %v577
    %581 = vrot.lane.b32.xlu0 %v579, 64
    %v582 = vpop.permute.xlu0 %581
    %v584 = vadd.f32 %v567, %v582
    %v585 = vtanh.pop %v584
    %v586 = vsub.f32 1.0, %v574
    %588 = vrot.lane.b32.xlu0 %v585, 96
    %v589 = vpop.permute.xlu0 %588
    %v591 = vmul.f32 %v586, %v589
    %v592 = vmul.f32 %v574, %v329
    %v593 = vadd.f32 %v591, %v592
    %595 = vrot.lane.b32.xlu0 %v593, 96
    %v596 = vpop.permute.xlu0 %595
    %v597 = vsel %vm227, %v596, 0
    %599 = vmatprep.subr.mxu0 0.0
    %600 = vmatpush1.msra.mxu0 %v68
    %601 = vmatprep.subr.mxu0 0.0
    %602 = vmatpush1.msra.mxu0 %v69
    %603 = vmatprep.subr.mxu0 0.0
    %604 = vmatpush1.msra.mxu0 %v70
    %605 = vmatprep.subr.mxu0 0.0
    %606 = vmatpush1.msra.mxu0 %v71
    %607 = vmatprep.subr.mxu0 0.0
    %608 = vmatpush1.msra.mxu0 0.0
    %609 = vmatprep.subr.mxu0 0.0
    %610 = vmatpush1.msra.mxu0 0.0
    %611 = vmatprep.subr.mxu0 0.0
    %612 = vmatpush1.msra.mxu0 0.0
    %613 = vmatprep.subr.mxu0 0.0
    %614 = vmatpush1.msra.mxu0 0.0
    %615 = vmatprep.subr.mxu0 0.0
    %616 = vmatpush1.msra.mxu0 0.0
    %617 = vmatprep.subr.mxu0 0.0
    %618 = vmatpush1.msra.mxu0 0.0
    %619 = vmatprep.subr.mxu0 0.0
    %620 = vmatpush1.msra.mxu0 0.0
    %621 = vmatprep.subr.mxu0 0.0
    %622 = vmatpush1.msra.mxu0 0.0
    %623 = vmatprep.subr.mxu0 0.0
    %624 = vmatpush1.msra.mxu0 0.0
    %625 = vmatprep.subr.mxu0 0.0
    %626 = vmatpush1.msra.mxu0 0.0
    %627 = vmatprep.subr.mxu0 0.0
    %628 = vmatpush1.msra.mxu0 0.0
    %629 = vmatprep.subr.mxu0 0.0
    %630 = vmatpush1.msra.mxu0 0.0
    %631 = vmatprep.subr.mxu0 0.0
    %632 = vmatpush1.msra.mxu0 0.0
    %633 = vmatprep.subr.mxu0 0.0
    %634 = vmatpush1.msra.mxu0 0.0
    %635 = vmatprep.subr.mxu0 0.0
    %636 = vmatpush1.msra.mxu0 0.0
    %637 = vmatprep.subr.mxu0 0.0
    %638 = vmatpush1.msra.mxu0 0.0
    %639 = vmatprep.subr.mxu0 0.0
    %640 = vmatpush1.msra.mxu0 0.0
    %641 = vmatprep.subr.mxu0 0.0
    %642 = vmatpush1.msra.mxu0 0.0
    %643 = vmatprep.subr.mxu0 0.0
    %644 = vmatpush1.msra.mxu0 0.0
    %645 = vmatprep.subr.mxu0 0.0
    %646 = vmatpush1.msra.mxu0 0.0
    %647 = vmatprep.subr.mxu0 0.0
    %648 = vmatpush1.msra.mxu0 0.0
    %649 = vmatprep.subr.mxu0 0.0
    %650 = vmatpush1.msra.mxu0 0.0
    %651 = vmatprep.subr.mxu0 0.0
    %652 = vmatpush1.msra.mxu0 0.0
    %653 = vmatprep.subr.mxu0 0.0
    %654 = vmatpush1.msra.mxu0 0.0
    %655 = vmatprep.subr.mxu0 0.0
    %656 = vmatpush1.msra.mxu0 0.0
    %657 = vmatprep.subr.mxu0 0.0
    %658 = vmatpush1.msra.mxu0 0.0
    %659 = vmatprep.subr.mxu0 0.0
    %660 = vmatpush1.msra.mxu0 0.0
    %661 = vmatprep.subr.mxu0 0.0
    %662 = vmatpush1.msra.mxu0 0.0
    %663 = vmatprep.mubr.f32.mxu0 0.0
    %664 = vmatmul.mubr.f32.gmra.mrb[0].mxu0 %v597
    %v665 = vpop.f32.mrb[0].mxu0
    %v666 = vadd.f32 %v88, %v665
    %v667 = vpop.f32.mrb[0].mxu0
    %668 = vdwg.mxu0
    %v669 = vsel %vm405, %v666, -inf
    %670 = vmax.xlane.f32.xlu0 %v669
    %v671 = vpop.xlane.xlu0 %670
    %vm672 = vcmp.eq.f32.partialorder %v666, %v671
    %v673 = vsel %vm672, %v411, 14
    %v674 = vsel %vm405, %v673, 2147483647
    %v675 = vand.u32 %v674, 65535
    %v676 = vshra.s32 %v674, 16
    %v677 = vcvt.s32.f32 %v675
    %v678 = vcvt.s32.f32 %v676
    %679 = vmin.xlane.f32.xlu0 %v678
    %v680 = vpop.xlane.xlu0 %679
    %vm681 = vcmp.eq.f32.partialorder %v678, %v680
    %v682 = vsel %vm681, %v677, inf
    %683 = vmin.xlane.f32.xlu0 %v682
    %v684 = vpop.xlane.xlu0 %683
    %v685 = vcvt.f32.s32 %v684
    %v686 = vcvt.f32.s32 %v680
    %v687 = vshll.u32 %v686, 16
    %v688 = vadd.s32 %v687, %v685
    %v689 = vsub.f32 %v666, %v671
    %v690 = vmul.f32 %v689, 1.442695
    %v691 = vpow.pop %v690
    %693 = vrot.lane.b32.xlu0 %v691, 32
    %v694 = vpop.permute.xlu0 %693
    %v696 = vsel %vm435, %v694, 0.0
    %697 = vadd.xlane.f32.xlu0 %v696
    %v698 = vpop.xlane.xlu0 %697
    %v699 = vlog2.pop %v698
    %v700 = vmul.f32 %v699, 0.6931472
    %v701 = vsub.f32 %v689, %v700
    %v704 = vunpack.c.l.s4 1966171168
    %v705 = vunpack.c.0.s8 %v704
    %v706 = vlaneseq
    %v707 = vshrl.u32 %v706, 7
    %v708 = vsub.s32 %v705, %v707
    %v709 = vrot.slane %v701, %v708
    %v710 = vcombine.high %v709, %v709
    %v712 = vunpack.c.l.s4 1966171168
    %v713 = vunpack.c.0.s8 %v712
    %v714 = vlaneseq
    %v715 = vshrl.u32 %v714, 7
    %v716 = vsub.s32 %v713, %v715
    %v717 = vrot.slane %v709, %v716
    %v719 = vunpack.c.l.s4 1966171168
    %v720 = vunpack.c.0.s8 %v719
    %v721 = vlaneseq
    %v722 = vshrl.u32 %v721, 7
    %v723 = vsub.s32 %v720, %v722
    %v724 = vrot.slane %v710, %v723
    %v725 = vlaneseq
    %v726 = vshrl.u32 %v725, 7
    %v727 = vsub.s32 0, %v726
    %v728 = vrot.slane %v717, %v727
    %v729 = vlaneseq
    %v730 = vshrl.u32 %v729, 7
    %v731 = vsub.s32 0, %v730
    %v732 = vrot.slane %v724, %v731
    %733 = vrot.lane.b32.xlu0 %v728, 32
    %v734 = vpop.permute.xlu0 %733
    %735 = vrot.lane.b32.xlu0 %v732, 32
    %v736 = vpop.permute.xlu0 %735
    %739 = vst.msk [vmem:[#allocation8 + $0x1] sm:$0x1] %vm479, %v734
    %740 = vst.msk [vmem:[#allocation8 + $0x9] sm:$0x1] %vm479, %v736
    %vm741 = vcmp.eq.s32.totalorder %v688, 13
    %v742 = vsel %vm741, %v75, 2
    %v743 = vsel %vm484, %v742, 2147483647
    %v744 = vrot.slane %v743, 4
    %vm745 = vcmp.lt.s32.totalorder %v743, %v744
    %v746 = vsel %vm745, %v743, %v744
    %v747 = vrot.slane %v746, 2
    %vm748 = vcmp.lt.s32.totalorder %v746, %v747
    %v749 = vsel %vm748, %v746, %v747
    %v750 = vrot.slane %v749, 1
    %vm751 = vcmp.lt.s32.totalorder %v749, %v750
    %v752 = vsel %vm751, %v749, %v750
    %vm753 = vcmp.lt.s32.totalorder %v75, %v752
    %v754 = vsel %vm753, 1, 0
    %v755 = vcvt.s32.f32 %v754
    %vm756 = vcmp.eq.s32.totalorder %v688, 0
    %v757 = vsel %vm756, 1, 0
    %v758 = vcvt.s32.f32 %v757
    %v759 = vmul.f32 %v758, %v93
    %vm760 = vcmp.eq.s32.totalorder %v688, 1
    %v761 = vsel %vm760, 1, 0
    %v762 = vcvt.s32.f32 %v761
    %v763 = vmul.f32 %v762, %v97
    %vm764 = vcmp.eq.s32.totalorder %v688, 2
    %v765 = vsel %vm764, 1, 0
    %v766 = vcvt.s32.f32 %v765
    %v767 = vmul.f32 %v766, %v101
    %vm768 = vcmp.eq.s32.totalorder %v688, 3
    %v769 = vsel %vm768, 1, 0
    %v770 = vcvt.s32.f32 %v769
    %v771 = vmul.f32 %v770, %v105
    %vm772 = vcmp.eq.s32.totalorder %v688, 4
    %v773 = vsel %vm772, 1, 0
    %v774 = vcvt.s32.f32 %v773
    %v775 = vmul.f32 %v774, %v109
    %vm776 = vcmp.eq.s32.totalorder %v688, 5
    %v777 = vsel %vm776, 1, 0
    %v778 = vcvt.s32.f32 %v777
    %v779 = vmul.f32 %v778, %v113
    %vm780 = vcmp.eq.s32.totalorder %v688, 6
    %v781 = vsel %vm780, 1, 0
    %v782 = vcvt.s32.f32 %v781
    %v783 = vmul.f32 %v782, %v117
    %vm784 = vcmp.eq.s32.totalorder %v688, 7
    %v785 = vsel %vm784, 1, 0
    %v786 = vcvt.s32.f32 %v785
    %v787 = vmul.f32 %v786, %v121
    %vm788 = vcmp.eq.s32.totalorder %v688, 8
    %v789 = vsel %vm788, 1, 0
    %v790 = vcvt.s32.f32 %v789
    %v791 = vmul.f32 %v790, %v125
    %vm792 = vcmp.eq.s32.totalorder %v688, 9
    %v793 = vsel %vm792, 1, 0
    %v794 = vcvt.s32.f32 %v793
    %v795 = vmul.f32 %v794, %v129
    %vm796 = vcmp.eq.s32.totalorder %v688, 10
    %v797 = vsel %vm796, 1, 0
    %v798 = vcvt.s32.f32 %v797
    %v799 = vmul.f32 %v798, %v133
    %vm800 = vcmp.eq.s32.totalorder %v688, 11
    %v801 = vsel %vm800, 1, 0
    %v802 = vcvt.s32.f32 %v801
    %v803 = vmul.f32 %v802, %v137
    %vm804 = vcmp.eq.s32.totalorder %v688, 12
    %v805 = vsel %vm804, 1, 0
    %v806 = vcvt.s32.f32 %v805
    %v807 = vmul.f32 %v806, %v141
    %v808 = vsel %vm741, 1, 0
    %v809 = vcvt.s32.f32 %v808
    %v810 = vmul.f32 %v809, %v145
    %v811 = vadd.f32 %v759, %v763
    %v812 = vadd.f32 %v767, %v771
    %v813 = vadd.f32 %v775, %v779
    %v814 = vadd.f32 %v783, %v787
    %v815 = vadd.f32 %v791, %v795
    %v816 = vadd.f32 %v799, %v803
    %v817 = vadd.f32 %v807, %v810
    %v818 = vadd.f32 %v811, %v812
    %v819 = vadd.f32 %v813, %v814
    %v820 = vadd.f32 %v815, %v816
    %v821 = vadd.f32 %v818, %v819
    %v822 = vadd.f32 %v820, %v817
    %v823 = vadd.f32 %v821, %v822
    %v824 = vmul.f32 %v755, %v823
    %v825 = vadd.f32 %v824, %v81
    %v826 = vadd.f32 %v825, %v666
    %v827 = vxor.u32 %v826, 2147483648
    %v828 = vmul.f32 %v827, 1.442695
    %v829 = vpow.pop %v828
    %v830 = vadd.f32 %v829, 1.0
    %v831 = vrcp.pop %v830
    %v832 = vmul.f32 1.0, %v831
    %834 = vrot.lane.b32.xlu0 %v666, 64
    %v835 = vpop.permute.xlu0 %834
    %v837 = vmul.f32 %v832, %v835
    %839 = vrot.lane.b32.xlu0 %v837, 64
    %v840 = vpop.permute.xlu0 %839
    %v842 = vadd.f32 %v825, %v840
    %v843 = vtanh.pop %v842
    %v844 = vsub.f32 1.0, %v832
    %846 = vrot.lane.b32.xlu0 %v843, 96
    %v847 = vpop.permute.xlu0 %846
    %v849 = vmul.f32 %v844, %v847
    %v850 = vmul.f32 %v832, %v593
    %v851 = vadd.f32 %v849, %v850
    %853 = vrot.lane.b32.xlu0 %v851, 96
    %v854 = vpop.permute.xlu0 %853
    %v855 = vsel %vm227, %v854, 0
    %857 = vmatprep.subr.mxu0 0.0
    %858 = vmatpush1.msra.mxu0 %v68
    %859 = vmatprep.subr.mxu0 0.0
    %860 = vmatpush1.msra.mxu0 %v69
    %861 = vmatprep.subr.mxu0 0.0
    %862 = vmatpush1.msra.mxu0 %v70
    %863 = vmatprep.subr.mxu0 0.0
    %864 = vmatpush1.msra.mxu0 %v71
    %865 = vmatprep.subr.mxu0 0.0
    %866 = vmatpush1.msra.mxu0 0.0
    %867 = vmatprep.subr.mxu0 0.0
    %868 = vmatpush1.msra.mxu0 0.0
    %869 = vmatprep.subr.mxu0 0.0
    %870 = vmatpush1.msra.mxu0 0.0
    %871 = vmatprep.subr.mxu0 0.0
    %872 = vmatpush1.msra.mxu0 0.0
    %873 = vmatprep.subr.mxu0 0.0
    %874 = vmatpush1.msra.mxu0 0.0
    %875 = vmatprep.subr.mxu0 0.0
    %876 = vmatpush1.msra.mxu0 0.0
    %877 = vmatprep.subr.mxu0 0.0
    %878 = vmatpush1.msra.mxu0 0.0
    %879 = vmatprep.subr.mxu0 0.0
    %880 = vmatpush1.msra.mxu0 0.0
    %881 = vmatprep.subr.mxu0 0.0
    %882 = vmatpush1.msra.mxu0 0.0
    %883 = vmatprep.subr.mxu0 0.0
    %884 = vmatpush1.msra.mxu0 0.0
    %885 = vmatprep.subr.mxu0 0.0
    %886 = vmatpush1.msra.mxu0 0.0
    %887 = vmatprep.subr.mxu0 0.0
    %888 = vmatpush1.msra.mxu0 0.0
    %889 = vmatprep.subr.mxu0 0.0
    %890 = vmatpush1.msra.mxu0 0.0
    %891 = vmatprep.subr.mxu0 0.0
    %892 = vmatpush1.msra.mxu0 0.0
    %893 = vmatprep.subr.mxu0 0.0
    %894 = vmatpush1.msra.mxu0 0.0
    %895 = vmatprep.subr.mxu0 0.0
    %896 = vmatpush1.msra.mxu0 0.0
    %897 = vmatprep.subr.mxu0 0.0
    %898 = vmatpush1.msra.mxu0 0.0
    %899 = vmatprep.subr.mxu0 0.0
    %900 = vmatpush1.msra.mxu0 0.0
    %901 = vmatprep.subr.mxu0 0.0
    %902 = vmatpush1.msra.mxu0 0.0
    %903 = vmatprep.subr.mxu0 0.0
    %904 = vmatpush1.msra.mxu0 0.0
    %905 = vmatprep.subr.mxu0 0.0
    %906 = vmatpush1.msra.mxu0 0.0
    %907 = vmatprep.subr.mxu0 0.0
    %908 = vmatpush1.msra.mxu0 0.0
    %909 = vmatprep.subr.mxu0 0.0
    %910 = vmatpush1.msra.mxu0 0.0
    %911 = vmatprep.subr.mxu0 0.0
    %912 = vmatpush1.msra.mxu0 0.0
    %913 = vmatprep.subr.mxu0 0.0
    %914 = vmatpush1.msra.mxu0 0.0
    %915 = vmatprep.subr.mxu0 0.0
    %916 = vmatpush1.msra.mxu0 0.0
    %917 = vmatprep.subr.mxu0 0.0
    %918 = vmatpush1.msra.mxu0 0.0
    %919 = vmatprep.subr.mxu0 0.0
    %920 = vmatpush1.msra.mxu0 0.0
    %921 = vmatprep.mubr.f32.mxu0 0.0
    %922 = vmatmul.mubr.f32.gmra.mrb[0].mxu0 %v855
    %v923 = vpop.f32.mrb[0].mxu0
    %v924 = vadd.f32 %v88, %v923
    %v925 = vpop.f32.mrb[0].mxu0
    %926 = vdwg.mxu0
    %v927 = vsel %vm405, %v924, -inf
    %928 = vmax.xlane.f32.xlu0 %v927
    %v929 = vpop.xlane.xlu0 %928
    %vm930 = vcmp.eq.f32.partialorder %v924, %v929
    %v931 = vsel %vm930, %v411, 14
    %v932 = vsel %vm405, %v931, 2147483647
    %v933 = vand.u32 %v932, 65535
    %v934 = vshra.s32 %v932, 16
    %v935 = vcvt.s32.f32 %v933
    %v936 = vcvt.s32.f32 %v934
    %937 = vmin.xlane.f32.xlu0 %v936
    %v938 = vpop.xlane.xlu0 %937
    %vm939 = vcmp.eq.f32.partialorder %v936, %v938
    %v940 = vsel %vm939, %v935, inf
    %941 = vmin.xlane.f32.xlu0 %v940
    %v942 = vpop.xlane.xlu0 %941
    %v943 = vcvt.f32.s32 %v942
    %v944 = vcvt.f32.s32 %v938
    %v945 = vshll.u32 %v944, 16
    %v946 = vadd.s32 %v945, %v943
    %v947 = vsub.f32 %v924, %v929
    %v948 = vmul.f32 %v947, 1.442695
    %v949 = vpow.pop %v948
    %951 = vrot.lane.b32.xlu0 %v949, 32
    %v952 = vpop.permute.xlu0 %951
    %v954 = vsel %vm435, %v952, 0.0
    %955 = vadd.xlane.f32.xlu0 %v954
    %v956 = vpop.xlane.xlu0 %955
    %v957 = vlog2.pop %v956
    %v958 = vmul.f32 %v957, 0.6931472
    %v959 = vsub.f32 %v947, %v958
    %v962 = vunpack.c.l.s4 1966171168
    %v963 = vunpack.c.0.s8 %v962
    %v964 = vlaneseq
    %v965 = vshrl.u32 %v964, 7
    %v966 = vsub.s32 %v963, %v965
    %v967 = vrot.slane %v959, %v966
    %v968 = vcombine.high %v967, %v967
    %v970 = vunpack.c.l.s4 1966171168
    %v971 = vunpack.c.0.s8 %v970
    %v972 = vlaneseq
    %v973 = vshrl.u32 %v972, 7
    %v974 = vsub.s32 %v971, %v973
    %v975 = vrot.slane %v967, %v974
    %v977 = vunpack.c.l.s4 1966171168
    %v978 = vunpack.c.0.s8 %v977
    %v979 = vlaneseq
    %v980 = vshrl.u32 %v979, 7
    %v981 = vsub.s32 %v978, %v980
    %v982 = vrot.slane %v968, %v981
    %v983 = vlaneseq
    %v984 = vshrl.u32 %v983, 7
    %v985 = vsub.s32 0, %v984
    %v986 = vrot.slane %v975, %v985
    %v987 = vlaneseq
    %v988 = vshrl.u32 %v987, 7
    %v989 = vsub.s32 0, %v988
    %v990 = vrot.slane %v982, %v989
    %991 = vrot.lane.b32.xlu0 %v986, 32
    %v992 = vpop.permute.xlu0 %991
    %993 = vrot.lane.b32.xlu0 %v990, 32
    %v994 = vpop.permute.xlu0 %993
    %997 = vst.msk [vmem:[#allocation8 + $0x2] sm:$0x1] %vm479, %v992
    %998 = vst.msk [vmem:[#allocation8 + $0xa] sm:$0x1] %vm479, %v994
    %vm999 = vcmp.eq.s32.totalorder %v946, 13
    %v1000 = vsel %vm999, %v75, 2
    %v1001 = vsel %vm484, %v1000, 2147483647
    %v1002 = vrot.slane %v1001, 4
    %vm1003 = vcmp.lt.s32.totalorder %v1001, %v1002
    %v1004 = vsel %vm1003, %v1001, %v1002
    %v1005 = vrot.slane %v1004, 2
    %vm1006 = vcmp.lt.s32.totalorder %v1004, %v1005
    %v1007 = vsel %vm1006, %v1004, %v1005
    %v1008 = vrot.slane %v1007, 1
    %vm1009 = vcmp.lt.s32.totalorder %v1007, %v1008
    %v1010 = vsel %vm1009, %v1007, %v1008
    %vm1011 = vcmp.lt.s32.totalorder %v75, %v1010
    %v1012 = vsel %vm1011, 1, 0
    %v1013 = vcvt.s32.f32 %v1012
    %vm1014 = vcmp.eq.s32.totalorder %v946, 0
    %v1015 = vsel %vm1014, 1, 0
    %v1016 = vcvt.s32.f32 %v1015
    %v1017 = vmul.f32 %v1016, %v93
    %vm1018 = vcmp.eq.s32.totalorder %v946, 1
    %v1019 = vsel %vm1018, 1, 0
    %v1020 = vcvt.s32.f32 %v1019
    %v1021 = vmul.f32 %v1020, %v97
    %vm1022 = vcmp.eq.s32.totalorder %v946, 2
    %v1023 = vsel %vm1022, 1, 0
    %v1024 = vcvt.s32.f32 %v1023
    %v1025 = vmul.f32 %v1024, %v101
    %vm1026 = vcmp.eq.s32.totalorder %v946, 3
    %v1027 = vsel %vm1026, 1, 0
    %v1028 = vcvt.s32.f32 %v1027
    %v1029 = vmul.f32 %v1028, %v105
    %vm1030 = vcmp.eq.s32.totalorder %v946, 4
    %v1031 = vsel %vm1030, 1, 0
    %v1032 = vcvt.s32.f32 %v1031
    %v1033 = vmul.f32 %v1032, %v109
    %vm1034 = vcmp.eq.s32.totalorder %v946, 5
    %v1035 = vsel %vm1034, 1, 0
    %v1036 = vcvt.s32.f32 %v1035
    %v1037 = vmul.f32 %v1036, %v113
    %vm1038 = vcmp.eq.s32.totalorder %v946, 6
    %v1039 = vsel %vm1038, 1, 0
    %v1040 = vcvt.s32.f32 %v1039
    %v1041 = vmul.f32 %v1040, %v117
    %vm1042 = vcmp.eq.s32.totalorder %v946, 7
    %v1043 = vsel %vm1042, 1, 0
    %v1044 = vcvt.s32.f32 %v1043
    %v1045 = vmul.f32 %v1044, %v121
    %vm1046 = vcmp.eq.s32.totalorder %v946, 8
    %v1047 = vsel %vm1046, 1, 0
    %v1048 = vcvt.s32.f32 %v1047
    %v1049 = vmul.f32 %v1048, %v125
    %vm1050 = vcmp.eq.s32.totalorder %v946, 9
    %v1051 = vsel %vm1050, 1, 0
    %v1052 = vcvt.s32.f32 %v1051
    %v1053 = vmul.f32 %v1052, %v129
    %vm1054 = vcmp.eq.s32.totalorder %v946, 10
    %v1055 = vsel %vm1054, 1, 0
    %v1056 = vcvt.s32.f32 %v1055
    %v1057 = vmul.f32 %v1056, %v133
    %vm1058 = vcmp.eq.s32.totalorder %v946, 11
    %v1059 = vsel %vm1058, 1, 0
    %v1060 = vcvt.s32.f32 %v1059
    %v1061 = vmul.f32 %v1060, %v137
    %vm1062 = vcmp.eq.s32.totalorder %v946, 12
    %v1063 = vsel %vm1062, 1, 0
    %v1064 = vcvt.s32.f32 %v1063
    %v1065 = vmul.f32 %v1064, %v141
    %v1066 = vsel %vm999, 1, 0
    %v1067 = vcvt.s32.f32 %v1066
    %v1068 = vmul.f32 %v1067, %v145
    %v1069 = vadd.f32 %v1017, %v1021
    %v1070 = vadd.f32 %v1025, %v1029
    %v1071 = vadd.f32 %v1033, %v1037
    %v1072 = vadd.f32 %v1041, %v1045
    %v1073 = vadd.f32 %v1049, %v1053
    %v1074 = vadd.f32 %v1057, %v1061
    %v1075 = vadd.f32 %v1065, %v1068
    %v1076 = vadd.f32 %v1069, %v1070
    %v1077 = vadd.f32 %v1071, %v1072
    %v1078 = vadd.f32 %v1073, %v1074
    %v1079 = vadd.f32 %v1076, %v1077
    %v1080 = vadd.f32 %v1078, %v1075
    %v1081 = vadd.f32 %v1079, %v1080
    %v1082 = vmul.f32 %v1013, %v1081
    %v1083 = vadd.f32 %v1082, %v81
    %v1084 = vadd.f32 %v1083, %v924
    %v1085 = vxor.u32 %v1084, 2147483648
    %v1086 = vmul.f32 %v1085, 1.442695
    %v1087 = vpow.pop %v1086
    %v1088 = vadd.f32 %v1087, 1.0
    %v1089 = vrcp.pop %v1088
    %v1090 = vmul.f32 1.0, %v1089
    %1092 = vrot.lane.b32.xlu0 %v924, 64
    %v1093 = vpop.permute.xlu0 %1092
    %v1095 = vmul.f32 %v1090, %v1093
    %1097 = vrot.lane.b32.xlu0 %v1095, 64
    %v1098 = vpop.permute.xlu0 %1097
    %v1100 = vadd.f32 %v1083, %v1098
    %v1101 = vtanh.pop %v1100
    %v1102 = vsub.f32 1.0, %v1090
    %1104 = vrot.lane.b32.xlu0 %v1101, 96
    %v1105 = vpop.permute.xlu0 %1104
    %v1107 = vmul.f32 %v1102, %v1105
    %v1108 = vmul.f32 %v1090, %v851
    %v1109 = vadd.f32 %v1107, %v1108
    %1111 = vrot.lane.b32.xlu0 %v1109, 96
    %v1112 = vpop.permute.xlu0 %1111
    %v1113 = vsel %vm227, %v1112, 0
    %1115 = vmatprep.subr.mxu0 0.0
    %1116 = vmatpush1.msra.mxu0 %v68
    %1117 = vmatprep.subr.mxu0 0.0
    %1118 = vmatpush1.msra.mxu0 %v69
    %1119 = vmatprep.subr.mxu0 0.0
    %1120 = vmatpush1.msra.mxu0 %v70
    %1121 = vmatprep.subr.mxu0 0.0
    %1122 = vmatpush1.msra.mxu0 %v71
    %1123 = vmatprep.subr.mxu0 0.0
    %1124 = vmatpush1.msra.mxu0 0.0
    %1125 = vmatprep.subr.mxu0 0.0
    %1126 = vmatpush1.msra.mxu0 0.0
    %1127 = vmatprep.subr.mxu0 0.0
    %1128 = vmatpush1.msra.mxu0 0.0
    %1129 = vmatprep.subr.mxu0 0.0
    %1130 = vmatpush1.msra.mxu0 0.0
    %1131 = vmatprep.subr.mxu0 0.0
    %1132 = vmatpush1.msra.mxu0 0.0
    %1133 = vmatprep.subr.mxu0 0.0
    %1134 = vmatpush1.msra.mxu0 0.0
    %1135 = vmatprep.subr.mxu0 0.0
    %1136 = vmatpush1.msra.mxu0 0.0
    %1137 = vmatprep.subr.mxu0 0.0
    %1138 = vmatpush1.msra.mxu0 0.0
    %1139 = vmatprep.subr.mxu0 0.0
    %1140 = vmatpush1.msra.mxu0 0.0
    %1141 = vmatprep.subr.mxu0 0.0
    %1142 = vmatpush1.msra.mxu0 0.0
    %1143 = vmatprep.subr.mxu0 0.0
    %1144 = vmatpush1.msra.mxu0 0.0
    %1145 = vmatprep.subr.mxu0 0.0
    %1146 = vmatpush1.msra.mxu0 0.0
    %1147 = vmatprep.subr.mxu0 0.0
    %1148 = vmatpush1.msra.mxu0 0.0
    %1149 = vmatprep.subr.mxu0 0.0
    %1150 = vmatpush1.msra.mxu0 0.0
    %1151 = vmatprep.subr.mxu0 0.0
    %1152 = vmatpush1.msra.mxu0 0.0
    %1153 = vmatprep.subr.mxu0 0.0
    %1154 = vmatpush1.msra.mxu0 0.0
    %1155 = vmatprep.subr.mxu0 0.0
    %1156 = vmatpush1.msra.mxu0 0.0
    %1157 = vmatprep.subr.mxu0 0.0
    %1158 = vmatpush1.msra.mxu0 0.0
    %1159 = vmatprep.subr.mxu0 0.0
    %1160 = vmatpush1.msra.mxu0 0.0
    %1161 = vmatprep.subr.mxu0 0.0
    %1162 = vmatpush1.msra.mxu0 0.0
    %1163 = vmatprep.subr.mxu0 0.0
    %1164 = vmatpush1.msra.mxu0 0.0
    %1165 = vmatprep.subr.mxu0 0.0
    %1166 = vmatpush1.msra.mxu0 0.0
    %1167 = vmatprep.subr.mxu0 0.0
    %1168 = vmatpush1.msra.mxu0 0.0
    %1169 = vmatprep.subr.mxu0 0.0
    %1170 = vmatpush1.msra.mxu0 0.0
    %1171 = vmatprep.subr.mxu0 0.0
    %1172 = vmatpush1.msra.mxu0 0.0
    %1173 = vmatprep.subr.mxu0 0.0
    %1174 = vmatpush1.msra.mxu0 0.0
    %1175 = vmatprep.subr.mxu0 0.0
    %1176 = vmatpush1.msra.mxu0 0.0
    %1177 = vmatprep.subr.mxu0 0.0
    %1178 = vmatpush1.msra.mxu0 0.0
    %1179 = vmatprep.mubr.f32.mxu0 0.0
    %1180 = vmatmul.mubr.f32.gmra.mrb[0].mxu0 %v1113
    %v1181 = vpop.f32.mrb[0].mxu0
    %v1182 = vadd.f32 %v88, %v1181
    %v1183 = vpop.f32.mrb[0].mxu0
    %1184 = vdwg.mxu0
    %v1185 = vsel %vm405, %v1182, -inf
    %1186 = vmax.xlane.f32.xlu0 %v1185
    %v1187 = vpop.xlane.xlu0 %1186
    %vm1188 = vcmp.eq.f32.partialorder %v1182, %v1187
    %v1189 = vsel %vm1188, %v411, 14
    %v1190 = vsel %vm405, %v1189, 2147483647
    %v1191 = vand.u32 %v1190, 65535
    %v1192 = vshra.s32 %v1190, 16
    %v1193 = vcvt.s32.f32 %v1191
    %v1194 = vcvt.s32.f32 %v1192
    %1195 = vmin.xlane.f32.xlu0 %v1194
    %v1196 = vpop.xlane.xlu0 %1195
    %vm1197 = vcmp.eq.f32.partialorder %v1194, %v1196
    %v1198 = vsel %vm1197, %v1193, inf
    %1199 = vmin.xlane.f32.xlu0 %v1198
    %v1200 = vpop.xlane.xlu0 %1199
    %v1201 = vcvt.f32.s32 %v1200
    %v1202 = vcvt.f32.s32 %v1196
    %v1203 = vshll.u32 %v1202, 16
    %v1204 = vadd.s32 %v1203, %v1201
    %v1205 = vsub.f32 %v1182, %v1187
    %v1206 = vmul.f32 %v1205, 1.442695
    %v1207 = vpow.pop %v1206
    %1209 = vrot.lane.b32.xlu0 %v1207, 32
    %v1210 = vpop.permute.xlu0 %1209
    %v1212 = vsel %vm435, %v1210, 0.0
    %1213 = vadd.xlane.f32.xlu0 %v1212
    %v1214 = vpop.xlane.xlu0 %1213
    %v1215 = vlog2.pop %v1214
    %v1216 = vmul.f32 %v1215, 0.6931472
    %v1217 = vsub.f32 %v1205, %v1216
    %v1220 = vunpack.c.l.s4 1966171168
    %v1221 = vunpack.c.0.s8 %v1220
    %v1222 = vlaneseq
    %v1223 = vshrl.u32 %v1222, 7
    %v1224 = vsub.s32 %v1221, %v1223
    %v1225 = vrot.slane %v1217, %v1224
    %v1226 = vcombine.high %v1225, %v1225
    %v1228 = vunpack.c.l.s4 1966171168
    %v1229 = vunpack.c.0.s8 %v1228
    %v1230 = vlaneseq
    %v1231 = vshrl.u32 %v1230, 7
    %v1232 = vsub.s32 %v1229, %v1231
    %v1233 = vrot.slane %v1225, %v1232
    %v1235 = vunpack.c.l.s4 1966171168
    %v1236 = vunpack.c.0.s8 %v1235
    %v1237 = vlaneseq
    %v1238 = vshrl.u32 %v1237, 7
    %v1239 = vsub.s32 %v1236, %v1238
    %v1240 = vrot.slane %v1226, %v1239
    %v1241 = vlaneseq
    %v1242 = vshrl.u32 %v1241, 7
    %v1243 = vsub.s32 0, %v1242
    %v1244 = vrot.slane %v1233, %v1243
    %v1245 = vlaneseq
    %v1246 = vshrl.u32 %v1245, 7
    %v1247 = vsub.s32 0, %v1246
    %v1248 = vrot.slane %v1240, %v1247
    %1249 = vrot.lane.b32.xlu0 %v1244, 32
    %v1250 = vpop.permute.xlu0 %1249
    %1251 = vrot.lane.b32.xlu0 %v1248, 32
    %v1252 = vpop.permute.xlu0 %1251
    %1255 = vst.msk [vmem:[#allocation8 + $0x3] sm:$0x1] %vm479, %v1250
    %1256 = vst.msk [vmem:[#allocation8 + $0xb] sm:$0x1] %vm479, %v1252
    %vm1257 = vcmp.eq.s32.totalorder %v1204, 13
    %v1258 = vsel %vm1257, %v75, 2
    %v1259 = vsel %vm484, %v1258, 2147483647
    %v1260 = vrot.slane %v1259, 4
    %vm1261 = vcmp.lt.s32.totalorder %v1259, %v1260
    %v1262 = vsel %vm1261, %v1259, %v1260
    %v1263 = vrot.slane %v1262, 2
    %vm1264 = vcmp.lt.s32.totalorder %v1262, %v1263
    %v1265 = vsel %vm1264, %v1262, %v1263
    %v1266 = vrot.slane %v1265, 1
    %vm1267 = vcmp.lt.s32.totalorder %v1265, %v1266
    %v1268 = vsel %vm1267, %v1265, %v1266
    %vm1269 = vcmp.lt.s32.totalorder %v75, %v1268
    %v1270 = vsel %vm1269, 1, 0
    %v1271 = vcvt.s32.f32 %v1270
    %vm1272 = vcmp.eq.s32.totalorder %v1204, 0
    %v1273 = vsel %vm1272, 1, 0
    %v1274 = vcvt.s32.f32 %v1273
    %v1275 = vmul.f32 %v1274, %v93
    %vm1276 = vcmp.eq.s32.totalorder %v1204, 1
    %v1277 = vsel %vm1276, 1, 0
    %v1278 = vcvt.s32.f32 %v1277
    %v1279 = vmul.f32 %v1278, %v97
    %vm1280 = vcmp.eq.s32.totalorder %v1204, 2
    %v1281 = vsel %vm1280, 1, 0
    %v1282 = vcvt.s32.f32 %v1281
    %v1283 = vmul.f32 %v1282, %v101
    %vm1284 = vcmp.eq.s32.totalorder %v1204, 3
    %v1285 = vsel %vm1284, 1, 0
    %v1286 = vcvt.s32.f32 %v1285
    %v1287 = vmul.f32 %v1286, %v105
    %vm1288 = vcmp.eq.s32.totalorder %v1204, 4
    %v1289 = vsel %vm1288, 1, 0
    %v1290 = vcvt.s32.f32 %v1289
    %v1291 = vmul.f32 %v1290, %v109
    %vm1292 = vcmp.eq.s32.totalorder %v1204, 5
    %v1293 = vsel %vm1292, 1, 0
    %v1294 = vcvt.s32.f32 %v1293
    %v1295 = vmul.f32 %v1294, %v113
    %vm1296 = vcmp.eq.s32.totalorder %v1204, 6
    %v1297 = vsel %vm1296, 1, 0
    %v1298 = vcvt.s32.f32 %v1297
    %v1299 = vmul.f32 %v1298, %v117
    %vm1300 = vcmp.eq.s32.totalorder %v1204, 7
    %v1301 = vsel %vm1300, 1, 0
    %v1302 = vcvt.s32.f32 %v1301
    %v1303 = vmul.f32 %v1302, %v121
    %vm1304 = vcmp.eq.s32.totalorder %v1204, 8
    %v1305 = vsel %vm1304, 1, 0
    %v1306 = vcvt.s32.f32 %v1305
    %v1307 = vmul.f32 %v1306, %v125
    %vm1308 = vcmp.eq.s32.totalorder %v1204, 9
    %v1309 = vsel %vm1308, 1, 0
    %v1310 = vcvt.s32.f32 %v1309
    %v1311 = vmul.f32 %v1310, %v129
    %vm1312 = vcmp.eq.s32.totalorder %v1204, 10
    %v1313 = vsel %vm1312, 1, 0
    %v1314 = vcvt.s32.f32 %v1313
    %v1315 = vmul.f32 %v1314, %v133
    %vm1316 = vcmp.eq.s32.totalorder %v1204, 11
    %v1317 = vsel %vm1316, 1, 0
    %v1318 = vcvt.s32.f32 %v1317
    %v1319 = vmul.f32 %v1318, %v137
    %vm1320 = vcmp.eq.s32.totalorder %v1204, 12
    %v1321 = vsel %vm1320, 1, 0
    %v1322 = vcvt.s32.f32 %v1321
    %v1323 = vmul.f32 %v1322, %v141
    %v1324 = vsel %vm1257, 1, 0
    %v1325 = vcvt.s32.f32 %v1324
    %v1326 = vmul.f32 %v1325, %v145
    %v1327 = vadd.f32 %v1275, %v1279
    %v1328 = vadd.f32 %v1283, %v1287
    %v1329 = vadd.f32 %v1291, %v1295
    %v1330 = vadd.f32 %v1299, %v1303
    %v1331 = vadd.f32 %v1307, %v1311
    %v1332 = vadd.f32 %v1315, %v1319
    %v1333 = vadd.f32 %v1323, %v1326
    %v1334 = vadd.f32 %v1327, %v1328
    %v1335 = vadd.f32 %v1329, %v1330
    %v1336 = vadd.f32 %v1331, %v1332
    %v1337 = vadd.f32 %v1334, %v1335
    %v1338 = vadd.f32 %v1336, %v1333
    %v1339 = vadd.f32 %v1337, %v1338
    %v1340 = vmul.f32 %v1271, %v1339
    %v1341 = vadd.f32 %v1340, %v81
    %v1342 = vadd.f32 %v1341, %v1182
    %v1343 = vxor.u32 %v1342, 2147483648
    %v1344 = vmul.f32 %v1343, 1.442695
    %v1345 = vpow.pop %v1344
    %v1346 = vadd.f32 %v1345, 1.0
    %v1347 = vrcp.pop %v1346
    %v1348 = vmul.f32 1.0, %v1347
    %1350 = vrot.lane.b32.xlu0 %v1182, 64
    %v1351 = vpop.permute.xlu0 %1350
    %v1353 = vmul.f32 %v1348, %v1351
    %1355 = vrot.lane.b32.xlu0 %v1353, 64
    %v1356 = vpop.permute.xlu0 %1355
    %v1358 = vadd.f32 %v1341, %v1356
    %v1359 = vtanh.pop %v1358
    %v1360 = vsub.f32 1.0, %v1348
    %1362 = vrot.lane.b32.xlu0 %v1359, 96
    %v1363 = vpop.permute.xlu0 %1362
    %v1365 = vmul.f32 %v1360, %v1363
    %v1366 = vmul.f32 %v1348, %v1109
    %v1367 = vadd.f32 %v1365, %v1366
    %1369 = vrot.lane.b32.xlu0 %v1367, 96
    %v1370 = vpop.permute.xlu0 %1369
    %v1371 = vsel %vm227, %v1370, 0
    %1373 = vmatprep.subr.mxu0 0.0
    %1374 = vmatpush1.msra.mxu0 %v68
    %1375 = vmatprep.subr.mxu0 0.0
    %1376 = vmatpush1.msra.mxu0 %v69
    %1377 = vmatprep.subr.mxu0 0.0
    %1378 = vmatpush1.msra.mxu0 %v70
    %1379 = vmatprep.subr.mxu0 0.0
    %1380 = vmatpush1.msra.mxu0 %v71
    %1381 = vmatprep.subr.mxu0 0.0
    %1382 = vmatpush1.msra.mxu0 0.0
    %1383 = vmatprep.subr.mxu0 0.0
    %1384 = vmatpush1.msra.mxu0 0.0
    %1385 = vmatprep.subr.mxu0 0.0
    %1386 = vmatpush1.msra.mxu0 0.0
    %1387 = vmatprep.subr.mxu0 0.0
    %1388 = vmatpush1.msra.mxu0 0.0
    %1389 = vmatprep.subr.mxu0 0.0
    %1390 = vmatpush1.msra.mxu0 0.0
    %1391 = vmatprep.subr.mxu0 0.0
    %1392 = vmatpush1.msra.mxu0 0.0
    %1393 = vmatprep.subr.mxu0 0.0
    %1394 = vmatpush1.msra.mxu0 0.0
    %1395 = vmatprep.subr.mxu0 0.0
    %1396 = vmatpush1.msra.mxu0 0.0
    %1397 = vmatprep.subr.mxu0 0.0
    %1398 = vmatpush1.msra.mxu0 0.0
    %1399 = vmatprep.subr.mxu0 0.0
    %1400 = vmatpush1.msra.mxu0 0.0
    %1401 = vmatprep.subr.mxu0 0.0
    %1402 = vmatpush1.msra.mxu0 0.0
    %1403 = vmatprep.subr.mxu0 0.0
    %1404 = vmatpush1.msra.mxu0 0.0
    %1405 = vmatprep.subr.mxu0 0.0
    %1406 = vmatpush1.msra.mxu0 0.0
    %1407 = vmatprep.subr.mxu0 0.0
    %1408 = vmatpush1.msra.mxu0 0.0
    %1409 = vmatprep.subr.mxu0 0.0
    %1410 = vmatpush1.msra.mxu0 0.0
    %1411 = vmatprep.subr.mxu0 0.0
    %1412 = vmatpush1.msra.mxu0 0.0
    %1413 = vmatprep.subr.mxu0 0.0
    %1414 = vmatpush1.msra.mxu0 0.0
    %1415 = vmatprep.subr.mxu0 0.0
    %1416 = vmatpush1.msra.mxu0 0.0
    %1417 = vmatprep.subr.mxu0 0.0
    %1418 = vmatpush1.msra.mxu0 0.0
    %1419 = vmatprep.subr.mxu0 0.0
    %1420 = vmatpush1.msra.mxu0 0.0
    %1421 = vmatprep.subr.mxu0 0.0
    %1422 = vmatpush1.msra.mxu0 0.0
    %1423 = vmatprep.subr.mxu0 0.0
    %1424 = vmatpush1.msra.mxu0 0.0
    %1425 = vmatprep.subr.mxu0 0.0
    %1426 = vmatpush1.msra.mxu0 0.0
    %1427 = vmatprep.subr.mxu0 0.0
    %1428 = vmatpush1.msra.mxu0 0.0
    %1429 = vmatprep.subr.mxu0 0.0
    %1430 = vmatpush1.msra.mxu0 0.0
    %1431 = vmatprep.subr.mxu0 0.0
    %1432 = vmatpush1.msra.mxu0 0.0
    %1433 = vmatprep.subr.mxu0 0.0
    %1434 = vmatpush1.msra.mxu0 0.0
    %1435 = vmatprep.subr.mxu0 0.0
    %1436 = vmatpush1.msra.mxu0 0.0
    %1437 = vmatprep.mubr.f32.mxu0 0.0
    %1438 = vmatmul.mubr.f32.gmra.mrb[0].mxu0 %v1371
    %v1439 = vpop.f32.mrb[0].mxu0
    %v1440 = vadd.f32 %v88, %v1439
    %v1441 = vpop.f32.mrb[0].mxu0
    %1442 = vdwg.mxu0
    %v1443 = vsel %vm405, %v1440, -inf
    %1444 = vmax.xlane.f32.xlu0 %v1443
    %v1445 = vpop.xlane.xlu0 %1444
    %vm1446 = vcmp.eq.f32.partialorder %v1440, %v1445
    %v1447 = vsel %vm1446, %v411, 14
    %v1448 = vsel %vm405, %v1447, 2147483647
    %v1449 = vand.u32 %v1448, 65535
    %v1450 = vshra.s32 %v1448, 16
    %v1451 = vcvt.s32.f32 %v1449
    %v1452 = vcvt.s32.f32 %v1450
    %1453 = vmin.xlane.f32.xlu0 %v1452
    %v1454 = vpop.xlane.xlu0 %1453
    %vm1455 = vcmp.eq.f32.partialorder %v1452, %v1454
    %v1456 = vsel %vm1455, %v1451, inf
    %1457 = vmin.xlane.f32.xlu0 %v1456
    %v1458 = vpop.xlane.xlu0 %1457
    %v1459 = vcvt.f32.s32 %v1458
    %v1460 = vcvt.f32.s32 %v1454
    %v1461 = vshll.u32 %v1460, 16
    %v1462 = vadd.s32 %v1461, %v1459
    %v1463 = vsub.f32 %v1440, %v1445
    %v1464 = vmul.f32 %v1463, 1.442695
    %v1465 = vpow.pop %v1464
    %1467 = vrot.lane.b32.xlu0 %v1465, 32
    %v1468 = vpop.permute.xlu0 %1467
    %v1470 = vsel %vm435, %v1468, 0.0
    %1471 = vadd.xlane.f32.xlu0 %v1470
    %v1472 = vpop.xlane.xlu0 %1471
    %v1473 = vlog2.pop %v1472
    %v1474 = vmul.f32 %v1473, 0.6931472
    %v1475 = vsub.f32 %v1463, %v1474
    %v1478 = vunpack.c.l.s4 1966171168
    %v1479 = vunpack.c.0.s8 %v1478
    %v1480 = vlaneseq
    %v1481 = vshrl.u32 %v1480, 7
    %v1482 = vsub.s32 %v1479, %v1481
    %v1483 = vrot.slane %v1475, %v1482
    %v1484 = vcombine.high %v1483, %v1483
    %v1486 = vunpack.c.l.s4 1966171168
    %v1487 = vunpack.c.0.s8 %v1486
    %v1488 = vlaneseq
    %v1489 = vshrl.u32 %v1488, 7
    %v1490 = vsub.s32 %v1487, %v1489
    %v1491 = vrot.slane %v1483, %v1490
    %v1493 = vunpack.c.l.s4 1966171168
    %v1494 = vunpack.c.0.s8 %v1493
    %v1495 = vlaneseq
    %v1496 = vshrl.u32 %v1495, 7
    %v1497 = vsub.s32 %v1494, %v1496
    %v1498 = vrot.slane %v1484, %v1497
    %v1499 = vlaneseq
    %v1500 = vshrl.u32 %v1499, 7
    %v1501 = vsub.s32 0, %v1500
    %v1502 = vrot.slane %v1491, %v1501
    %v1503 = vlaneseq
    %v1504 = vshrl.u32 %v1503, 7
    %v1505 = vsub.s32 0, %v1504
    %v1506 = vrot.slane %v1498, %v1505
    %1507 = vrot.lane.b32.xlu0 %v1502, 32
    %v1508 = vpop.permute.xlu0 %1507
    %1509 = vrot.lane.b32.xlu0 %v1506, 32
    %v1510 = vpop.permute.xlu0 %1509
    %1513 = vst.msk [vmem:[#allocation8 + $0x4] sm:$0x1] %vm479, %v1508
    %1514 = vst.msk [vmem:[#allocation8 + $0xc] sm:$0x1] %vm479, %v1510
    %vm1515 = vcmp.eq.s32.totalorder %v1462, 13
    %v1516 = vsel %vm1515, %v75, 2
    %v1517 = vsel %vm484, %v1516, 2147483647
    %v1518 = vrot.slane %v1517, 4
    %vm1519 = vcmp.lt.s32.totalorder %v1517, %v1518
    %v1520 = vsel %vm1519, %v1517, %v1518
    %v1521 = vrot.slane %v1520, 2
    %vm1522 = vcmp.lt.s32.totalorder %v1520, %v1521
    %v1523 = vsel %vm1522, %v1520, %v1521
    %v1524 = vrot.slane %v1523, 1
    %vm1525 = vcmp.lt.s32.totalorder %v1523, %v1524
    %v1526 = vsel %vm1525, %v1523, %v1524
    %vm1527 = vcmp.lt.s32.totalorder %v75, %v1526
    %v1528 = vsel %vm1527, 1, 0
    %v1529 = vcvt.s32.f32 %v1528
    %vm1530 = vcmp.eq.s32.totalorder %v1462, 0
    %v1531 = vsel %vm1530, 1, 0
    %v1532 = vcvt.s32.f32 %v1531
    %v1533 = vmul.f32 %v1532, %v93
    %vm1534 = vcmp.eq.s32.totalorder %v1462, 1
    %v1535 = vsel %vm1534, 1, 0
    %v1536 = vcvt.s32.f32 %v1535
    %v1537 = vmul.f32 %v1536, %v97
    %vm1538 = vcmp.eq.s32.totalorder %v1462, 2
    %v1539 = vsel %vm1538, 1, 0
    %v1540 = vcvt.s32.f32 %v1539
    %v1541 = vmul.f32 %v1540, %v101
    %vm1542 = vcmp.eq.s32.totalorder %v1462, 3
    %v1543 = vsel %vm1542, 1, 0
    %v1544 = vcvt.s32.f32 %v1543
    %v1545 = vmul.f32 %v1544, %v105
    %vm1546 = vcmp.eq.s32.totalorder %v1462, 4
    %v1547 = vsel %vm1546, 1, 0
    %v1548 = vcvt.s32.f32 %v1547
    %v1549 = vmul.f32 %v1548, %v109
    %vm1550 = vcmp.eq.s32.totalorder %v1462, 5
    %v1551 = vsel %vm1550, 1, 0
    %v1552 = vcvt.s32.f32 %v1551
    %v1553 = vmul.f32 %v1552, %v113
    %vm1554 = vcmp.eq.s32.totalorder %v1462, 6
    %v1555 = vsel %vm1554, 1, 0
    %v1556 = vcvt.s32.f32 %v1555
    %v1557 = vmul.f32 %v1556, %v117
    %vm1558 = vcmp.eq.s32.totalorder %v1462, 7
    %v1559 = vsel %vm1558, 1, 0
    %v1560 = vcvt.s32.f32 %v1559
    %v1561 = vmul.f32 %v1560, %v121
    %vm1562 = vcmp.eq.s32.totalorder %v1462, 8
    %v1563 = vsel %vm1562, 1, 0
    %v1564 = vcvt.s32.f32 %v1563
    %v1565 = vmul.f32 %v1564, %v125
    %vm1566 = vcmp.eq.s32.totalorder %v1462, 9
    %v1567 = vsel %vm1566, 1, 0
    %v1568 = vcvt.s32.f32 %v1567
    %v1569 = vmul.f32 %v1568, %v129
    %vm1570 = vcmp.eq.s32.totalorder %v1462, 10
    %v1571 = vsel %vm1570, 1, 0
    %v1572 = vcvt.s32.f32 %v1571
    %v1573 = vmul.f32 %v1572, %v133
    %vm1574 = vcmp.eq.s32.totalorder %v1462, 11
    %v1575 = vsel %vm1574, 1, 0
    %v1576 = vcvt.s32.f32 %v1575
    %v1577 = vmul.f32 %v1576, %v137
    %vm1578 = vcmp.eq.s32.totalorder %v1462, 12
    %v1579 = vsel %vm1578, 1, 0
    %v1580 = vcvt.s32.f32 %v1579
    %v1581 = vmul.f32 %v1580, %v141
    %v1582 = vsel %vm1515, 1, 0
    %v1583 = vcvt.s32.f32 %v1582
    %v1584 = vmul.f32 %v1583, %v145
    %v1585 = vadd.f32 %v1533, %v1537
    %v1586 = vadd.f32 %v1541, %v1545
    %v1587 = vadd.f32 %v1549, %v1553
    %v1588 = vadd.f32 %v1557, %v1561
    %v1589 = vadd.f32 %v1565, %v1569
    %v1590 = vadd.f32 %v1573, %v1577
    %v1591 = vadd.f32 %v1581, %v1584
    %v1592 = vadd.f32 %v1585, %v1586
    %v1593 = vadd.f32 %v1587, %v1588
    %v1594 = vadd.f32 %v1589, %v1590
    %v1595 = vadd.f32 %v1592, %v1593
    %v1596 = vadd.f32 %v1594, %v1591
    %v1597 = vadd.f32 %v1595, %v1596
    %v1598 = vmul.f32 %v1529, %v1597
    %v1599 = vadd.f32 %v1598, %v81
    %v1600 = vadd.f32 %v1599, %v1440
    %v1601 = vxor.u32 %v1600, 2147483648
    %v1602 = vmul.f32 %v1601, 1.442695
    %v1603 = vpow.pop %v1602
    %v1604 = vadd.f32 %v1603, 1.0
    %v1605 = vrcp.pop %v1604
    %v1606 = vmul.f32 1.0, %v1605
    %1608 = vrot.lane.b32.xlu0 %v1440, 64
    %v1609 = vpop.permute.xlu0 %1608
    %v1611 = vmul.f32 %v1606, %v1609
    %1613 = vrot.lane.b32.xlu0 %v1611, 64
    %v1614 = vpop.permute.xlu0 %1613
    %v1616 = vadd.f32 %v1599, %v1614
    %v1617 = vtanh.pop %v1616
    %v1618 = vsub.f32 1.0, %v1606
    %1620 = vrot.lane.b32.xlu0 %v1617, 96
    %v1621 = vpop.permute.xlu0 %1620
    %v1623 = vmul.f32 %v1618, %v1621
    %v1624 = vmul.f32 %v1606, %v1367
    %v1625 = vadd.f32 %v1623, %v1624
    %1627 = vrot.lane.b32.xlu0 %v1625, 96
    %v1628 = vpop.permute.xlu0 %1627
    %v1629 = vsel %vm227, %v1628, 0
    %1631 = vmatprep.subr.mxu0 0.0
    %1632 = vmatpush1.msra.mxu0 %v68
    %1633 = vmatprep.subr.mxu0 0.0
    %1634 = vmatpush1.msra.mxu0 %v69
    %1635 = vmatprep.subr.mxu0 0.0
    %1636 = vmatpush1.msra.mxu0 %v70
    %1637 = vmatprep.subr.mxu0 0.0
    %1638 = vmatpush1.msra.mxu0 %v71
    %1639 = vmatprep.subr.mxu0 0.0
    %1640 = vmatpush1.msra.mxu0 0.0
    %1641 = vmatprep.subr.mxu0 0.0
    %1642 = vmatpush1.msra.mxu0 0.0
    %1643 = vmatprep.subr.mxu0 0.0
    %1644 = vmatpush1.msra.mxu0 0.0
    %1645 = vmatprep.subr.mxu0 0.0
    %1646 = vmatpush1.msra.mxu0 0.0
    %1647 = vmatprep.subr.mxu0 0.0
    %1648 = vmatpush1.msra.mxu0 0.0
    %1649 = vmatprep.subr.mxu0 0.0
    %1650 = vmatpush1.msra.mxu0 0.0
    %1651 = vmatprep.subr.mxu0 0.0
    %1652 = vmatpush1.msra.mxu0 0.0
    %1653 = vmatprep.subr.mxu0 0.0
    %1654 = vmatpush1.msra.mxu0 0.0
    %1655 = vmatprep.subr.mxu0 0.0
    %1656 = vmatpush1.msra.mxu0 0.0
    %1657 = vmatprep.subr.mxu0 0.0
    %1658 = vmatpush1.msra.mxu0 0.0
    %1659 = vmatprep.subr.mxu0 0.0
    %1660 = vmatpush1.msra.mxu0 0.0
    %1661 = vmatprep.subr.mxu0 0.0
    %1662 = vmatpush1.msra.mxu0 0.0
    %1663 = vmatprep.subr.mxu0 0.0
    %1664 = vmatpush1.msra.mxu0 0.0
    %1665 = vmatprep.subr.mxu0 0.0
    %1666 = vmatpush1.msra.mxu0 0.0
    %1667 = vmatprep.subr.mxu0 0.0
    %1668 = vmatpush1.msra.mxu0 0.0
    %1669 = vmatprep.subr.mxu0 0.0
    %1670 = vmatpush1.msra.mxu0 0.0
    %1671 = vmatprep.subr.mxu0 0.0
    %1672 = vmatpush1.msra.mxu0 0.0
    %1673 = vmatprep.subr.mxu0 0.0
    %1674 = vmatpush1.msra.mxu0 0.0
    %1675 = vmatprep.subr.mxu0 0.0
    %1676 = vmatpush1.msra.mxu0 0.0
    %1677 = vmatprep.subr.mxu0 0.0
    %1678 = vmatpush1.msra.mxu0 0.0
    %1679 = vmatprep.subr.mxu0 0.0
    %1680 = vmatpush1.msra.mxu0 0.0
    %1681 = vmatprep.subr.mxu0 0.0
    %1682 = vmatpush1.msra.mxu0 0.0
    %1683 = vmatprep.subr.mxu0 0.0
    %1684 = vmatpush1.msra.mxu0 0.0
    %1685 = vmatprep.subr.mxu0 0.0
    %1686 = vmatpush1.msra.mxu0 0.0
    %1687 = vmatprep.subr.mxu0 0.0
    %1688 = vmatpush1.msra.mxu0 0.0
    %1689 = vmatprep.subr.mxu0 0.0
    %1690 = vmatpush1.msra.mxu0 0.0
    %1691 = vmatprep.subr.mxu0 0.0
    %1692 = vmatpush1.msra.mxu0 0.0
    %1693 = vmatprep.subr.mxu0 0.0
    %1694 = vmatpush1.msra.mxu0 0.0
    %1695 = vmatprep.mubr.f32.mxu0 0.0
    %1696 = vmatmul.mubr.f32.gmra.mrb[0].mxu0 %v1629
    %v1697 = vpop.f32.mrb[0].mxu0
    %v1698 = vadd.f32 %v88, %v1697
    %v1699 = vpop.f32.mrb[0].mxu0
    %1700 = vdwg.mxu0
    %v1701 = vsel %vm405, %v1698, -inf
    %1702 = vmax.xlane.f32.xlu0 %v1701
    %v1703 = vpop.xlane.xlu0 %1702
    %vm1704 = vcmp.eq.f32.partialorder %v1698, %v1703
    %v1705 = vsel %vm1704, %v411, 14
    %v1706 = vsel %vm405, %v1705, 2147483647
    %v1707 = vand.u32 %v1706, 65535
    %v1708 = vshra.s32 %v1706, 16
    %v1709 = vcvt.s32.f32 %v1707
    %v1710 = vcvt.s32.f32 %v1708
    %1711 = vmin.xlane.f32.xlu0 %v1710
    %v1712 = vpop.xlane.xlu0 %1711
    %vm1713 = vcmp.eq.f32.partialorder %v1710, %v1712
    %v1714 = vsel %vm1713, %v1709, inf
    %1715 = vmin.xlane.f32.xlu0 %v1714
    %v1716 = vpop.xlane.xlu0 %1715
    %v1717 = vcvt.f32.s32 %v1716
    %v1718 = vcvt.f32.s32 %v1712
    %v1719 = vshll.u32 %v1718, 16
    %v1720 = vadd.s32 %v1719, %v1717
    %v1721 = vsub.f32 %v1698, %v1703
    %v1722 = vmul.f32 %v1721, 1.442695
    %v1723 = vpow.pop %v1722
    %1725 = vrot.lane.b32.xlu0 %v1723, 32
    %v1726 = vpop.permute.xlu0 %1725
    %v1728 = vsel %vm435, %v1726, 0.0
    %1729 = vadd.xlane.f32.xlu0 %v1728
    %v1730 = vpop.xlane.xlu0 %1729
    %v1731 = vlog2.pop %v1730
    %v1732 = vmul.f32 %v1731, 0.6931472
    %v1733 = vsub.f32 %v1721, %v1732
    %v1736 = vunpack.c.l.s4 1966171168
    %v1737 = vunpack.c.0.s8 %v1736
    %v1738 = vlaneseq
    %v1739 = vshrl.u32 %v1738, 7
    %v1740 = vsub.s32 %v1737, %v1739
    %v1741 = vrot.slane %v1733, %v1740
    %v1742 = vcombine.high %v1741, %v1741
    %v1744 = vunpack.c.l.s4 1966171168
    %v1745 = vunpack.c.0.s8 %v1744
    %v1746 = vlaneseq
    %v1747 = vshrl.u32 %v1746, 7
    %v1748 = vsub.s32 %v1745, %v1747
    %v1749 = vrot.slane %v1741, %v1748
    %v1751 = vunpack.c.l.s4 1966171168
    %v1752 = vunpack.c.0.s8 %v1751
    %v1753 = vlaneseq
    %v1754 = vshrl.u32 %v1753, 7
    %v1755 = vsub.s32 %v1752, %v1754
    %v1756 = vrot.slane %v1742, %v1755
    %v1757 = vlaneseq
    %v1758 = vshrl.u32 %v1757, 7
    %v1759 = vsub.s32 0, %v1758
    %v1760 = vrot.slane %v1749, %v1759
    %v1761 = vlaneseq
    %v1762 = vshrl.u32 %v1761, 7
    %v1763 = vsub.s32 0, %v1762
    %v1764 = vrot.slane %v1756, %v1763
    %1765 = vrot.lane.b32.xlu0 %v1760, 32
    %v1766 = vpop.permute.xlu0 %1765
    %1767 = vrot.lane.b32.xlu0 %v1764, 32
    %v1768 = vpop.permute.xlu0 %1767
    %1771 = vst.msk [vmem:[#allocation8 + $0x5] sm:$0x1] %vm479, %v1766
    %1772 = vst.msk [vmem:[#allocation8 + $0xd] sm:$0x1] %vm479, %v1768
    %vm1773 = vcmp.eq.s32.totalorder %v1720, 13
    %v1774 = vsel %vm1773, %v75, 2
    %v1775 = vsel %vm484, %v1774, 2147483647
    %v1776 = vrot.slane %v1775, 4
    %vm1777 = vcmp.lt.s32.totalorder %v1775, %v1776
    %v1778 = vsel %vm1777, %v1775, %v1776
    %v1779 = vrot.slane %v1778, 2
    %vm1780 = vcmp.lt.s32.totalorder %v1778, %v1779
    %v1781 = vsel %vm1780, %v1778, %v1779
    %v1782 = vrot.slane %v1781, 1
    %vm1783 = vcmp.lt.s32.totalorder %v1781, %v1782
    %v1784 = vsel %vm1783, %v1781, %v1782
    %vm1785 = vcmp.lt.s32.totalorder %v75, %v1784
    %v1786 = vsel %vm1785, 1, 0
    %v1787 = vcvt.s32.f32 %v1786
    %vm1788 = vcmp.eq.s32.totalorder %v1720, 0
    %v1789 = vsel %vm1788, 1, 0
    %v1790 = vcvt.s32.f32 %v1789
    %v1791 = vmul.f32 %v1790, %v93
    %vm1792 = vcmp.eq.s32.totalorder %v1720, 1
    %v1793 = vsel %vm1792, 1, 0
    %v1794 = vcvt.s32.f32 %v1793
    %v1795 = vmul.f32 %v1794, %v97
    %vm1796 = vcmp.eq.s32.totalorder %v1720, 2
    %v1797 = vsel %vm1796, 1, 0
    %v1798 = vcvt.s32.f32 %v1797
    %v1799 = vmul.f32 %v1798, %v101
    %vm1800 = vcmp.eq.s32.totalorder %v1720, 3
    %v1801 = vsel %vm1800, 1, 0
    %v1802 = vcvt.s32.f32 %v1801
    %v1803 = vmul.f32 %v1802, %v105
    %vm1804 = vcmp.eq.s32.totalorder %v1720, 4
    %v1805 = vsel %vm1804, 1, 0
    %v1806 = vcvt.s32.f32 %v1805
    %v1807 = vmul.f32 %v1806, %v109
    %vm1808 = vcmp.eq.s32.totalorder %v1720, 5
    %v1809 = vsel %vm1808, 1, 0
    %v1810 = vcvt.s32.f32 %v1809
    %v1811 = vmul.f32 %v1810, %v113
    %vm1812 = vcmp.eq.s32.totalorder %v1720, 6
    %v1813 = vsel %vm1812, 1, 0
    %v1814 = vcvt.s32.f32 %v1813
    %v1815 = vmul.f32 %v1814, %v117
    %vm1816 = vcmp.eq.s32.totalorder %v1720, 7
    %v1817 = vsel %vm1816, 1, 0
    %v1818 = vcvt.s32.f32 %v1817
    %v1819 = vmul.f32 %v1818, %v121
    %vm1820 = vcmp.eq.s32.totalorder %v1720, 8
    %v1821 = vsel %vm1820, 1, 0
    %v1822 = vcvt.s32.f32 %v1821
    %v1823 = vmul.f32 %v1822, %v125
    %vm1824 = vcmp.eq.s32.totalorder %v1720, 9
    %v1825 = vsel %vm1824, 1, 0
    %v1826 = vcvt.s32.f32 %v1825
    %v1827 = vmul.f32 %v1826, %v129
    %vm1828 = vcmp.eq.s32.totalorder %v1720, 10
    %v1829 = vsel %vm1828, 1, 0
    %v1830 = vcvt.s32.f32 %v1829
    %v1831 = vmul.f32 %v1830, %v133
    %vm1832 = vcmp.eq.s32.totalorder %v1720, 11
    %v1833 = vsel %vm1832, 1, 0
    %v1834 = vcvt.s32.f32 %v1833
    %v1835 = vmul.f32 %v1834, %v137
    %vm1836 = vcmp.eq.s32.totalorder %v1720, 12
    %v1837 = vsel %vm1836, 1, 0
    %v1838 = vcvt.s32.f32 %v1837
    %v1839 = vmul.f32 %v1838, %v141
    %v1840 = vsel %vm1773, 1, 0
    %v1841 = vcvt.s32.f32 %v1840
    %v1842 = vmul.f32 %v1841, %v145
    %v1843 = vadd.f32 %v1791, %v1795
    %v1844 = vadd.f32 %v1799, %v1803
    %v1845 = vadd.f32 %v1807, %v1811
    %v1846 = vadd.f32 %v1815, %v1819
    %v1847 = vadd.f32 %v1823, %v1827
    %v1848 = vadd.f32 %v1831, %v1835
    %v1849 = vadd.f32 %v1839, %v1842
    %v1850 = vadd.f32 %v1843, %v1844
    %v1851 = vadd.f32 %v1845, %v1846
    %v1852 = vadd.f32 %v1847, %v1848
    %v1853 = vadd.f32 %v1850, %v1851
    %v1854 = vadd.f32 %v1852, %v1849
    %v1855 = vadd.f32 %v1853, %v1854
    %v1856 = vmul.f32 %v1787, %v1855
    %v1857 = vadd.f32 %v1856, %v81
    %v1858 = vadd.f32 %v1857, %v1698
    %v1859 = vxor.u32 %v1858, 2147483648
    %v1860 = vmul.f32 %v1859, 1.442695
    %v1861 = vpow.pop %v1860
    %v1862 = vadd.f32 %v1861, 1.0
    %v1863 = vrcp.pop %v1862
    %v1864 = vmul.f32 1.0, %v1863
    %1866 = vrot.lane.b32.xlu0 %v1698, 64
    %v1867 = vpop.permute.xlu0 %1866
    %v1869 = vmul.f32 %v1864, %v1867
    %1871 = vrot.lane.b32.xlu0 %v1869, 64
    %v1872 = vpop.permute.xlu0 %1871
    %v1874 = vadd.f32 %v1857, %v1872
    %v1875 = vtanh.pop %v1874
    %v1876 = vsub.f32 1.0, %v1864
    %1878 = vrot.lane.b32.xlu0 %v1875, 96
    %v1879 = vpop.permute.xlu0 %1878
    %v1881 = vmul.f32 %v1876, %v1879
    %v1882 = vmul.f32 %v1864, %v1625
    %v1883 = vadd.f32 %v1881, %v1882
    %1885 = vrot.lane.b32.xlu0 %v1883, 96
    %v1886 = vpop.permute.xlu0 %1885
    %v1887 = vsel %vm227, %v1886, 0
    %1889 = vmatprep.subr.mxu0 0.0
    %1890 = vmatpush1.msra.mxu0 %v68
    %1891 = vmatprep.subr.mxu0 0.0
    %1892 = vmatpush1.msra.mxu0 %v69
    %1893 = vmatprep.subr.mxu0 0.0
    %1894 = vmatpush1.msra.mxu0 %v70
    %1895 = vmatprep.subr.mxu0 0.0
    %1896 = vmatpush1.msra.mxu0 %v71
    %1897 = vmatprep.subr.mxu0 0.0
    %1898 = vmatpush1.msra.mxu0 0.0
    %1899 = vmatprep.subr.mxu0 0.0
    %1900 = vmatpush1.msra.mxu0 0.0
    %1901 = vmatprep.subr.mxu0 0.0
    %1902 = vmatpush1.msra.mxu0 0.0
    %1903 = vmatprep.subr.mxu0 0.0
    %1904 = vmatpush1.msra.mxu0 0.0
    %1905 = vmatprep.subr.mxu0 0.0
    %1906 = vmatpush1.msra.mxu0 0.0
    %1907 = vmatprep.subr.mxu0 0.0
    %1908 = vmatpush1.msra.mxu0 0.0
    %1909 = vmatprep.subr.mxu0 0.0
    %1910 = vmatpush1.msra.mxu0 0.0
    %1911 = vmatprep.subr.mxu0 0.0
    %1912 = vmatpush1.msra.mxu0 0.0
    %1913 = vmatprep.subr.mxu0 0.0
    %1914 = vmatpush1.msra.mxu0 0.0
    %1915 = vmatprep.subr.mxu0 0.0
    %1916 = vmatpush1.msra.mxu0 0.0
    %1917 = vmatprep.subr.mxu0 0.0
    %1918 = vmatpush1.msra.mxu0 0.0
    %1919 = vmatprep.subr.mxu0 0.0
    %1920 = vmatpush1.msra.mxu0 0.0
    %1921 = vmatprep.subr.mxu0 0.0
    %1922 = vmatpush1.msra.mxu0 0.0
    %1923 = vmatprep.subr.mxu0 0.0
    %1924 = vmatpush1.msra.mxu0 0.0
    %1925 = vmatprep.subr.mxu0 0.0
    %1926 = vmatpush1.msra.mxu0 0.0
    %1927 = vmatprep.subr.mxu0 0.0
    %1928 = vmatpush1.msra.mxu0 0.0
    %1929 = vmatprep.subr.mxu0 0.0
    %1930 = vmatpush1.msra.mxu0 0.0
    %1931 = vmatprep.subr.mxu0 0.0
    %1932 = vmatpush1.msra.mxu0 0.0
    %1933 = vmatprep.subr.mxu0 0.0
    %1934 = vmatpush1.msra.mxu0 0.0
    %1935 = vmatprep.subr.mxu0 0.0
    %1936 = vmatpush1.msra.mxu0 0.0
    %1937 = vmatprep.subr.mxu0 0.0
    %1938 = vmatpush1.msra.mxu0 0.0
    %1939 = vmatprep.subr.mxu0 0.0
    %1940 = vmatpush1.msra.mxu0 0.0
    %1941 = vmatprep.subr.mxu0 0.0
    %1942 = vmatpush1.msra.mxu0 0.0
    %1943 = vmatprep.subr.mxu0 0.0
    %1944 = vmatpush1.msra.mxu0 0.0
    %1945 = vmatprep.subr.mxu0 0.0
    %1946 = vmatpush1.msra.mxu0 0.0
    %1947 = vmatprep.subr.mxu0 0.0
    %1948 = vmatpush1.msra.mxu0 0.0
    %1949 = vmatprep.subr.mxu0 0.0
    %1950 = vmatpush1.msra.mxu0 0.0
    %1951 = vmatprep.subr.mxu0 0.0
    %1952 = vmatpush1.msra.mxu0 0.0
    %1953 = vmatprep.mubr.f32.mxu0 0.0
    %1954 = vmatmul.mubr.f32.gmra.mrb[0].mxu0 %v1887
    %v1955 = vpop.f32.mrb[0].mxu0
    %v1956 = vadd.f32 %v88, %v1955
    %v1957 = vpop.f32.mrb[0].mxu0
    %1958 = vdwg.mxu0
    %v1959 = vsel %vm405, %v1956, -inf
    %1960 = vmax.xlane.f32.xlu0 %v1959
    %v1961 = vpop.xlane.xlu0 %1960
    %vm1962 = vcmp.eq.f32.partialorder %v1956, %v1961
    %v1963 = vsel %vm1962, %v411, 14
    %v1964 = vsel %vm405, %v1963, 2147483647
    %v1965 = vand.u32 %v1964, 65535
    %v1966 = vshra.s32 %v1964, 16
    %v1967 = vcvt.s32.f32 %v1965
    %v1968 = vcvt.s32.f32 %v1966
    %1969 = vmin.xlane.f32.xlu0 %v1968
    %v1970 = vpop.xlane.xlu0 %1969
    %vm1971 = vcmp.eq.f32.partialorder %v1968, %v1970
    %v1972 = vsel %vm1971, %v1967, inf
    %1973 = vmin.xlane.f32.xlu0 %v1972
    %v1974 = vpop.xlane.xlu0 %1973
    %v1975 = vcvt.f32.s32 %v1974
    %v1976 = vcvt.f32.s32 %v1970
    %v1977 = vshll.u32 %v1976, 16
    %v1978 = vadd.s32 %v1977, %v1975
    %v1979 = vsub.f32 %v1956, %v1961
    %v1980 = vmul.f32 %v1979, 1.442695
    %v1981 = vpow.pop %v1980
    %1983 = vrot.lane.b32.xlu0 %v1981, 32
    %v1984 = vpop.permute.xlu0 %1983
    %v1986 = vsel %vm435, %v1984, 0.0
    %1987 = vadd.xlane.f32.xlu0 %v1986
    %v1988 = vpop.xlane.xlu0 %1987
    %v1989 = vlog2.pop %v1988
    %v1990 = vmul.f32 %v1989, 0.6931472
    %v1991 = vsub.f32 %v1979, %v1990
    %v1994 = vunpack.c.l.s4 1966171168
    %v1995 = vunpack.c.0.s8 %v1994
    %v1996 = vlaneseq
    %v1997 = vshrl.u32 %v1996, 7
    %v1998 = vsub.s32 %v1995, %v1997
    %v1999 = vrot.slane %v1991, %v1998
    %v2000 = vcombine.high %v1999, %v1999
    %v2002 = vunpack.c.l.s4 1966171168
    %v2003 = vunpack.c.0.s8 %v2002
    %v2004 = vlaneseq
    %v2005 = vshrl.u32 %v2004, 7
    %v2006 = vsub.s32 %v2003, %v2005
    %v2007 = vrot.slane %v1999, %v2006
    %v2009 = vunpack.c.l.s4 1966171168
    %v2010 = vunpack.c.0.s8 %v2009
    %v2011 = vlaneseq
    %v2012 = vshrl.u32 %v2011, 7
    %v2013 = vsub.s32 %v2010, %v2012
    %v2014 = vrot.slane %v2000, %v2013
    %v2015 = vlaneseq
    %v2016 = vshrl.u32 %v2015, 7
    %v2017 = vsub.s32 0, %v2016
    %v2018 = vrot.slane %v2007, %v2017
    %v2019 = vlaneseq
    %v2020 = vshrl.u32 %v2019, 7
    %v2021 = vsub.s32 0, %v2020
    %v2022 = vrot.slane %v2014, %v2021
    %2023 = vrot.lane.b32.xlu0 %v2018, 32
    %v2024 = vpop.permute.xlu0 %2023
    %2025 = vrot.lane.b32.xlu0 %v2022, 32
    %v2026 = vpop.permute.xlu0 %2025
    %2029 = vst.msk [vmem:[#allocation8 + $0x6] sm:$0x1] %vm479, %v2024
    %2030 = vst.msk [vmem:[#allocation8 + $0xe] sm:$0x1] %vm479, %v2026
    %vm2031 = vcmp.eq.s32.totalorder %v1978, 13
    %v2032 = vsel %vm2031, %v75, 2
    %v2033 = vsel %vm484, %v2032, 2147483647
    %v2034 = vrot.slane %v2033, 4
    %vm2035 = vcmp.lt.s32.totalorder %v2033, %v2034
    %v2036 = vsel %vm2035, %v2033, %v2034
    %v2037 = vrot.slane %v2036, 2
    %vm2038 = vcmp.lt.s32.totalorder %v2036, %v2037
    %v2039 = vsel %vm2038, %v2036, %v2037
    %v2040 = vrot.slane %v2039, 1
    %vm2041 = vcmp.lt.s32.totalorder %v2039, %v2040
    %v2042 = vsel %vm2041, %v2039, %v2040
    %vm2043 = vcmp.lt.s32.totalorder %v75, %v2042
    %v2044 = vsel %vm2043, 1, 0
    %v2045 = vcvt.s32.f32 %v2044
    %vm2046 = vcmp.eq.s32.totalorder %v1978, 0
    %v2047 = vsel %vm2046, 1, 0
    %v2048 = vcvt.s32.f32 %v2047
    %v2049 = vmul.f32 %v2048, %v93
    %vm2050 = vcmp.eq.s32.totalorder %v1978, 1
    %v2051 = vsel %vm2050, 1, 0
    %v2052 = vcvt.s32.f32 %v2051
    %v2053 = vmul.f32 %v2052, %v97
    %vm2054 = vcmp.eq.s32.totalorder %v1978, 2
    %v2055 = vsel %vm2054, 1, 0
    %v2056 = vcvt.s32.f32 %v2055
    %v2057 = vmul.f32 %v2056, %v101
    %vm2058 = vcmp.eq.s32.totalorder %v1978, 3
    %v2059 = vsel %vm2058, 1, 0
    %v2060 = vcvt.s32.f32 %v2059
    %v2061 = vmul.f32 %v2060, %v105
    %vm2062 = vcmp.eq.s32.totalorder %v1978, 4
    %v2063 = vsel %vm2062, 1, 0
    %v2064 = vcvt.s32.f32 %v2063
    %v2065 = vmul.f32 %v2064, %v109
    %vm2066 = vcmp.eq.s32.totalorder %v1978, 5
    %v2067 = vsel %vm2066, 1, 0
    %v2068 = vcvt.s32.f32 %v2067
    %v2069 = vmul.f32 %v2068, %v113
    %vm2070 = vcmp.eq.s32.totalorder %v1978, 6
    %v2071 = vsel %vm2070, 1, 0
    %v2072 = vcvt.s32.f32 %v2071
    %v2073 = vmul.f32 %v2072, %v117
    %vm2074 = vcmp.eq.s32.totalorder %v1978, 7
    %v2075 = vsel %vm2074, 1, 0
    %v2076 = vcvt.s32.f32 %v2075
    %v2077 = vmul.f32 %v2076, %v121
    %vm2078 = vcmp.eq.s32.totalorder %v1978, 8
    %v2079 = vsel %vm2078, 1, 0
    %v2080 = vcvt.s32.f32 %v2079
    %v2081 = vmul.f32 %v2080, %v125
    %vm2082 = vcmp.eq.s32.totalorder %v1978, 9
    %v2083 = vsel %vm2082, 1, 0
    %v2084 = vcvt.s32.f32 %v2083
    %v2085 = vmul.f32 %v2084, %v129
    %vm2086 = vcmp.eq.s32.totalorder %v1978, 10
    %v2087 = vsel %vm2086, 1, 0
    %v2088 = vcvt.s32.f32 %v2087
    %v2089 = vmul.f32 %v2088, %v133
    %vm2090 = vcmp.eq.s32.totalorder %v1978, 11
    %v2091 = vsel %vm2090, 1, 0
    %v2092 = vcvt.s32.f32 %v2091
    %v2093 = vmul.f32 %v2092, %v137
    %vm2094 = vcmp.eq.s32.totalorder %v1978, 12
    %v2095 = vsel %vm2094, 1, 0
    %v2096 = vcvt.s32.f32 %v2095
    %v2097 = vmul.f32 %v2096, %v141
    %v2098 = vsel %vm2031, 1, 0
    %v2099 = vcvt.s32.f32 %v2098
    %v2100 = vmul.f32 %v2099, %v145
    %v2101 = vadd.f32 %v2049, %v2053
    %v2102 = vadd.f32 %v2057, %v2061
    %v2103 = vadd.f32 %v2065, %v2069
    %v2104 = vadd.f32 %v2073, %v2077
    %v2105 = vadd.f32 %v2081, %v2085
    %v2106 = vadd.f32 %v2089, %v2093
    %v2107 = vadd.f32 %v2097, %v2100
    %v2108 = vadd.f32 %v2101, %v2102
    %v2109 = vadd.f32 %v2103, %v2104
    %v2110 = vadd.f32 %v2105, %v2106
    %v2111 = vadd.f32 %v2108, %v2109
    %v2112 = vadd.f32 %v2110, %v2107
    %v2113 = vadd.f32 %v2111, %v2112
    %v2114 = vmul.f32 %v2045, %v2113
    %v2115 = vadd.f32 %v2114, %v81
    %v2116 = vadd.f32 %v2115, %v1956
    %v2117 = vxor.u32 %v2116, 2147483648
    %v2118 = vmul.f32 %v2117, 1.442695
    %v2119 = vpow.pop %v2118
    %v2120 = vadd.f32 %v2119, 1.0
    %v2121 = vrcp.pop %v2120
    %v2122 = vmul.f32 1.0, %v2121
    %2124 = vrot.lane.b32.xlu0 %v1956, 64
    %v2125 = vpop.permute.xlu0 %2124
    %v2127 = vmul.f32 %v2122, %v2125
    %2129 = vrot.lane.b32.xlu0 %v2127, 64
    %v2130 = vpop.permute.xlu0 %2129
    %v2132 = vadd.f32 %v2115, %v2130
    %v2133 = vtanh.pop %v2132
    %v2134 = vsub.f32 1.0, %v2122
    %2136 = vrot.lane.b32.xlu0 %v2133, 96
    %v2137 = vpop.permute.xlu0 %2136
    %v2139 = vmul.f32 %v2134, %v2137
    %v2140 = vmul.f32 %v2122, %v1883
    %v2141 = vadd.f32 %v2139, %v2140
    %2143 = vrot.lane.b32.xlu0 %v2141, 96
    %v2144 = vpop.permute.xlu0 %2143
    %v2145 = vsel %vm227, %v2144, 0
    %2147 = vmatprep.subr.mxu0 0.0
    %2148 = vmatpush1.msra.mxu0 %v68
    %2149 = vmatprep.subr.mxu0 0.0
    %2150 = vmatpush1.msra.mxu0 %v69
    %2151 = vmatprep.subr.mxu0 0.0
    %2152 = vmatpush1.msra.mxu0 %v70
    %2153 = vmatprep.subr.mxu0 0.0
    %2154 = vmatpush1.msra.mxu0 %v71
    %2155 = vmatprep.subr.mxu0 0.0
    %2156 = vmatpush1.msra.mxu0 0.0
    %2157 = vmatprep.subr.mxu0 0.0
    %2158 = vmatpush1.msra.mxu0 0.0
    %2159 = vmatprep.subr.mxu0 0.0
    %2160 = vmatpush1.msra.mxu0 0.0
    %2161 = vmatprep.subr.mxu0 0.0
    %2162 = vmatpush1.msra.mxu0 0.0
    %2163 = vmatprep.subr.mxu0 0.0
    %2164 = vmatpush1.msra.mxu0 0.0
    %2165 = vmatprep.subr.mxu0 0.0
    %2166 = vmatpush1.msra.mxu0 0.0
    %2167 = vmatprep.subr.mxu0 0.0
    %2168 = vmatpush1.msra.mxu0 0.0
    %2169 = vmatprep.subr.mxu0 0.0
    %2170 = vmatpush1.msra.mxu0 0.0
    %2171 = vmatprep.subr.mxu0 0.0
    %2172 = vmatpush1.msra.mxu0 0.0
    %2173 = vmatprep.subr.mxu0 0.0
    %2174 = vmatpush1.msra.mxu0 0.0
    %2175 = vmatprep.subr.mxu0 0.0
    %2176 = vmatpush1.msra.mxu0 0.0
    %2177 = vmatprep.subr.mxu0 0.0
    %2178 = vmatpush1.msra.mxu0 0.0
    %2179 = vmatprep.subr.mxu0 0.0
    %2180 = vmatpush1.msra.mxu0 0.0
    %2181 = vmatprep.subr.mxu0 0.0
    %2182 = vmatpush1.msra.mxu0 0.0
    %2183 = vmatprep.subr.mxu0 0.0
    %2184 = vmatpush1.msra.mxu0 0.0
    %2185 = vmatprep.subr.mxu0 0.0
    %2186 = vmatpush1.msra.mxu0 0.0
    %2187 = vmatprep.subr.mxu0 0.0
    %2188 = vmatpush1.msra.mxu0 0.0
    %2189 = vmatprep.subr.mxu0 0.0
    %2190 = vmatpush1.msra.mxu0 0.0
    %2191 = vmatprep.subr.mxu0 0.0
    %2192 = vmatpush1.msra.mxu0 0.0
    %2193 = vmatprep.subr.mxu0 0.0
    %2194 = vmatpush1.msra.mxu0 0.0
    %2195 = vmatprep.subr.mxu0 0.0
    %2196 = vmatpush1.msra.mxu0 0.0
    %2197 = vmatprep.subr.mxu0 0.0
    %2198 = vmatpush1.msra.mxu0 0.0
    %2199 = vmatprep.subr.mxu0 0.0
    %2200 = vmatpush1.msra.mxu0 0.0
    %2201 = vmatprep.subr.mxu0 0.0
    %2202 = vmatpush1.msra.mxu0 0.0
    %2203 = vmatprep.subr.mxu0 0.0
    %2204 = vmatpush1.msra.mxu0 0.0
    %2205 = vmatprep.subr.mxu0 0.0
    %2206 = vmatpush1.msra.mxu0 0.0
    %2207 = vmatprep.subr.mxu0 0.0
    %2208 = vmatpush1.msra.mxu0 0.0
    %2209 = vmatprep.subr.mxu0 0.0
    %2210 = vmatpush1.msra.mxu0 0.0
    %2211 = vmatprep.mubr.f32.mxu0 0.0
    %2212 = vmatmul.mubr.f32.gmra.mrb[0].mxu0 %v2145
    %v2213 = vpop.f32.mrb[0].mxu0
    %v2214 = vadd.f32 %v88, %v2213
    %v2215 = vpop.f32.mrb[0].mxu0
    %2216 = vdwg.mxu0
    %v2217 = vsel %vm405, %v2214, -inf
    %2218 = vmax.xlane.f32.xlu0 %v2217
    %v2219 = vpop.xlane.xlu0 %2218
    %v2220 = vsub.f32 %v2214, %v2219
    %v2221 = vmul.f32 %v2220, 1.442695
    %v2222 = vpow.pop %v2221
    %2224 = vrot.lane.b32.xlu0 %v2222, 32
    %v2225 = vpop.permute.xlu0 %2224
    %v2227 = vsel %vm435, %v2225, 0.0
    %2228 = vadd.xlane.f32.xlu0 %v2227
    %v2229 = vpop.xlane.xlu0 %2228
    %v2230 = vlog2.pop %v2229
    %v2231 = vmul.f32 %v2230, 0.6931472
    %v2232 = vsub.f32 %v2220, %v2231
    %v2235 = vunpack.c.l.s4 1966171168
    %v2236 = vunpack.c.0.s8 %v2235
    %v2237 = vlaneseq
    %v2238 = vshrl.u32 %v2237, 7
    %v2239 = vsub.s32 %v2236, %v2238
    %v2240 = vrot.slane %v2232, %v2239
    %v2241 = vcombine.high %v2240, %v2240
    %v2243 = vunpack.c.l.s4 1966171168
    %v2244 = vunpack.c.0.s8 %v2243
    %v2245 = vlaneseq
    %v2246 = vshrl.u32 %v2245, 7
    %v2247 = vsub.s32 %v2244, %v2246
    %v2248 = vrot.slane %v2240, %v2247
    %v2250 = vunpack.c.l.s4 1966171168
    %v2251 = vunpack.c.0.s8 %v2250
    %v2252 = vlaneseq
    %v2253 = vshrl.u32 %v2252, 7
    %v2254 = vsub.s32 %v2251, %v2253
    %v2255 = vrot.slane %v2241, %v2254
    %v2256 = vlaneseq
    %v2257 = vshrl.u32 %v2256, 7
    %v2258 = vsub.s32 0, %v2257
    %v2259 = vrot.slane %v2248, %v2258
    %v2260 = vlaneseq
    %v2261 = vshrl.u32 %v2260, 7
    %v2262 = vsub.s32 0, %v2261
    %v2263 = vrot.slane %v2255, %v2262
    %2264 = vrot.lane.b32.xlu0 %v2259, 32
    %v2265 = vpop.permute.xlu0 %2264
    %2266 = vrot.lane.b32.xlu0 %v2263, 32
    %v2267 = vpop.permute.xlu0 %2266
    %2270 = vst.msk [vmem:[#allocation8 + $0x7] sm:$0x1] %vm479, %v2265
    %2271 = vst.msk [vmem:[#allocation8 + $0xf] sm:$0x1] %vm479, %v2267
    %vm2273 = vcmask 254976
    %2274 = vst.msk [vmem:[#allocation9] sm:$0x3] %vm2273, %v2144
    // Predicated region
    $region38: #{tpu_custom_call.1} parent=1 // pred_check
      _
    $region39: #{tpu_custom_call.1} parent=1 // pred_check_branch
      %2276 = sbr.rel (0) target = $region41
    $region40: #{tpu_custom_call.1} parent=1 // pred_region
      %s2278 = ssub.s32 256, 256
      %2279 = vsyncadd [#allocation4], %s2278
      %s2280 = sshll.u32 [#allocation8], 4
      %s2281 = int_to_ptr.vmem [resolvable:$true] %s2280
      %2286 = dma.vmem_to_hbm [thread:$0]  %s2281, 256, %s6, [#allocation4], 128, 128, 8
    $region41: #{tpu_custom_call.1} parent=1 // pred_fallthru
      _
    // Predicated region
    $region42: #{tpu_custom_call.1} parent=1 // pred_check
      _
    $region43: #{tpu_custom_call.1} parent=1 // pred_check_branch
      %2288 = sbr.rel (0) target = $region45
    $region44: #{tpu_custom_call.1} parent=1 // pred_region
      %s2290 = ssub.s32 32, 32
      %2291 = vsyncadd [#allocation10], %s2290
      %s2293 = sshll.u32 [#allocation9], 4
      %s2294 = int_to_ptr.vmem [resolvable:$true] %s2293
      %2296 = dma.vmem_to_hbm [thread:$0]  %s2294, 32, %s7, [#allocation10]
    $region45: #{tpu_custom_call.1} parent=1 // pred_fallthru
      _
    // Predicated region
    $region46: #{tpu_custom_call.1} parent=1 // pred_check
      _
    $region47: #{tpu_custom_call.1} parent=1 // pred_check_branch
      %2298 = sbr.rel (0) target = $region49
    $region48: #{tpu_custom_call.1} parent=1 // pred_region
      %2299 = dma.done [#allocation4], 256
    $region49: #{tpu_custom_call.1} parent=1 // pred_fallthru
      _
    // Predicated region
    $region50: #{tpu_custom_call.1} parent=1 // pred_check
      _
    $region51: #{tpu_custom_call.1} parent=1 // pred_check_branch
      %2301 = sbr.rel (0) target = $region53
    $region52: #{tpu_custom_call.1} parent=1 // pred_region
      %2302 = dma.done [#allocation10], 32
    $region53: #{tpu_custom_call.1} parent=1 // pred_fallthru
      _
    %2303 = vsyncpa [#allocation3], 1
    %2304 = vsyncpa [#allocation6], 1
    %2305 = vsyncpa [#allocation4], 1
    %2306 = vsyncpa [#allocation10], 1

</llo_original>
